<compile_context>
chip_gen: v7x
topology: tpu7x:2x2x1
jax: 0.10.0
libtpu: 0.0.40
codegen_flags: <defaults>
</compile_context>

<pallas_src>
import jax
import jax.numpy as jnp
import numpy as np
from jax.experimental import pallas as pl
from jax.experimental.pallas import tpu as pltpu


# ----------------------------------------------------------------------------
# Fused Pallas kernel: L LSTM layers (wavefronted) + Linear head
# ----------------------------------------------------------------------------
def make_fused_kernel(L, T, B, In, H, O):
    G4 = 4 * H
    f32 = jnp.float32

    def kernel(*refs):
        x_ref = refs[0]
        wih_refs = [refs[1 + 3 * l] for l in range(L)]
        whh_refs = [refs[2 + 3 * l] for l in range(L)]
        b_refs = [refs[3 + 3 * l] for l in range(L)]
        h0_ref, c0_ref, wlin_ref, blin_ref = refs[1 + 3 * L:5 + 3 * L]
        out_ref, hn_ref, cn_ref = refs[5 + 3 * L:8 + 3 * L]

        # ---- hoisted per-lane constants (one (B, 4H) vreg each) -------------
        lane = jax.lax.broadcasted_iota(jnp.int32, (B, G4), 1)
        m_i = lane < H                          # chunk 0: input gate
        m_f = (lane >= H) & (lane < 2 * H)      # chunk 1: forget gate
        m_g = (lane >= 2 * H) & (lane < 3 * H)  # chunk 2: cell gate (tanh)
        m_o = lane >= 3 * H                     # chunk 3: output gate
        act_scale = jnp.where(m_g, 1.0, 0.5).astype(f32)
        act_shift = jnp.where(m_g, 0.0, 0.5).astype(f32)
        zeros = jnp.zeros((B, G4), f32)

        def lstm_cell(gates, h4, c4):
            """gates/h4/c4: (B, 4H); h4, c4 are lane-replicated [v|v|v|v]."""
            # One fused activation pass over all 128 gate lanes:
            #   g lanes: tanh(x);  i/f/o lanes: sigmoid(x) = 0.5*tanh(0.5x)+0.5
            th = jnp.tanh(gates * act_scale)
            act = th * act_scale + act_shift                # [ i | f | g | o ]
            # Combine via XLU rolls only (no sub-128-lane slicing).  2H-rolls
            # are direction-symmetric; H-rolls are applied to 2H-periodic
            # vectors, so results do not depend on the roll direction.
            act_r2 = pltpu.roll(act, shift=2 * H, axis=1)   # [ g | o | i | f ]
            p = jnp.where(m_i, act * act_r2,                # chunk0: i*g
                          jnp.where(m_f, act * c4, zeros))  # chunk1: f*c
            p = p + pltpu.roll(p, shift=2 * H, axis=1)      # [ig, fc, ig, fc]
            c_new = p + pltpu.roll(p, shift=H, axis=1)      # replicated f*c+i*g
            q = jnp.where(m_o, act * jnp.tanh(c_new), zeros)  # chunk3: o*tanh(c)
            q = q + pltpu.roll(q, shift=2 * H, axis=1)      # [0, ot, 0, ot]
            h_new = q + pltpu.roll(q, shift=H, axis=1)      # replicated o*tanh(c)
            return h_new, c_new

        # Hoisted layer-0 input projection (+bias) for all timesteps at once.
        gx0 = jnp.dot(x_ref[...].astype(f32), wih_refs[0][...].astype(f32),
                      preferred_element_type=f32) + b_refs[0][...].astype(f32)

        h4 = [h0_ref[l * B:(l + 1) * B, :].astype(f32) for l in range(L)]
        c4 = [c0_ref[l * B:(l + 1) * B, :].astype(f32) for l in range(L)]

        # Wavefront: step s runs layer l at timestep t = s - l.  All active
        # layers in a step depend only on step s-1 state, so their dots and
        # activation chains overlap.
        # TODO(synk): nn.LSTM inter-layer dropout applies only in training
        # mode; this is the eval/inference forward, so dropout is a no-op.
        pipe = [None] * L           # pipe[l] = layer l's latest output h4
        ys = []                     # last layer's outputs, in time order
        for s in range(T + L - 1):
            new_pipe = list(pipe)
            for l in range(L):
                t = s - l
                if not (0 <= t < T):
                    continue
                if l == 0:
                    gates = gx0[t * B:(t + 1) * B, :] + jnp.dot(
                        h4[0], whh_refs[0][...].astype(f32),
                        preferred_element_type=f32)
                else:
                    gates = (jnp.dot(pipe[l - 1], wih_refs[l][...].astype(f32),
                                     preferred_element_type=f32)
                             + jnp.dot(h4[l], whh_refs[l][...].astype(f32),
                                       preferred_element_type=f32)
                             + b_refs[l][...].astype(f32))
                h_new, c_new = lstm_cell(gates, h4[l], c4[l])
                h4[l], c4[l] = h_new, c_new
                new_pipe[l] = h_new
                if l == L - 1:
                    ys.append(h_new)
            pipe = new_pipe

        # Last layer outputs -> Linear head (fused).  wlin is row-zero-padded
        # to 4H so the replicated lanes of h contribute exactly zero.
        ys4 = jnp.concatenate(ys, axis=0)                   # (T*B, 4H)
        out_ref[...] = (jnp.dot(ys4, wlin_ref[...].astype(f32),
                                preferred_element_type=f32)
                        + blin_ref[...].astype(f32)).astype(out_ref.dtype)
        hn_ref[...] = jnp.concatenate(h4, axis=0).astype(hn_ref.dtype)
        cn_ref[...] = jnp.concatenate(c4, axis=0).astype(cn_ref.dtype)

    return kernel


def model_forward(params, inp, hidden):
    """inp: (T, B, input_size); hidden = (h0, c0) each (L, B, H).
    Returns (output (T, B, output_size), (h_n, c_n))."""
    h0, c0 = hidden
    L = len(params["w_ih"])
    T, B, In = inp.shape
    H = params["w_hh"][0].shape[0]
    O = params["w_lin"].shape[1]
    G4 = 4 * H
    dt = inp.dtype

    # Wrapper-side layout plumbing.
    x2 = inp.reshape(T * B, In)
    # Lane-replicate (h, c) across the 4 gate chunks — the invariant the
    # kernel maintains so the recurrence never slices sub-128-lane vectors.
    h0_rep = jnp.tile(h0.reshape(L * B, H), (1, 4))
    c0_rep = jnp.tile(c0.reshape(L * B, H), (1, 4))

    def pad_rows(w, rows):
        return jnp.zeros((rows, w.shape[1]), w.dtype).at[:w.shape[0], :].set(w)

    args = [x2]
    for l in range(L):
        w_ih = params["w_ih"][l]
        if l > 0:
            w_ih = pad_rows(w_ih, G4)           # (4H, 4H), rows [H:) zero
        w_hh = pad_rows(params["w_hh"][l], G4)  # (4H, 4H), rows [H:) zero
        args += [w_ih, w_hh, params["bias"][l]]
    args += [h0_rep, c0_rep, pad_rows(params["w_lin"], G4), params["b_lin"]]

    kernel = make_fused_kernel(L, T, B, In, H, O)
    # No grid / BlockSpecs: single invocation, whole arrays resident in VMEM,
    # no double-buffering overhead.
    out2, hn4, cn4 = pl.pallas_call(
        kernel,
        out_shape=(
            jax.ShapeDtypeStruct((T * B, O), dt),
            jax.ShapeDtypeStruct((L * B, G4), dt),
            jax.ShapeDtypeStruct((L * B, G4), dt),
        ),
    )(*args)

    out = out2.reshape(T, B, O)
    h_n = hn4[:, :H].reshape(L, B, H)
    c_n = cn4[:, :H].reshape(L, B, H)
    return out, (h_n, c_n)


# ----------------------------------------------------------------------------
# Parameter init (PyTorch-style + the init_states() forget-gate-bias trick)
# ----------------------------------------------------------------------------
def init_params(key, input_size, hidden_size, num_layers, output_size):
    """Uniform(-1/sqrt(H), 1/sqrt(H)) init; init_states() sets the forget-gate
    slice [H:2H] of both bias_ih and bias_hh to 1.0 (combined 2.0)."""
    H = hidden_size
    k = 1.0 / np.sqrt(H)
    params = {"w_ih": [], "w_hh": [], "bias": []}
    for l in range(num_layers):
        in_sz = input_size if l == 0 else H
        key, k1, k2, k3, k4 = jax.random.split(key, 5)
        w_ih = jax.random.uniform(k1, (in_sz, 4 * H), jnp.float32, -k, k)
        w_hh = jax.random.uniform(k2, (H, 4 * H), jnp.float32, -k, k)
        b_ih = jax.random.uniform(k3, (4 * H,), jnp.float32, -k, k)
        b_hh = jax.random.uniform(k4, (4 * H,), jnp.float32, -k, k)
        b_ih = b_ih.at[H:2 * H].set(1.0)
        b_hh = b_hh.at[H:2 * H].set(1.0)
        params["w_ih"].append(w_ih)
        params["w_hh"].append(w_hh)
        params["bias"].append((b_ih + b_hh).reshape(1, 4 * H))
    key, k5, k6 = jax.random.split(key, 3)
    kl = 1.0 / np.sqrt(H)
    params["w_lin"] = jax.random.uniform(k5, (H, output_size), jnp.float32, -kl, kl)
    params["b_lin"] = jax.random.uniform(k6, (1, output_size), jnp.float32, -kl, kl)
    return params


# ----------------------------------------------------------------------------
# Pure-JAX reference (for correctness check)
# ----------------------------------------------------------------------------
def reference_forward(params, inp, hidden):
    h0, c0 = hidden
    L = len(params["w_ih"])
    layer_in = inp
    hs, cs = [], []
    T = inp.shape[0]
    for l in range(L):
        w_ih, w_hh, b = params["w_ih"][l], params["w_hh"][l], params["bias"][l]
        H = w_hh.shape[0]
        h, c = h0[l], c0[l]
        ys = []
        for t in range(T):
            gates = layer_in[t] @ w_ih + h @ w_hh + b
            i_g = jax.nn.sigmoid(gates[:, 0 * H:1 * H])
            f_g = jax.nn.sigmoid(gates[:, 1 * H:2 * H])
            g_g = jnp.tanh(gates[:, 2 * H:3 * H])
            o_g = jax.nn.sigmoid(gates[:, 3 * H:4 * H])
            c = f_g * c + i_g * g_g
            h = o_g * jnp.tanh(c)
            ys.append(h)
        layer_in = jnp.stack(ys, 0)
        hs.append(h)
        cs.append(c)
    out = layer_in @ params["w_lin"] + params["b_lin"]
    return out, (jnp.stack(hs, 0), jnp.stack(cs, 0))


if __name__ == "__main__":
    # Small shapes consistent with the module.
    input_size, hidden_size, num_layers, output_size = 16, 32, 2, 4
    seq_len, batch = 8, 1  # init_states() in the module uses batch = 1

    key = jax.random.PRNGKey(0)
    kp, kx = jax.random.split(key)
    params = init_params(kp, input_size, hidden_size, num_layers, output_size)

    inp = jax.random.normal(kx, (seq_len, batch, input_size), jnp.float32)
    # init_states(): zero-initialized (h, c), shape (num_layers, 1, hidden_size)
    h0 = jnp.zeros((num_layers, batch, hidden_size), jnp.float32)
    c0 = jnp.zeros((num_layers, batch, hidden_size), jnp.float32)

    out, (h_n, c_n) = model_forward(params, inp, (h0, c0))
    jax.block_until_ready(out)
    jax.block_until_ready(h_n)
    jax.block_until_ready(c_n)

    out_ref, (h_ref, c_ref) = reference_forward(params, inp, (h0, c0))
    np.testing.assert_allclose(np.asarray(out), np.asarray(out_ref),
                               rtol=1e-4, atol=1e-4)
    np.testing.assert_allclose(np.asarray(h_n), np.asarray(h_ref),
                               rtol=1e-4, atol=1e-4)
    np.testing.assert_allclose(np.asarray(c_n), np.asarray(c_ref),
                               rtol=1e-4, atol=1e-4)

    print("KERNEL_OK")
</pallas_src>

<mosaic_0001>
module attributes {stable_mosaic.version = 11 : i64} {
  func.func @kernel(%arg0: memref<8x16xf32, #tpu.memory_space<vmem>>, %arg1: memref<16x128xf32, #tpu.memory_space<vmem>>, %arg2: memref<128x128xf32, #tpu.memory_space<vmem>>, %arg3: memref<1x128xf32, #tpu.memory_space<vmem>>, %arg4: memref<128x128xf32, #tpu.memory_space<vmem>>, %arg5: memref<128x128xf32, #tpu.memory_space<vmem>>, %arg6: memref<1x128xf32, #tpu.memory_space<vmem>>, %arg7: memref<2x128xf32, #tpu.memory_space<vmem>>, %arg8: memref<2x128xf32, #tpu.memory_space<vmem>>, %arg9: memref<128x4xf32, #tpu.memory_space<vmem>>, %arg10: memref<1x4xf32, #tpu.memory_space<vmem>>, %arg11: memref<8x4xf32, #tpu.memory_space<vmem>>, %arg12: memref<2x128xf32, #tpu.memory_space<vmem>>, %arg13: memref<2x128xf32, #tpu.memory_space<vmem>>) attributes {dimension_semantics = [], scalar_prefetch = 0 : i64, scratch_operands = 0 : i64, tpu.core_type = #tpu.core_type<tc>} {
    %0 = tpu.iota {dimensions = array<i32: 1>} : vector<1x128xi32>
    %c32_i32 = arith.constant 32 : i32
    %1 = vector.broadcast %c32_i32 : i32 to vector<1x128xi32>
    %2 = arith.cmpi slt, %0, %1 : vector<1x128xi32>
    %c32_i32_0 = arith.constant 32 : i32
    %3 = vector.broadcast %c32_i32_0 : i32 to vector<1x128xi32>
    %4 = arith.cmpi sge, %0, %3 : vector<1x128xi32>
    %c64_i32 = arith.constant 64 : i32
    %5 = vector.broadcast %c64_i32 : i32 to vector<1x128xi32>
    %6 = arith.cmpi slt, %0, %5 : vector<1x128xi32>
    %7 = arith.andi %4, %6 : vector<1x128xi1>
    %c64_i32_1 = arith.constant 64 : i32
    %8 = vector.broadcast %c64_i32_1 : i32 to vector<1x128xi32>
    %9 = arith.cmpi sge, %0, %8 : vector<1x128xi32>
    %c96_i32 = arith.constant 96 : i32
    %10 = vector.broadcast %c96_i32 : i32 to vector<1x128xi32>
    %11 = arith.cmpi slt, %0, %10 : vector<1x128xi32>
    %12 = arith.andi %9, %11 : vector<1x128xi1>
    %c96_i32_2 = arith.constant 96 : i32
    %13 = vector.broadcast %c96_i32_2 : i32 to vector<1x128xi32>
    %14 = arith.cmpi sge, %0, %13 : vector<1x128xi32>
    %cst = arith.constant 1.000000e+00 : f32
    %cst_3 = arith.constant 5.000000e-01 : f32
    %15 = vector.broadcast %cst : f32 to vector<1x128xf32>
    %16 = vector.broadcast %cst_3 : f32 to vector<1x128xf32>
    %17 = arith.select %12, %15, %16 : vector<1x128xi1>, vector<1x128xf32>
    %cst_4 = arith.constant 0.000000e+00 : f32
    %cst_5 = arith.constant 5.000000e-01 : f32
    %18 = vector.broadcast %cst_4 : f32 to vector<1x128xf32>
    %19 = vector.broadcast %cst_5 : f32 to vector<1x128xf32>
    %20 = arith.select %12, %18, %19 : vector<1x128xi1>, vector<1x128xf32>
    %cst_6 = arith.constant 0.000000e+00 : f32
    %21 = vector.broadcast %cst_6 : f32 to vector<1x128xf32>
    %c0 = arith.constant 0 : index
    %c0_7 = arith.constant 0 : index
    %22 = vector.load %arg0[%c0, %c0_7] : memref<8x16xf32, #tpu.memory_space<vmem>>, vector<8x16xf32>
    %c0_8 = arith.constant 0 : index
    %c0_9 = arith.constant 0 : index
    %23 = vector.load %arg1[%c0_8, %c0_9] : memref<16x128xf32, #tpu.memory_space<vmem>>, vector<16x128xf32>
    %cst_10 = arith.constant dense<0.000000e+00> : vector<8x128xf32>
    %24 = tpu.matmul %22, %23, %cst_10 {dimension_numbers = #tpu.dot_dimension_numbers<[1], [0], [0], [1], [0, 0, 1, 1], [], []>} : vector<8x16xf32>, vector<16x128xf32>, vector<8x128xf32> -> vector<8x128xf32>
    %c0_11 = arith.constant 0 : index
    %c0_12 = arith.constant 0 : index
    %25 = vector.load %arg3[%c0_11, %c0_12] : memref<1x128xf32, #tpu.memory_space<vmem>>, vector<1x128xf32>
    %26 = vector.broadcast %25 : vector<1x128xf32> to vector<8x128xf32>
    %27 = arith.addf %24, %26 : vector<8x128xf32>
    %c0_13 = arith.constant 0 : index
    %c0_14 = arith.constant 0 : index
    %28 = vector.load %arg7[%c0_13, %c0_14] : memref<2x128xf32, #tpu.memory_space<vmem>>, vector<1x128xf32>
    %c1 = arith.constant 1 : index
    %c0_15 = arith.constant 0 : index
    %29 = vector.load %arg7[%c1, %c0_15] : memref<2x128xf32, #tpu.memory_space<vmem>>, vector<1x128xf32>
    %c0_16 = arith.constant 0 : index
    %c0_17 = arith.constant 0 : index
    %30 = vector.load %arg8[%c0_16, %c0_17] : memref<2x128xf32, #tpu.memory_space<vmem>>, vector<1x128xf32>
    %c1_18 = arith.constant 1 : index
    %c0_19 = arith.constant 0 : index
    %31 = vector.load %arg8[%c1_18, %c0_19] : memref<2x128xf32, #tpu.memory_space<vmem>>, vector<1x128xf32>
    %32 = vector.extract_strided_slice %27 {offsets = [0, 0], sizes = [1, 128], strides = [1, 1]} : vector<8x128xf32> to vector<1x128xf32>
    %c0_20 = arith.constant 0 : index
    %c0_21 = arith.constant 0 : index
    %33 = vector.load %arg2[%c0_20, %c0_21] : memref<128x128xf32, #tpu.memory_space<vmem>>, vector<128x128xf32>
    %cst_22 = arith.constant dense<0.000000e+00> : vector<1x128xf32>
    %34 = tpu.matmul %28, %33, %cst_22 {dimension_numbers = #tpu.dot_dimension_numbers<[1], [0], [0], [1], [0, 0, 1, 1], [], []>} : vector<1x128xf32>, vector<128x128xf32>, vector<1x128xf32> -> vector<1x128xf32>
    %35 = arith.addf %32, %34 : vector<1x128xf32>
    %36 = arith.mulf %35, %17 : vector<1x128xf32>
    %37 = math.tanh %36 : vector<1x128xf32>
    %38 = arith.mulf %37, %17 : vector<1x128xf32>
    %39 = arith.addf %38, %20 : vector<1x128xf32>
    %c64_i32_23 = arith.constant 64 : i32
    %40 = tpu.dynamic_rotate %39 by %c64_i32_23 dim 1 : vector<1x128xf32>, i32 -> vector<1x128xf32>
    %41 = arith.mulf %39, %40 : vector<1x128xf32>
    %42 = arith.mulf %39, %30 : vector<1x128xf32>
    %43 = arith.select %7, %42, %21 : vector<1x128xi1>, vector<1x128xf32>
    %44 = arith.select %2, %41, %43 : vector<1x128xi1>, vector<1x128xf32>
    %c64_i32_24 = arith.constant 64 : i32
    %45 = tpu.dynamic_rotate %44 by %c64_i32_24 dim 1 : vector<1x128xf32>, i32 -> vector<1x128xf32>
    %46 = arith.addf %44, %45 : vector<1x128xf32>
    %c32_i32_25 = arith.constant 32 : i32
    %47 = tpu.dynamic_rotate %46 by %c32_i32_25 dim 1 : vector<1x128xf32>, i32 -> vector<1x128xf32>
    %48 = arith.addf %46, %47 : vector<1x128xf32>
    %49 = math.tanh %48 : vector<1x128xf32>
    %50 = arith.mulf %39, %49 : vector<1x128xf32>
    %51 = arith.select %14, %50, %21 : vector<1x128xi1>, vector<1x128xf32>
    %c64_i32_26 = arith.constant 64 : i32
    %52 = tpu.dynamic_rotate %51 by %c64_i32_26 dim 1 : vector<1x128xf32>, i32 -> vector<1x128xf32>
    %53 = arith.addf %51, %52 : vector<1x128xf32>
    %c32_i32_27 = arith.constant 32 : i32
    %54 = tpu.dynamic_rotate %53 by %c32_i32_27 dim 1 : vector<1x128xf32>, i32 -> vector<1x128xf32>
    %55 = arith.addf %53, %54 : vector<1x128xf32>
    %56 = vector.extract_strided_slice %27 {offsets = [1, 0], sizes = [1, 128], strides = [1, 1]} : vector<8x128xf32> to vector<1x128xf32>
    %c0_28 = arith.constant 0 : index
    %c0_29 = arith.constant 0 : index
    %57 = vector.load %arg2[%c0_28, %c0_29] : memref<128x128xf32, #tpu.memory_space<vmem>>, vector<128x128xf32>
    %cst_30 = arith.constant dense<0.000000e+00> : vector<1x128xf32>
    %58 = tpu.matmul %55, %57, %cst_30 {dimension_numbers = #tpu.dot_dimension_numbers<[1], [0], [0], [1], [0, 0, 1, 1], [], []>} : vector<1x128xf32>, vector<128x128xf32>, vector<1x128xf32> -> vector<1x128xf32>
    %59 = arith.addf %56, %58 : vector<1x128xf32>
    %60 = arith.mulf %59, %17 : vector<1x128xf32>
    %61 = math.tanh %60 : vector<1x128xf32>
    %62 = arith.mulf %61, %17 : vector<1x128xf32>
    %63 = arith.addf %62, %20 : vector<1x128xf32>
    %c64_i32_31 = arith.constant 64 : i32
    %64 = tpu.dynamic_rotate %63 by %c64_i32_31 dim 1 : vector<1x128xf32>, i32 -> vector<1x128xf32>
    %65 = arith.mulf %63, %64 : vector<1x128xf32>
    %66 = arith.mulf %63, %48 : vector<1x128xf32>
    %67 = arith.select %7, %66, %21 : vector<1x128xi1>, vector<1x128xf32>
    %68 = arith.select %2, %65, %67 : vector<1x128xi1>, vector<1x128xf32>
    %c64_i32_32 = arith.constant 64 : i32
    %69 = tpu.dynamic_rotate %68 by %c64_i32_32 dim 1 : vector<1x128xf32>, i32 -> vector<1x128xf32>
    %70 = arith.addf %68, %69 : vector<1x128xf32>
    %c32_i32_33 = arith.constant 32 : i32
    %71 = tpu.dynamic_rotate %70 by %c32_i32_33 dim 1 : vector<1x128xf32>, i32 -> vector<1x128xf32>
    %72 = arith.addf %70, %71 : vector<1x128xf32>
    %73 = math.tanh %72 : vector<1x128xf32>
    %74 = arith.mulf %63, %73 : vector<1x128xf32>
    %75 = arith.select %14, %74, %21 : vector<1x128xi1>, vector<1x128xf32>
    %c64_i32_34 = arith.constant 64 : i32
    %76 = tpu.dynamic_rotate %75 by %c64_i32_34 dim 1 : vector<1x128xf32>, i32 -> vector<1x128xf32>
    %77 = arith.addf %75, %76 : vector<1x128xf32>
    %c32_i32_35 = arith.constant 32 : i32
    %78 = tpu.dynamic_rotate %77 by %c32_i32_35 dim 1 : vector<1x128xf32>, i32 -> vector<1x128xf32>
    %79 = arith.addf %77, %78 : vector<1x128xf32>
    %c0_36 = arith.constant 0 : index
    %c0_37 = arith.constant 0 : index
    %80 = vector.load %arg4[%c0_36, %c0_37] : memref<128x128xf32, #tpu.memory_space<vmem>>, vector<128x128xf32>
    %cst_38 = arith.constant dense<0.000000e+00> : vector<1x128xf32>
    %81 = tpu.matmul %55, %80, %cst_38 {dimension_numbers = #tpu.dot_dimension_numbers<[1], [0], [0], [1], [0, 0, 1, 1], [], []>} : vector<1x128xf32>, vector<128x128xf32>, vector<1x128xf32> -> vector<1x128xf32>
    %c0_39 = arith.constant 0 : index
    %c0_40 = arith.constant 0 : index
    %82 = vector.load %arg5[%c0_39, %c0_40] : memref<128x128xf32, #tpu.memory_space<vmem>>, vector<128x128xf32>
    %cst_41 = arith.constant dense<0.000000e+00> : vector<1x128xf32>
    %83 = tpu.matmul %29, %82, %cst_41 {dimension_numbers = #tpu.dot_dimension_numbers<[1], [0], [0], [1], [0, 0, 1, 1], [], []>} : vector<1x128xf32>, vector<128x128xf32>, vector<1x128xf32> -> vector<1x128xf32>
    %84 = arith.addf %81, %83 : vector<1x128xf32>
    %c0_42 = arith.constant 0 : index
    %c0_43 = arith.constant 0 : index
    %85 = vector.load %arg6[%c0_42, %c0_43] : memref<1x128xf32, #tpu.memory_space<vmem>>, vector<1x128xf32>
    %86 = arith.addf %84, %85 : vector<1x128xf32>
    %87 = arith.mulf %86, %17 : vector<1x128xf32>
    %88 = math.tanh %87 : vector<1x128xf32>
    %89 = arith.mulf %88, %17 : vector<1x128xf32>
    %90 = arith.addf %89, %20 : vector<1x128xf32>
    %c64_i32_44 = arith.constant 64 : i32
    %91 = tpu.dynamic_rotate %90 by %c64_i32_44 dim 1 : vector<1x128xf32>, i32 -> vector<1x128xf32>
    %92 = arith.mulf %90, %91 : vector<1x128xf32>
    %93 = arith.mulf %90, %31 : vector<1x128xf32>
    %94 = arith.select %7, %93, %21 : vector<1x128xi1>, vector<1x128xf32>
    %95 = arith.select %2, %92, %94 : vector<1x128xi1>, vector<1x128xf32>
    %c64_i32_45 = arith.constant 64 : i32
    %96 = tpu.dynamic_rotate %95 by %c64_i32_45 dim 1 : vector<1x128xf32>, i32 -> vector<1x128xf32>
    %97 = arith.addf %95, %96 : vector<1x128xf32>
    %c32_i32_46 = arith.constant 32 : i32
    %98 = tpu.dynamic_rotate %97 by %c32_i32_46 dim 1 : vector<1x128xf32>, i32 -> vector<1x128xf32>
    %99 = arith.addf %97, %98 : vector<1x128xf32>
    %100 = math.tanh %99 : vector<1x128xf32>
    %101 = arith.mulf %90, %100 : vector<1x128xf32>
    %102 = arith.select %14, %101, %21 : vector<1x128xi1>, vector<1x128xf32>
    %c64_i32_47 = arith.constant 64 : i32
    %103 = tpu.dynamic_rotate %102 by %c64_i32_47 dim 1 : vector<1x128xf32>, i32 -> vector<1x128xf32>
    %104 = arith.addf %102, %103 : vector<1x128xf32>
    %c32_i32_48 = arith.constant 32 : i32
    %105 = tpu.dynamic_rotate %104 by %c32_i32_48 dim 1 : vector<1x128xf32>, i32 -> vector<1x128xf32>
    %106 = arith.addf %104, %105 : vector<1x128xf32>
    %107 = vector.extract_strided_slice %27 {offsets = [2, 0], sizes = [1, 128], strides = [1, 1]} : vector<8x128xf32> to vector<1x128xf32>
    %c0_49 = arith.constant 0 : index
    %c0_50 = arith.constant 0 : index
    %108 = vector.load %arg2[%c0_49, %c0_50] : memref<128x128xf32, #tpu.memory_space<vmem>>, vector<128x128xf32>
    %cst_51 = arith.constant dense<0.000000e+00> : vector<1x128xf32>
    %109 = tpu.matmul %79, %108, %cst_51 {dimension_numbers = #tpu.dot_dimension_numbers<[1], [0], [0], [1], [0, 0, 1, 1], [], []>} : vector<1x128xf32>, vector<128x128xf32>, vector<1x128xf32> -> vector<1x128xf32>
    %110 = arith.addf %107, %109 : vector<1x128xf32>
    %111 = arith.mulf %110, %17 : vector<1x128xf32>
    %112 = math.tanh %111 : vector<1x128xf32>
    %113 = arith.mulf %112, %17 : vector<1x128xf32>
    %114 = arith.addf %113, %20 : vector<1x128xf32>
    %c64_i32_52 = arith.constant 64 : i32
    %115 = tpu.dynamic_rotate %114 by %c64_i32_52 dim 1 : vector<1x128xf32>, i32 -> vector<1x128xf32>
    %116 = arith.mulf %114, %115 : vector<1x128xf32>
    %117 = arith.mulf %114, %72 : vector<1x128xf32>
    %118 = arith.select %7, %117, %21 : vector<1x128xi1>, vector<1x128xf32>
    %119 = arith.select %2, %116, %118 : vector<1x128xi1>, vector<1x128xf32>
    %c64_i32_53 = arith.constant 64 : i32
    %120 = tpu.dynamic_rotate %119 by %c64_i32_53 dim 1 : vector<1x128xf32>, i32 -> vector<1x128xf32>
    %121 = arith.addf %119, %120 : vector<1x128xf32>
    %c32_i32_54 = arith.constant 32 : i32
    %122 = tpu.dynamic_rotate %121 by %c32_i32_54 dim 1 : vector<1x128xf32>, i32 -> vector<1x128xf32>
    %123 = arith.addf %121, %122 : vector<1x128xf32>
    %124 = math.tanh %123 : vector<1x128xf32>
    %125 = arith.mulf %114, %124 : vector<1x128xf32>
    %126 = arith.select %14, %125, %21 : vector<1x128xi1>, vector<1x128xf32>
    %c64_i32_55 = arith.constant 64 : i32
    %127 = tpu.dynamic_rotate %126 by %c64_i32_55 dim 1 : vector<1x128xf32>, i32 -> vector<1x128xf32>
    %128 = arith.addf %126, %127 : vector<1x128xf32>
    %c32_i32_56 = arith.constant 32 : i32
    %129 = tpu.dynamic_rotate %128 by %c32_i32_56 dim 1 : vector<1x128xf32>, i32 -> vector<1x128xf32>
    %130 = arith.addf %128, %129 : vector<1x128xf32>
    %c0_57 = arith.constant 0 : index
    %c0_58 = arith.constant 0 : index
    %131 = vector.load %arg4[%c0_57, %c0_58] : memref<128x128xf32, #tpu.memory_space<vmem>>, vector<128x128xf32>
    %cst_59 = arith.constant dense<0.000000e+00> : vector<1x128xf32>
    %132 = tpu.matmul %79, %131, %cst_59 {dimension_numbers = #tpu.dot_dimension_numbers<[1], [0], [0], [1], [0, 0, 1, 1], [], []>} : vector<1x128xf32>, vector<128x128xf32>, vector<1x128xf32> -> vector<1x128xf32>
    %c0_60 = arith.constant 0 : index
    %c0_61 = arith.constant 0 : index
    %133 = vector.load %arg5[%c0_60, %c0_61] : memref<128x128xf32, #tpu.memory_space<vmem>>, vector<128x128xf32>
    %cst_62 = arith.constant dense<0.000000e+00> : vector<1x128xf32>
    %134 = tpu.matmul %106, %133, %cst_62 {dimension_numbers = #tpu.dot_dimension_numbers<[1], [0], [0], [1], [0, 0, 1, 1], [], []>} : vector<1x128xf32>, vector<128x128xf32>, vector<1x128xf32> -> vector<1x128xf32>
    %135 = arith.addf %132, %134 : vector<1x128xf32>
    %c0_63 = arith.constant 0 : index
    %c0_64 = arith.constant 0 : index
    %136 = vector.load %arg6[%c0_63, %c0_64] : memref<1x128xf32, #tpu.memory_space<vmem>>, vector<1x128xf32>
    %137 = arith.addf %135, %136 : vector<1x128xf32>
    %138 = arith.mulf %137, %17 : vector<1x128xf32>
    %139 = math.tanh %138 : vector<1x128xf32>
    %140 = arith.mulf %139, %17 : vector<1x128xf32>
    %141 = arith.addf %140, %20 : vector<1x128xf32>
    %c64_i32_65 = arith.constant 64 : i32
    %142 = tpu.dynamic_rotate %141 by %c64_i32_65 dim 1 : vector<1x128xf32>, i32 -> vector<1x128xf32>
    %143 = arith.mulf %141, %142 : vector<1x128xf32>
    %144 = arith.mulf %141, %99 : vector<1x128xf32>
    %145 = arith.select %7, %144, %21 : vector<1x128xi1>, vector<1x128xf32>
    %146 = arith.select %2, %143, %145 : vector<1x128xi1>, vector<1x128xf32>
    %c64_i32_66 = arith.constant 64 : i32
    %147 = tpu.dynamic_rotate %146 by %c64_i32_66 dim 1 : vector<1x128xf32>, i32 -> vector<1x128xf32>
    %148 = arith.addf %146, %147 : vector<1x128xf32>
    %c32_i32_67 = arith.constant 32 : i32
    %149 = tpu.dynamic_rotate %148 by %c32_i32_67 dim 1 : vector<1x128xf32>, i32 -> vector<1x128xf32>
    %150 = arith.addf %148, %149 : vector<1x128xf32>
    %151 = math.tanh %150 : vector<1x128xf32>
    %152 = arith.mulf %141, %151 : vector<1x128xf32>
    %153 = arith.select %14, %152, %21 : vector<1x128xi1>, vector<1x128xf32>
    %c64_i32_68 = arith.constant 64 : i32
    %154 = tpu.dynamic_rotate %153 by %c64_i32_68 dim 1 : vector<1x128xf32>, i32 -> vector<1x128xf32>
    %155 = arith.addf %153, %154 : vector<1x128xf32>
    %c32_i32_69 = arith.constant 32 : i32
    %156 = tpu.dynamic_rotate %155 by %c32_i32_69 dim 1 : vector<1x128xf32>, i32 -> vector<1x128xf32>
    %157 = arith.addf %155, %156 : vector<1x128xf32>
    %158 = vector.extract_strided_slice %27 {offsets = [3, 0], sizes = [1, 128], strides = [1, 1]} : vector<8x128xf32> to vector<1x128xf32>
    %c0_70 = arith.constant 0 : index
    %c0_71 = arith.constant 0 : index
    %159 = vector.load %arg2[%c0_70, %c0_71] : memref<128x128xf32, #tpu.memory_space<vmem>>, vector<128x128xf32>
    %cst_72 = arith.constant dense<0.000000e+00> : vector<1x128xf32>
    %160 = tpu.matmul %130, %159, %cst_72 {dimension_numbers = #tpu.dot_dimension_numbers<[1], [0], [0], [1], [0, 0, 1, 1], [], []>} : vector<1x128xf32>, vector<128x128xf32>, vector<1x128xf32> -> vector<1x128xf32>
    %161 = arith.addf %158, %160 : vector<1x128xf32>
    %162 = arith.mulf %161, %17 : vector<1x128xf32>
    %163 = math.tanh %162 : vector<1x128xf32>
    %164 = arith.mulf %163, %17 : vector<1x128xf32>
    %165 = arith.addf %164, %20 : vector<1x128xf32>
    %c64_i32_73 = arith.constant 64 : i32
    %166 = tpu.dynamic_rotate %165 by %c64_i32_73 dim 1 : vector<1x128xf32>, i32 -> vector<1x128xf32>
    %167 = arith.mulf %165, %166 : vector<1x128xf32>
    %168 = arith.mulf %165, %123 : vector<1x128xf32>
    %169 = arith.select %7, %168, %21 : vector<1x128xi1>, vector<1x128xf32>
    %170 = arith.select %2, %167, %169 : vector<1x128xi1>, vector<1x128xf32>
    %c64_i32_74 = arith.constant 64 : i32
    %171 = tpu.dynamic_rotate %170 by %c64_i32_74 dim 1 : vector<1x128xf32>, i32 -> vector<1x128xf32>
    %172 = arith.addf %170, %171 : vector<1x128xf32>
    %c32_i32_75 = arith.constant 32 : i32
    %173 = tpu.dynamic_rotate %172 by %c32_i32_75 dim 1 : vector<1x128xf32>, i32 -> vector<1x128xf32>
    %174 = arith.addf %172, %173 : vector<1x128xf32>
    %175 = math.tanh %174 : vector<1x128xf32>
    %176 = arith.mulf %165, %175 : vector<1x128xf32>
    %177 = arith.select %14, %176, %21 : vector<1x128xi1>, vector<1x128xf32>
    %c64_i32_76 = arith.constant 64 : i32
    %178 = tpu.dynamic_rotate %177 by %c64_i32_76 dim 1 : vector<1x128xf32>, i32 -> vector<1x128xf32>
    %179 = arith.addf %177, %178 : vector<1x128xf32>
    %c32_i32_77 = arith.constant 32 : i32
    %180 = tpu.dynamic_rotate %179 by %c32_i32_77 dim 1 : vector<1x128xf32>, i32 -> vector<1x128xf32>
    %181 = arith.addf %179, %180 : vector<1x128xf32>
    %c0_78 = arith.constant 0 : index
    %c0_79 = arith.constant 0 : index
    %182 = vector.load %arg4[%c0_78, %c0_79] : memref<128x128xf32, #tpu.memory_space<vmem>>, vector<128x128xf32>
    %cst_80 = arith.constant dense<0.000000e+00> : vector<1x128xf32>
    %183 = tpu.matmul %130, %182, %cst_80 {dimension_numbers = #tpu.dot_dimension_numbers<[1], [0], [0], [1], [0, 0, 1, 1], [], []>} : vector<1x128xf32>, vector<128x128xf32>, vector<1x128xf32> -> vector<1x128xf32>
    %c0_81 = arith.constant 0 : index
    %c0_82 = arith.constant 0 : index
    %184 = vector.load %arg5[%c0_81, %c0_82] : memref<128x128xf32, #tpu.memory_space<vmem>>, vector<128x128xf32>
    %cst_83 = arith.constant dense<0.000000e+00> : vector<1x128xf32>
    %185 = tpu.matmul %157, %184, %cst_83 {dimension_numbers = #tpu.dot_dimension_numbers<[1], [0], [0], [1], [0, 0, 1, 1], [], []>} : vector<1x128xf32>, vector<128x128xf32>, vector<1x128xf32> -> vector<1x128xf32>
    %186 = arith.addf %183, %185 : vector<1x128xf32>
    %c0_84 = arith.constant 0 : index
    %c0_85 = arith.constant 0 : index
    %187 = vector.load %arg6[%c0_84, %c0_85] : memref<1x128xf32, #tpu.memory_space<vmem>>, vector<1x128xf32>
    %188 = arith.addf %186, %187 : vector<1x128xf32>
    %189 = arith.mulf %188, %17 : vector<1x128xf32>
    %190 = math.tanh %189 : vector<1x128xf32>
    %191 = arith.mulf %190, %17 : vector<1x128xf32>
    %192 = arith.addf %191, %20 : vector<1x128xf32>
    %c64_i32_86 = arith.constant 64 : i32
    %193 = tpu.dynamic_rotate %192 by %c64_i32_86 dim 1 : vector<1x128xf32>, i32 -> vector<1x128xf32>
    %194 = arith.mulf %192, %193 : vector<1x128xf32>
    %195 = arith.mulf %192, %150 : vector<1x128xf32>
    %196 = arith.select %7, %195, %21 : vector<1x128xi1>, vector<1x128xf32>
    %197 = arith.select %2, %194, %196 : vector<1x128xi1>, vector<1x128xf32>
    %c64_i32_87 = arith.constant 64 : i32
    %198 = tpu.dynamic_rotate %197 by %c64_i32_87 dim 1 : vector<1x128xf32>, i32 -> vector<1x128xf32>
    %199 = arith.addf %197, %198 : vector<1x128xf32>
    %c32_i32_88 = arith.constant 32 : i32
    %200 = tpu.dynamic_rotate %199 by %c32_i32_88 dim 1 : vector<1x128xf32>, i32 -> vector<1x128xf32>
    %201 = arith.addf %199, %200 : vector<1x128xf32>
    %202 = math.tanh %201 : vector<1x128xf32>
    %203 = arith.mulf %192, %202 : vector<1x128xf32>
    %204 = arith.select %14, %203, %21 : vector<1x128xi1>, vector<1x128xf32>
    %c64_i32_89 = arith.constant 64 : i32
    %205 = tpu.dynamic_rotate %204 by %c64_i32_89 dim 1 : vector<1x128xf32>, i32 -> vector<1x128xf32>
    %206 = arith.addf %204, %205 : vector<1x128xf32>
    %c32_i32_90 = arith.constant 32 : i32
    %207 = tpu.dynamic_rotate %206 by %c32_i32_90 dim 1 : vector<1x128xf32>, i32 -> vector<1x128xf32>
    %208 = arith.addf %206, %207 : vector<1x128xf32>
    %209 = vector.extract_strided_slice %27 {offsets = [4, 0], sizes = [1, 128], strides = [1, 1]} : vector<8x128xf32> to vector<1x128xf32>
    %c0_91 = arith.constant 0 : index
    %c0_92 = arith.constant 0 : index
    %210 = vector.load %arg2[%c0_91, %c0_92] : memref<128x128xf32, #tpu.memory_space<vmem>>, vector<128x128xf32>
    %cst_93 = arith.constant dense<0.000000e+00> : vector<1x128xf32>
    %211 = tpu.matmul %181, %210, %cst_93 {dimension_numbers = #tpu.dot_dimension_numbers<[1], [0], [0], [1], [0, 0, 1, 1], [], []>} : vector<1x128xf32>, vector<128x128xf32>, vector<1x128xf32> -> vector<1x128xf32>
    %212 = arith.addf %209, %211 : vector<1x128xf32>
    %213 = arith.mulf %212, %17 : vector<1x128xf32>
    %214 = math.tanh %213 : vector<1x128xf32>
    %215 = arith.mulf %214, %17 : vector<1x128xf32>
    %216 = arith.addf %215, %20 : vector<1x128xf32>
    %c64_i32_94 = arith.constant 64 : i32
    %217 = tpu.dynamic_rotate %216 by %c64_i32_94 dim 1 : vector<1x128xf32>, i32 -> vector<1x128xf32>
    %218 = arith.mulf %216, %217 : vector<1x128xf32>
    %219 = arith.mulf %216, %174 : vector<1x128xf32>
    %220 = arith.select %7, %219, %21 : vector<1x128xi1>, vector<1x128xf32>
    %221 = arith.select %2, %218, %220 : vector<1x128xi1>, vector<1x128xf32>
    %c64_i32_95 = arith.constant 64 : i32
    %222 = tpu.dynamic_rotate %221 by %c64_i32_95 dim 1 : vector<1x128xf32>, i32 -> vector<1x128xf32>
    %223 = arith.addf %221, %222 : vector<1x128xf32>
    %c32_i32_96 = arith.constant 32 : i32
    %224 = tpu.dynamic_rotate %223 by %c32_i32_96 dim 1 : vector<1x128xf32>, i32 -> vector<1x128xf32>
    %225 = arith.addf %223, %224 : vector<1x128xf32>
    %226 = math.tanh %225 : vector<1x128xf32>
    %227 = arith.mulf %216, %226 : vector<1x128xf32>
    %228 = arith.select %14, %227, %21 : vector<1x128xi1>, vector<1x128xf32>
    %c64_i32_97 = arith.constant 64 : i32
    %229 = tpu.dynamic_rotate %228 by %c64_i32_97 dim 1 : vector<1x128xf32>, i32 -> vector<1x128xf32>
    %230 = arith.addf %228, %229 : vector<1x128xf32>
    %c32_i32_98 = arith.constant 32 : i32
    %231 = tpu.dynamic_rotate %230 by %c32_i32_98 dim 1 : vector<1x128xf32>, i32 -> vector<1x128xf32>
    %232 = arith.addf %230, %231 : vector<1x128xf32>
    %c0_99 = arith.constant 0 : index
    %c0_100 = arith.constant 0 : index
    %233 = vector.load %arg4[%c0_99, %c0_100] : memref<128x128xf32, #tpu.memory_space<vmem>>, vector<128x128xf32>
    %cst_101 = arith.constant dense<0.000000e+00> : vector<1x128xf32>
    %234 = tpu.matmul %181, %233, %cst_101 {dimension_numbers = #tpu.dot_dimension_numbers<[1], [0], [0], [1], [0, 0, 1, 1], [], []>} : vector<1x128xf32>, vector<128x128xf32>, vector<1x128xf32> -> vector<1x128xf32>
    %c0_102 = arith.constant 0 : index
    %c0_103 = arith.constant 0 : index
    %235 = vector.load %arg5[%c0_102, %c0_103] : memref<128x128xf32, #tpu.memory_space<vmem>>, vector<128x128xf32>
    %cst_104 = arith.constant dense<0.000000e+00> : vector<1x128xf32>
    %236 = tpu.matmul %208, %235, %cst_104 {dimension_numbers = #tpu.dot_dimension_numbers<[1], [0], [0], [1], [0, 0, 1, 1], [], []>} : vector<1x128xf32>, vector<128x128xf32>, vector<1x128xf32> -> vector<1x128xf32>
    %237 = arith.addf %234, %236 : vector<1x128xf32>
    %c0_105 = arith.constant 0 : index
    %c0_106 = arith.constant 0 : index
    %238 = vector.load %arg6[%c0_105, %c0_106] : memref<1x128xf32, #tpu.memory_space<vmem>>, vector<1x128xf32>
    %239 = arith.addf %237, %238 : vector<1x128xf32>
    %240 = arith.mulf %239, %17 : vector<1x128xf32>
    %241 = math.tanh %240 : vector<1x128xf32>
    %242 = arith.mulf %241, %17 : vector<1x128xf32>
    %243 = arith.addf %242, %20 : vector<1x128xf32>
    %c64_i32_107 = arith.constant 64 : i32
    %244 = tpu.dynamic_rotate %243 by %c64_i32_107 dim 1 : vector<1x128xf32>, i32 -> vector<1x128xf32>
    %245 = arith.mulf %243, %244 : vector<1x128xf32>
    %246 = arith.mulf %243, %201 : vector<1x128xf32>
    %247 = arith.select %7, %246, %21 : vector<1x128xi1>, vector<1x128xf32>
    %248 = arith.select %2, %245, %247 : vector<1x128xi1>, vector<1x128xf32>
    %c64_i32_108 = arith.constant 64 : i32
    %249 = tpu.dynamic_rotate %248 by %c64_i32_108 dim 1 : vector<1x128xf32>, i32 -> vector<1x128xf32>
    %250 = arith.addf %248, %249 : vector<1x128xf32>
    %c32_i32_109 = arith.constant 32 : i32
    %251 = tpu.dynamic_rotate %250 by %c32_i32_109 dim 1 : vector<1x128xf32>, i32 -> vector<1x128xf32>
    %252 = arith.addf %250, %251 : vector<1x128xf32>
    %253 = math.tanh %252 : vector<1x128xf32>
    %254 = arith.mulf %243, %253 : vector<1x128xf32>
    %255 = arith.select %14, %254, %21 : vector<1x128xi1>, vector<1x128xf32>
    %c64_i32_110 = arith.constant 64 : i32
    %256 = tpu.dynamic_rotate %255 by %c64_i32_110 dim 1 : vector<1x128xf32>, i32 -> vector<1x128xf32>
    %257 = arith.addf %255, %256 : vector<1x128xf32>
    %c32_i32_111 = arith.constant 32 : i32
    %258 = tpu.dynamic_rotate %257 by %c32_i32_111 dim 1 : vector<1x128xf32>, i32 -> vector<1x128xf32>
    %259 = arith.addf %257, %258 : vector<1x128xf32>
    %260 = vector.extract_strided_slice %27 {offsets = [5, 0], sizes = [1, 128], strides = [1, 1]} : vector<8x128xf32> to vector<1x128xf32>
    %c0_112 = arith.constant 0 : index
    %c0_113 = arith.constant 0 : index
    %261 = vector.load %arg2[%c0_112, %c0_113] : memref<128x128xf32, #tpu.memory_space<vmem>>, vector<128x128xf32>
    %cst_114 = arith.constant dense<0.000000e+00> : vector<1x128xf32>
    %262 = tpu.matmul %232, %261, %cst_114 {dimension_numbers = #tpu.dot_dimension_numbers<[1], [0], [0], [1], [0, 0, 1, 1], [], []>} : vector<1x128xf32>, vector<128x128xf32>, vector<1x128xf32> -> vector<1x128xf32>
    %263 = arith.addf %260, %262 : vector<1x128xf32>
    %264 = arith.mulf %263, %17 : vector<1x128xf32>
    %265 = math.tanh %264 : vector<1x128xf32>
    %266 = arith.mulf %265, %17 : vector<1x128xf32>
    %267 = arith.addf %266, %20 : vector<1x128xf32>
    %c64_i32_115 = arith.constant 64 : i32
    %268 = tpu.dynamic_rotate %267 by %c64_i32_115 dim 1 : vector<1x128xf32>, i32 -> vector<1x128xf32>
    %269 = arith.mulf %267, %268 : vector<1x128xf32>
    %270 = arith.mulf %267, %225 : vector<1x128xf32>
    %271 = arith.select %7, %270, %21 : vector<1x128xi1>, vector<1x128xf32>
    %272 = arith.select %2, %269, %271 : vector<1x128xi1>, vector<1x128xf32>
    %c64_i32_116 = arith.constant 64 : i32
    %273 = tpu.dynamic_rotate %272 by %c64_i32_116 dim 1 : vector<1x128xf32>, i32 -> vector<1x128xf32>
    %274 = arith.addf %272, %273 : vector<1x128xf32>
    %c32_i32_117 = arith.constant 32 : i32
    %275 = tpu.dynamic_rotate %274 by %c32_i32_117 dim 1 : vector<1x128xf32>, i32 -> vector<1x128xf32>
    %276 = arith.addf %274, %275 : vector<1x128xf32>
    %277 = math.tanh %276 : vector<1x128xf32>
    %278 = arith.mulf %267, %277 : vector<1x128xf32>
    %279 = arith.select %14, %278, %21 : vector<1x128xi1>, vector<1x128xf32>
    %c64_i32_118 = arith.constant 64 : i32
    %280 = tpu.dynamic_rotate %279 by %c64_i32_118 dim 1 : vector<1x128xf32>, i32 -> vector<1x128xf32>
    %281 = arith.addf %279, %280 : vector<1x128xf32>
    %c32_i32_119 = arith.constant 32 : i32
    %282 = tpu.dynamic_rotate %281 by %c32_i32_119 dim 1 : vector<1x128xf32>, i32 -> vector<1x128xf32>
    %283 = arith.addf %281, %282 : vector<1x128xf32>
    %c0_120 = arith.constant 0 : index
    %c0_121 = arith.constant 0 : index
    %284 = vector.load %arg4[%c0_120, %c0_121] : memref<128x128xf32, #tpu.memory_space<vmem>>, vector<128x128xf32>
    %cst_122 = arith.constant dense<0.000000e+00> : vector<1x128xf32>
    %285 = tpu.matmul %232, %284, %cst_122 {dimension_numbers = #tpu.dot_dimension_numbers<[1], [0], [0], [1], [0, 0, 1, 1], [], []>} : vector<1x128xf32>, vector<128x128xf32>, vector<1x128xf32> -> vector<1x128xf32>
    %c0_123 = arith.constant 0 : index
    %c0_124 = arith.constant 0 : index
    %286 = vector.load %arg5[%c0_123, %c0_124] : memref<128x128xf32, #tpu.memory_space<vmem>>, vector<128x128xf32>
    %cst_125 = arith.constant dense<0.000000e+00> : vector<1x128xf32>
    %287 = tpu.matmul %259, %286, %cst_125 {dimension_numbers = #tpu.dot_dimension_numbers<[1], [0], [0], [1], [0, 0, 1, 1], [], []>} : vector<1x128xf32>, vector<128x128xf32>, vector<1x128xf32> -> vector<1x128xf32>
    %288 = arith.addf %285, %287 : vector<1x128xf32>
    %c0_126 = arith.constant 0 : index
    %c0_127 = arith.constant 0 : index
    %289 = vector.load %arg6[%c0_126, %c0_127] : memref<1x128xf32, #tpu.memory_space<vmem>>, vector<1x128xf32>
    %290 = arith.addf %288, %289 : vector<1x128xf32>
    %291 = arith.mulf %290, %17 : vector<1x128xf32>
    %292 = math.tanh %291 : vector<1x128xf32>
    %293 = arith.mulf %292, %17 : vector<1x128xf32>
    %294 = arith.addf %293, %20 : vector<1x128xf32>
    %c64_i32_128 = arith.constant 64 : i32
    %295 = tpu.dynamic_rotate %294 by %c64_i32_128 dim 1 : vector<1x128xf32>, i32 -> vector<1x128xf32>
    %296 = arith.mulf %294, %295 : vector<1x128xf32>
    %297 = arith.mulf %294, %252 : vector<1x128xf32>
    %298 = arith.select %7, %297, %21 : vector<1x128xi1>, vector<1x128xf32>
    %299 = arith.select %2, %296, %298 : vector<1x128xi1>, vector<1x128xf32>
    %c64_i32_129 = arith.constant 64 : i32
    %300 = tpu.dynamic_rotate %299 by %c64_i32_129 dim 1 : vector<1x128xf32>, i32 -> vector<1x128xf32>
    %301 = arith.addf %299, %300 : vector<1x128xf32>
    %c32_i32_130 = arith.constant 32 : i32
    %302 = tpu.dynamic_rotate %301 by %c32_i32_130 dim 1 : vector<1x128xf32>, i32 -> vector<1x128xf32>
    %303 = arith.addf %301, %302 : vector<1x128xf32>
    %304 = math.tanh %303 : vector<1x128xf32>
    %305 = arith.mulf %294, %304 : vector<1x128xf32>
    %306 = arith.select %14, %305, %21 : vector<1x128xi1>, vector<1x128xf32>
    %c64_i32_131 = arith.constant 64 : i32
    %307 = tpu.dynamic_rotate %306 by %c64_i32_131 dim 1 : vector<1x128xf32>, i32 -> vector<1x128xf32>
    %308 = arith.addf %306, %307 : vector<1x128xf32>
    %c32_i32_132 = arith.constant 32 : i32
    %309 = tpu.dynamic_rotate %308 by %c32_i32_132 dim 1 : vector<1x128xf32>, i32 -> vector<1x128xf32>
    %310 = arith.addf %308, %309 : vector<1x128xf32>
    %311 = vector.extract_strided_slice %27 {offsets = [6, 0], sizes = [1, 128], strides = [1, 1]} : vector<8x128xf32> to vector<1x128xf32>
    %c0_133 = arith.constant 0 : index
    %c0_134 = arith.constant 0 : index
    %312 = vector.load %arg2[%c0_133, %c0_134] : memref<128x128xf32, #tpu.memory_space<vmem>>, vector<128x128xf32>
    %cst_135 = arith.constant dense<0.000000e+00> : vector<1x128xf32>
    %313 = tpu.matmul %283, %312, %cst_135 {dimension_numbers = #tpu.dot_dimension_numbers<[1], [0], [0], [1], [0, 0, 1, 1], [], []>} : vector<1x128xf32>, vector<128x128xf32>, vector<1x128xf32> -> vector<1x128xf32>
    %314 = arith.addf %311, %313 : vector<1x128xf32>
    %315 = arith.mulf %314, %17 : vector<1x128xf32>
    %316 = math.tanh %315 : vector<1x128xf32>
    %317 = arith.mulf %316, %17 : vector<1x128xf32>
    %318 = arith.addf %317, %20 : vector<1x128xf32>
    %c64_i32_136 = arith.constant 64 : i32
    %319 = tpu.dynamic_rotate %318 by %c64_i32_136 dim 1 : vector<1x128xf32>, i32 -> vector<1x128xf32>
    %320 = arith.mulf %318, %319 : vector<1x128xf32>
    %321 = arith.mulf %318, %276 : vector<1x128xf32>
    %322 = arith.select %7, %321, %21 : vector<1x128xi1>, vector<1x128xf32>
    %323 = arith.select %2, %320, %322 : vector<1x128xi1>, vector<1x128xf32>
    %c64_i32_137 = arith.constant 64 : i32
    %324 = tpu.dynamic_rotate %323 by %c64_i32_137 dim 1 : vector<1x128xf32>, i32 -> vector<1x128xf32>
    %325 = arith.addf %323, %324 : vector<1x128xf32>
    %c32_i32_138 = arith.constant 32 : i32
    %326 = tpu.dynamic_rotate %325 by %c32_i32_138 dim 1 : vector<1x128xf32>, i32 -> vector<1x128xf32>
    %327 = arith.addf %325, %326 : vector<1x128xf32>
    %328 = math.tanh %327 : vector<1x128xf32>
    %329 = arith.mulf %318, %328 : vector<1x128xf32>
    %330 = arith.select %14, %329, %21 : vector<1x128xi1>, vector<1x128xf32>
    %c64_i32_139 = arith.constant 64 : i32
    %331 = tpu.dynamic_rotate %330 by %c64_i32_139 dim 1 : vector<1x128xf32>, i32 -> vector<1x128xf32>
    %332 = arith.addf %330, %331 : vector<1x128xf32>
    %c32_i32_140 = arith.constant 32 : i32
    %333 = tpu.dynamic_rotate %332 by %c32_i32_140 dim 1 : vector<1x128xf32>, i32 -> vector<1x128xf32>
    %334 = arith.addf %332, %333 : vector<1x128xf32>
    %c0_141 = arith.constant 0 : index
    %c0_142 = arith.constant 0 : index
    %335 = vector.load %arg4[%c0_141, %c0_142] : memref<128x128xf32, #tpu.memory_space<vmem>>, vector<128x128xf32>
    %cst_143 = arith.constant dense<0.000000e+00> : vector<1x128xf32>
    %336 = tpu.matmul %283, %335, %cst_143 {dimension_numbers = #tpu.dot_dimension_numbers<[1], [0], [0], [1], [0, 0, 1, 1], [], []>} : vector<1x128xf32>, vector<128x128xf32>, vector<1x128xf32> -> vector<1x128xf32>
    %c0_144 = arith.constant 0 : index
    %c0_145 = arith.constant 0 : index
    %337 = vector.load %arg5[%c0_144, %c0_145] : memref<128x128xf32, #tpu.memory_space<vmem>>, vector<128x128xf32>
    %cst_146 = arith.constant dense<0.000000e+00> : vector<1x128xf32>
    %338 = tpu.matmul %310, %337, %cst_146 {dimension_numbers = #tpu.dot_dimension_numbers<[1], [0], [0], [1], [0, 0, 1, 1], [], []>} : vector<1x128xf32>, vector<128x128xf32>, vector<1x128xf32> -> vector<1x128xf32>
    %339 = arith.addf %336, %338 : vector<1x128xf32>
    %c0_147 = arith.constant 0 : index
    %c0_148 = arith.constant 0 : index
    %340 = vector.load %arg6[%c0_147, %c0_148] : memref<1x128xf32, #tpu.memory_space<vmem>>, vector<1x128xf32>
    %341 = arith.addf %339, %340 : vector<1x128xf32>
    %342 = arith.mulf %341, %17 : vector<1x128xf32>
    %343 = math.tanh %342 : vector<1x128xf32>
    %344 = arith.mulf %343, %17 : vector<1x128xf32>
    %345 = arith.addf %344, %20 : vector<1x128xf32>
    %c64_i32_149 = arith.constant 64 : i32
    %346 = tpu.dynamic_rotate %345 by %c64_i32_149 dim 1 : vector<1x128xf32>, i32 -> vector<1x128xf32>
    %347 = arith.mulf %345, %346 : vector<1x128xf32>
    %348 = arith.mulf %345, %303 : vector<1x128xf32>
    %349 = arith.select %7, %348, %21 : vector<1x128xi1>, vector<1x128xf32>
    %350 = arith.select %2, %347, %349 : vector<1x128xi1>, vector<1x128xf32>
    %c64_i32_150 = arith.constant 64 : i32
    %351 = tpu.dynamic_rotate %350 by %c64_i32_150 dim 1 : vector<1x128xf32>, i32 -> vector<1x128xf32>
    %352 = arith.addf %350, %351 : vector<1x128xf32>
    %c32_i32_151 = arith.constant 32 : i32
    %353 = tpu.dynamic_rotate %352 by %c32_i32_151 dim 1 : vector<1x128xf32>, i32 -> vector<1x128xf32>
    %354 = arith.addf %352, %353 : vector<1x128xf32>
    %355 = math.tanh %354 : vector<1x128xf32>
    %356 = arith.mulf %345, %355 : vector<1x128xf32>
    %357 = arith.select %14, %356, %21 : vector<1x128xi1>, vector<1x128xf32>
    %c64_i32_152 = arith.constant 64 : i32
    %358 = tpu.dynamic_rotate %357 by %c64_i32_152 dim 1 : vector<1x128xf32>, i32 -> vector<1x128xf32>
    %359 = arith.addf %357, %358 : vector<1x128xf32>
    %c32_i32_153 = arith.constant 32 : i32
    %360 = tpu.dynamic_rotate %359 by %c32_i32_153 dim 1 : vector<1x128xf32>, i32 -> vector<1x128xf32>
    %361 = arith.addf %359, %360 : vector<1x128xf32>
    %362 = vector.extract_strided_slice %27 {offsets = [7, 0], sizes = [1, 128], strides = [1, 1]} : vector<8x128xf32> to vector<1x128xf32>
    %c0_154 = arith.constant 0 : index
    %c0_155 = arith.constant 0 : index
    %363 = vector.load %arg2[%c0_154, %c0_155] : memref<128x128xf32, #tpu.memory_space<vmem>>, vector<128x128xf32>
    %cst_156 = arith.constant dense<0.000000e+00> : vector<1x128xf32>
    %364 = tpu.matmul %334, %363, %cst_156 {dimension_numbers = #tpu.dot_dimension_numbers<[1], [0], [0], [1], [0, 0, 1, 1], [], []>} : vector<1x128xf32>, vector<128x128xf32>, vector<1x128xf32> -> vector<1x128xf32>
    %365 = arith.addf %362, %364 : vector<1x128xf32>
    %366 = arith.mulf %365, %17 : vector<1x128xf32>
    %367 = math.tanh %366 : vector<1x128xf32>
    %368 = arith.mulf %367, %17 : vector<1x128xf32>
    %369 = arith.addf %368, %20 : vector<1x128xf32>
    %c64_i32_157 = arith.constant 64 : i32
    %370 = tpu.dynamic_rotate %369 by %c64_i32_157 dim 1 : vector<1x128xf32>, i32 -> vector<1x128xf32>
    %371 = arith.mulf %369, %370 : vector<1x128xf32>
    %372 = arith.mulf %369, %327 : vector<1x128xf32>
    %373 = arith.select %7, %372, %21 : vector<1x128xi1>, vector<1x128xf32>
    %374 = arith.select %2, %371, %373 : vector<1x128xi1>, vector<1x128xf32>
    %c64_i32_158 = arith.constant 64 : i32
    %375 = tpu.dynamic_rotate %374 by %c64_i32_158 dim 1 : vector<1x128xf32>, i32 -> vector<1x128xf32>
    %376 = arith.addf %374, %375 : vector<1x128xf32>
    %c32_i32_159 = arith.constant 32 : i32
    %377 = tpu.dynamic_rotate %376 by %c32_i32_159 dim 1 : vector<1x128xf32>, i32 -> vector<1x128xf32>
    %378 = arith.addf %376, %377 : vector<1x128xf32>
    %379 = math.tanh %378 : vector<1x128xf32>
    %380 = arith.mulf %369, %379 : vector<1x128xf32>
    %381 = arith.select %14, %380, %21 : vector<1x128xi1>, vector<1x128xf32>
    %c64_i32_160 = arith.constant 64 : i32
    %382 = tpu.dynamic_rotate %381 by %c64_i32_160 dim 1 : vector<1x128xf32>, i32 -> vector<1x128xf32>
    %383 = arith.addf %381, %382 : vector<1x128xf32>
    %c32_i32_161 = arith.constant 32 : i32
    %384 = tpu.dynamic_rotate %383 by %c32_i32_161 dim 1 : vector<1x128xf32>, i32 -> vector<1x128xf32>
    %385 = arith.addf %383, %384 : vector<1x128xf32>
    %c0_162 = arith.constant 0 : index
    %c0_163 = arith.constant 0 : index
    %386 = vector.load %arg4[%c0_162, %c0_163] : memref<128x128xf32, #tpu.memory_space<vmem>>, vector<128x128xf32>
    %cst_164 = arith.constant dense<0.000000e+00> : vector<1x128xf32>
    %387 = tpu.matmul %334, %386, %cst_164 {dimension_numbers = #tpu.dot_dimension_numbers<[1], [0], [0], [1], [0, 0, 1, 1], [], []>} : vector<1x128xf32>, vector<128x128xf32>, vector<1x128xf32> -> vector<1x128xf32>
    %c0_165 = arith.constant 0 : index
    %c0_166 = arith.constant 0 : index
    %388 = vector.load %arg5[%c0_165, %c0_166] : memref<128x128xf32, #tpu.memory_space<vmem>>, vector<128x128xf32>
    %cst_167 = arith.constant dense<0.000000e+00> : vector<1x128xf32>
    %389 = tpu.matmul %361, %388, %cst_167 {dimension_numbers = #tpu.dot_dimension_numbers<[1], [0], [0], [1], [0, 0, 1, 1], [], []>} : vector<1x128xf32>, vector<128x128xf32>, vector<1x128xf32> -> vector<1x128xf32>
    %390 = arith.addf %387, %389 : vector<1x128xf32>
    %c0_168 = arith.constant 0 : index
    %c0_169 = arith.constant 0 : index
    %391 = vector.load %arg6[%c0_168, %c0_169] : memref<1x128xf32, #tpu.memory_space<vmem>>, vector<1x128xf32>
    %392 = arith.addf %390, %391 : vector<1x128xf32>
    %393 = arith.mulf %392, %17 : vector<1x128xf32>
    %394 = math.tanh %393 : vector<1x128xf32>
    %395 = arith.mulf %394, %17 : vector<1x128xf32>
    %396 = arith.addf %395, %20 : vector<1x128xf32>
    %c64_i32_170 = arith.constant 64 : i32
    %397 = tpu.dynamic_rotate %396 by %c64_i32_170 dim 1 : vector<1x128xf32>, i32 -> vector<1x128xf32>
    %398 = arith.mulf %396, %397 : vector<1x128xf32>
    %399 = arith.mulf %396, %354 : vector<1x128xf32>
    %400 = arith.select %7, %399, %21 : vector<1x128xi1>, vector<1x128xf32>
    %401 = arith.select %2, %398, %400 : vector<1x128xi1>, vector<1x128xf32>
    %c64_i32_171 = arith.constant 64 : i32
    %402 = tpu.dynamic_rotate %401 by %c64_i32_171 dim 1 : vector<1x128xf32>, i32 -> vector<1x128xf32>
    %403 = arith.addf %401, %402 : vector<1x128xf32>
    %c32_i32_172 = arith.constant 32 : i32
    %404 = tpu.dynamic_rotate %403 by %c32_i32_172 dim 1 : vector<1x128xf32>, i32 -> vector<1x128xf32>
    %405 = arith.addf %403, %404 : vector<1x128xf32>
    %406 = math.tanh %405 : vector<1x128xf32>
    %407 = arith.mulf %396, %406 : vector<1x128xf32>
    %408 = arith.select %14, %407, %21 : vector<1x128xi1>, vector<1x128xf32>
    %c64_i32_173 = arith.constant 64 : i32
    %409 = tpu.dynamic_rotate %408 by %c64_i32_173 dim 1 : vector<1x128xf32>, i32 -> vector<1x128xf32>
    %410 = arith.addf %408, %409 : vector<1x128xf32>
    %c32_i32_174 = arith.constant 32 : i32
    %411 = tpu.dynamic_rotate %410 by %c32_i32_174 dim 1 : vector<1x128xf32>, i32 -> vector<1x128xf32>
    %412 = arith.addf %410, %411 : vector<1x128xf32>
    %c0_175 = arith.constant 0 : index
    %c0_176 = arith.constant 0 : index
    %413 = vector.load %arg4[%c0_175, %c0_176] : memref<128x128xf32, #tpu.memory_space<vmem>>, vector<128x128xf32>
    %cst_177 = arith.constant dense<0.000000e+00> : vector<1x128xf32>
    %414 = tpu.matmul %385, %413, %cst_177 {dimension_numbers = #tpu.dot_dimension_numbers<[1], [0], [0], [1], [0, 0, 1, 1], [], []>} : vector<1x128xf32>, vector<128x128xf32>, vector<1x128xf32> -> vector<1x128xf32>
    %c0_178 = arith.constant 0 : index
    %c0_179 = arith.constant 0 : index
    %415 = vector.load %arg5[%c0_178, %c0_179] : memref<128x128xf32, #tpu.memory_space<vmem>>, vector<128x128xf32>
    %cst_180 = arith.constant dense<0.000000e+00> : vector<1x128xf32>
    %416 = tpu.matmul %412, %415, %cst_180 {dimension_numbers = #tpu.dot_dimension_numbers<[1], [0], [0], [1], [0, 0, 1, 1], [], []>} : vector<1x128xf32>, vector<128x128xf32>, vector<1x128xf32> -> vector<1x128xf32>
    %417 = arith.addf %414, %416 : vector<1x128xf32>
    %c0_181 = arith.constant 0 : index
    %c0_182 = arith.constant 0 : index
    %418 = vector.load %arg6[%c0_181, %c0_182] : memref<1x128xf32, #tpu.memory_space<vmem>>, vector<1x128xf32>
    %419 = arith.addf %417, %418 : vector<1x128xf32>
    %420 = arith.mulf %419, %17 : vector<1x128xf32>
    %421 = math.tanh %420 : vector<1x128xf32>
    %422 = arith.mulf %421, %17 : vector<1x128xf32>
    %423 = arith.addf %422, %20 : vector<1x128xf32>
    %c64_i32_183 = arith.constant 64 : i32
    %424 = tpu.dynamic_rotate %423 by %c64_i32_183 dim 1 : vector<1x128xf32>, i32 -> vector<1x128xf32>
    %425 = arith.mulf %423, %424 : vector<1x128xf32>
    %426 = arith.mulf %423, %405 : vector<1x128xf32>
    %427 = arith.select %7, %426, %21 : vector<1x128xi1>, vector<1x128xf32>
    %428 = arith.select %2, %425, %427 : vector<1x128xi1>, vector<1x128xf32>
    %c64_i32_184 = arith.constant 64 : i32
    %429 = tpu.dynamic_rotate %428 by %c64_i32_184 dim 1 : vector<1x128xf32>, i32 -> vector<1x128xf32>
    %430 = arith.addf %428, %429 : vector<1x128xf32>
    %c32_i32_185 = arith.constant 32 : i32
    %431 = tpu.dynamic_rotate %430 by %c32_i32_185 dim 1 : vector<1x128xf32>, i32 -> vector<1x128xf32>
    %432 = arith.addf %430, %431 : vector<1x128xf32>
    %433 = math.tanh %432 : vector<1x128xf32>
    %434 = arith.mulf %423, %433 : vector<1x128xf32>
    %435 = arith.select %14, %434, %21 : vector<1x128xi1>, vector<1x128xf32>
    %c64_i32_186 = arith.constant 64 : i32
    %436 = tpu.dynamic_rotate %435 by %c64_i32_186 dim 1 : vector<1x128xf32>, i32 -> vector<1x128xf32>
    %437 = arith.addf %435, %436 : vector<1x128xf32>
    %c32_i32_187 = arith.constant 32 : i32
    %438 = tpu.dynamic_rotate %437 by %c32_i32_187 dim 1 : vector<1x128xf32>, i32 -> vector<1x128xf32>
    %439 = arith.addf %437, %438 : vector<1x128xf32>
    %440 = tpu.concatenate %106, %157, %208, %259, %310, %361, %412, %439 in 0 : vector<1x128xf32>, vector<1x128xf32>, vector<1x128xf32>, vector<1x128xf32>, vector<1x128xf32>, vector<1x128xf32>, vector<1x128xf32>, vector<1x128xf32> -> vector<8x128xf32>
    %c0_188 = arith.constant 0 : index
    %c0_189 = arith.constant 0 : index
    %441 = vector.load %arg9[%c0_188, %c0_189] : memref<128x4xf32, #tpu.memory_space<vmem>>, vector<128x4xf32>
    %cst_190 = arith.constant dense<0.000000e+00> : vector<8x4xf32>
    %442 = tpu.matmul %440, %441, %cst_190 {dimension_numbers = #tpu.dot_dimension_numbers<[1], [0], [0], [1], [0, 0, 1, 1], [], []>} : vector<8x128xf32>, vector<128x4xf32>, vector<8x4xf32> -> vector<8x4xf32>
    %c0_191 = arith.constant 0 : index
    %c0_192 = arith.constant 0 : index
    %443 = vector.load %arg10[%c0_191, %c0_192] : memref<1x4xf32, #tpu.memory_space<vmem>>, vector<1x4xf32>
    %444 = vector.broadcast %443 : vector<1x4xf32> to vector<8x4xf32>
    %445 = arith.addf %442, %444 : vector<8x4xf32>
    %c0_193 = arith.constant 0 : index
    %c0_194 = arith.constant 0 : index
    %446 = vector.load %arg11[%c0_193, %c0_194] : memref<8x4xf32, #tpu.memory_space<vmem>>, vector<8x4xf32>
    tpu.vector_store %arg11[%c0_193, %c0_194], %445 {strides = array<i32>} : memref<8x4xf32, #tpu.memory_space<vmem>>, vector<8x4xf32>,
    %447 = tpu.concatenate %385, %439 in 0 : vector<1x128xf32>, vector<1x128xf32> -> vector<2x128xf32>
    %c0_195 = arith.constant 0 : index
    %c0_196 = arith.constant 0 : index
    %448 = vector.load %arg12[%c0_195, %c0_196] : memref<2x128xf32, #tpu.memory_space<vmem>>, vector<2x128xf32>
    tpu.vector_store %arg12[%c0_195, %c0_196], %447 {strides = array<i32>} : memref<2x128xf32, #tpu.memory_space<vmem>>, vector<2x128xf32>,
    %449 = tpu.concatenate %378, %432 in 0 : vector<1x128xf32>, vector<1x128xf32> -> vector<2x128xf32>
    %c0_197 = arith.constant 0 : index
    %c0_198 = arith.constant 0 : index
    %450 = vector.load %arg13[%c0_197, %c0_198] : memref<2x128xf32, #tpu.memory_space<vmem>>, vector<2x128xf32>
    tpu.vector_store %arg13[%c0_197, %c0_198], %449 {strides = array<i32>} : memref<2x128xf32, #tpu.memory_space<vmem>>, vector<2x128xf32>,
    return
  }
}

</mosaic_0001>

<llo_original>
// kernel: tpu_custom_call.1
$region0: #{tpu_custom_call.1}
  #allocation0 [shape = 'u32[]', space=smem, size = 0x4, offset = 0x4, fixed_abs, tag = 'smem constant byte address 0x4 - core index']
  #allocation1 [shape = 'u32[144,128]{1,0:T(1,128)}', space=vmem, size = 0x12000, scoped, tag = 'internal scratch']
  %s0 = inlined_call_operand.vmem [shape: f32[8,16], index: 0, kind: input, shape index: {}]
  %s1 = inlined_call_operand.hbm [shape: f32[16,128], index: 1, kind: input, shape index: {}]
  %s2 = inlined_call_operand.vmem [shape: f32[128,128], index: 2, kind: input, shape index: {}]
  %s3 = inlined_call_operand.vmem [shape: f32[1,128], index: 3, kind: input, shape index: {}]
  %s4 = inlined_call_operand.hbm [shape: f32[128,128], index: 4, kind: input, shape index: {}]
  %s5 = inlined_call_operand.hbm [shape: f32[128,128], index: 5, kind: input, shape index: {}]
  %s6 = inlined_call_operand.vmem [shape: f32[1,128], index: 6, kind: input, shape index: {}]
  %s7 = inlined_call_operand.vmem [shape: f32[2,128], index: 7, kind: input, shape index: {}]
  %s8 = inlined_call_operand.vmem [shape: f32[2,128], index: 8, kind: input, shape index: {}]
  %s9 = inlined_call_operand.vmem [shape: f32[128,4], index: 9, kind: input, shape index: {}]
  %s10 = inlined_call_operand.vmem [shape: f32[1,4], index: 10, kind: input, shape index: {}]
  %s11 = inlined_call_operand.vmem [shape: f32[8,4], index: 11, kind: output, shape index: {0}]
  %s12 = inlined_call_operand.hbm [shape: f32[2,128], index: 12, kind: output, shape index: {1}]
  %s13 = inlined_call_operand.hbm [shape: f32[2,128], index: 13, kind: output, shape index: {2}]
  %14 = xla_tuple %s11, %s12, %s13
  %s15 = sld [smem:[#allocation0]]
  $region82: #{tpu_custom_call.1} parent=0
    _
  %s17 = ssub.s32 1, %s15
  %s18 = scalar_select 0, %s17, %s15
  $region1: #{tpu_custom_call.1} parent=0
    #allocation2 [shape = 'u8[8192]{0}', space=vmem, size = 0x2000, scoped, tag = 'input window, operand 1, single buffered']
    #allocation3 [shape = 's32[1]{0}', space=sflag, size = 0x4, scoped, tag = 'scoped memory for tpu_custom_call.1']
    #allocation4 [shape = 's32[1]{0}', space=sflag, size = 0x4, scoped, tag = 'scoped memory for tpu_custom_call.1']
    #allocation5 [shape = 'u8[65536]{0}', space=vmem, size = 0x10000, scoped, tag = 'input window, operand 4, single buffered']
    #allocation6 [shape = 's32[1]{0}', space=sflag, size = 0x4, scoped, tag = 'scoped memory for tpu_custom_call.1']
    #allocation7 [shape = 'u8[65536]{0}', space=vmem, size = 0x10000, scoped, tag = 'input window, operand 5, single buffered']
    #allocation8 [shape = 'u8[1024]{0}', space=vmem, size = 0x400, scoped, tag = 'output window, operand 1, single buffered']
    #allocation9 [shape = 'u8[1024]{0}', space=vmem, size = 0x400, scoped, tag = 'output window, operand 2, single buffered']
    #allocation10 [shape = 's32[1]{0}', space=sflag, size = 0x4, scoped, tag = 'scoped memory for tpu_custom_call.1']
    %19 = vsyncpa [#allocation3], 0
    %20 = vsyncpa [#allocation6], 0
    %21 = vsyncpa [#allocation4], 0
    %22 = vsyncpa [#allocation10], 0
    // Predicated region
    $region2: #{tpu_custom_call.1} parent=1 // pred_check
      _
    $region3: #{tpu_custom_call.1} parent=1 // pred_check_branch
      %24 = sbr.rel (0) target = $region5
    $region4: #{tpu_custom_call.1} parent=1 // pred_region
      _
    $region5: #{tpu_custom_call.1} parent=1 // pred_fallthru
      _
    // Predicated region
    $region6: #{tpu_custom_call.1} parent=1 // pred_check
      _
    $region7: #{tpu_custom_call.1} parent=1 // pred_check_branch
      %26 = sbr.rel (0) target = $region9
    $region8: #{tpu_custom_call.1} parent=1 // pred_region
      %s28 = ssub.s32 256, 256
      %29 = vsyncadd [#allocation3], %s28
      %s30 = sshll.u32 [#allocation2], 4
      %s31 = int_to_ptr.vmem [resolvable:$true] %s30
      %36 = dma.hbm_to_vmem [thread:$0]  %s1, 256, %s31, [#allocation3], 128, 128, 8
    $region9: #{tpu_custom_call.1} parent=1 // pred_fallthru
      _
    // Predicated region
    $region10: #{tpu_custom_call.1} parent=1 // pred_check
      _
    $region11: #{tpu_custom_call.1} parent=1 // pred_check_branch
      %38 = sbr.rel (0) target = $region13
    $region12: #{tpu_custom_call.1} parent=1 // pred_region
      _
    $region13: #{tpu_custom_call.1} parent=1 // pred_fallthru
      _
    // Predicated region
    $region14: #{tpu_custom_call.1} parent=1 // pred_check
      _
    $region15: #{tpu_custom_call.1} parent=1 // pred_check_branch
      %40 = sbr.rel (0) target = $region17
    $region16: #{tpu_custom_call.1} parent=1 // pred_region
      _
    $region17: #{tpu_custom_call.1} parent=1 // pred_fallthru
      _
    // Predicated region
    $region18: #{tpu_custom_call.1} parent=1 // pred_check
      _
    $region19: #{tpu_custom_call.1} parent=1 // pred_check_branch
      %42 = sbr.rel (0) target = $region21
    $region20: #{tpu_custom_call.1} parent=1 // pred_region
      %s44 = ssub.s32 2048, 2048
      %45 = vsyncadd [#allocation6], %s44
      %s46 = sshll.u32 [#allocation5], 4
      %s47 = int_to_ptr.vmem [resolvable:$true] %s46
      %52 = dma.hbm_to_vmem [thread:$0]  %s4, 2048, %s47, [#allocation6], 128, 128, 8
    $region21: #{tpu_custom_call.1} parent=1 // pred_fallthru
      _
    // Predicated region
    $region22: #{tpu_custom_call.1} parent=1 // pred_check
      _
    $region23: #{tpu_custom_call.1} parent=1 // pred_check_branch
      %54 = sbr.rel (0) target = $region25
    $region24: #{tpu_custom_call.1} parent=1 // pred_region
      %s56 = ssub.s32 2048, 2048
      %57 = vsyncadd [#allocation6], %s56
      %s58 = sshll.u32 [#allocation7], 4
      %s59 = int_to_ptr.vmem [resolvable:$true] %s58
      %64 = dma.hbm_to_vmem [thread:$0]  %s5, 2048, %s59, [#allocation6], 128, 128, 8
    $region25: #{tpu_custom_call.1} parent=1 // pred_fallthru
      _
    // Predicated region
    $region26: #{tpu_custom_call.1} parent=1 // pred_check
      _
    $region27: #{tpu_custom_call.1} parent=1 // pred_check_branch
      %66 = sbr.rel (0) target = $region29
    $region28: #{tpu_custom_call.1} parent=1 // pred_region
      _
    $region29: #{tpu_custom_call.1} parent=1 // pred_fallthru
      _
    // Predicated region
    $region30: #{tpu_custom_call.1} parent=1 // pred_check
      _
    $region31: #{tpu_custom_call.1} parent=1 // pred_check_branch
      %68 = sbr.rel (0) target = $region33
    $region32: #{tpu_custom_call.1} parent=1 // pred_region
      _
    $region33: #{tpu_custom_call.1} parent=1 // pred_fallthru
      _
    // Predicated region
    $region34: #{tpu_custom_call.1} parent=1 // pred_check
      _
    $region35: #{tpu_custom_call.1} parent=1 // pred_check_branch
      %70 = sbr.rel (0) target = $region37
    $region36: #{tpu_custom_call.1} parent=1 // pred_region
      _
    $region37: #{tpu_custom_call.1} parent=1 // pred_fallthru
      _
    // Predicated region
    $region38: #{tpu_custom_call.1} parent=1 // pred_check
      _
    $region39: #{tpu_custom_call.1} parent=1 // pred_check_branch
      %72 = sbr.rel (0) target = $region41
    $region40: #{tpu_custom_call.1} parent=1 // pred_region
      _
    $region41: #{tpu_custom_call.1} parent=1 // pred_fallthru
      _
    // Predicated region
    $region42: #{tpu_custom_call.1} parent=1 // pred_check
      _
    $region43: #{tpu_custom_call.1} parent=1 // pred_check_branch
      %74 = sbr.rel (0) target = $region45
    $region44: #{tpu_custom_call.1} parent=1 // pred_region
      _
    $region45: #{tpu_custom_call.1} parent=1 // pred_fallthru
      _
    // Predicated region
    $region46: #{tpu_custom_call.1} parent=1 // pred_check
      _
    $region47: #{tpu_custom_call.1} parent=1 // pred_check_branch
      %76 = sbr.rel (0) target = $region49
    $region48: #{tpu_custom_call.1} parent=1 // pred_region
      %77 = dma.done [#allocation3], 256
    $region49: #{tpu_custom_call.1} parent=1 // pred_fallthru
      _
    // Predicated region
    $region50: #{tpu_custom_call.1} parent=1 // pred_check
      _
    $region51: #{tpu_custom_call.1} parent=1 // pred_check_branch
      %79 = sbr.rel (0) target = $region53
    $region52: #{tpu_custom_call.1} parent=1 // pred_region
      %80 = dma.done [#allocation6], 2048
    $region53: #{tpu_custom_call.1} parent=1 // pred_fallthru
      _
    // Predicated region
    $region54: #{tpu_custom_call.1} parent=1 // pred_check
      _
    $region55: #{tpu_custom_call.1} parent=1 // pred_check_branch
      %82 = sbr.rel (0) target = $region57
    $region56: #{tpu_custom_call.1} parent=1 // pred_region
      %83 = dma.done [#allocation6], 2048
    $region57: #{tpu_custom_call.1} parent=1 // pred_fallthru
      _
    %v84 = vlaneseq
    %v85 = vand.u32 %v84, 127
    %vm86 = vcmp.lt.s32.totalorder %v85, 32
    %vm87 = vcmp.ge.s32.totalorder %v85, 32
    %vm88 = vcmp.lt.s32.totalorder %v85, 64
    %vm89 = vmand %vm87, %vm88
    %vm90 = vcmp.ge.s32.totalorder %v85, 64
    %vm91 = vcmp.lt.s32.totalorder %v85, 96
    %vm92 = vmand %vm90, %vm91
    %vm93 = vcmp.ge.s32.totalorder %v85, 96
    %v94 = vsel %vm92, 1.0, 0.5
    %v95 = vsel %vm92, 0.0, 0.5
    %v96 = vld [vmem:[%s0] sm:$0xff]
    %v97 = vld [vmem:[#allocation2] sm:$0xff]
    %v98 = vld [vmem:[#allocation2 + $0x8] sm:$0xff]
    %v99 = vld [vmem:[%s3] sm:$0x1]
    %v101 = vlaneseq
    %v102 = vshrl.u32 %v101, 7
    %v103 = vsub.s32 0, %v102
    %v104 = vrot.slane %v99, %v103
    %vm106 = vcmask 130048
    %v108 = vsel %vm106, %v96, 0
    %110 = vmatprep.subr.mxu0 0.0
    %111 = vmatpush1.msra.mxu0 %v97
    %112 = vmatprep.subr.mxu0 0.0
    %113 = vmatpush1.msra.mxu0 %v98
    %114 = vmatprep.subr.mxu0 0.0
    %115 = vmatpush1.msra.mxu0 0.0
    %116 = vmatprep.subr.mxu0 0.0
    %117 = vmatpush1.msra.mxu0 0.0
    %118 = vmatprep.subr.mxu0 0.0
    %119 = vmatpush1.msra.mxu0 0.0
    %120 = vmatprep.subr.mxu0 0.0
    %121 = vmatpush1.msra.mxu0 0.0
    %122 = vmatprep.subr.mxu0 0.0
    %123 = vmatpush1.msra.mxu0 0.0
    %124 = vmatprep.subr.mxu0 0.0
    %125 = vmatpush1.msra.mxu0 0.0
    %126 = vmatprep.subr.mxu0 0.0
    %127 = vmatpush1.msra.mxu0 0.0
    %128 = vmatprep.subr.mxu0 0.0
    %129 = vmatpush1.msra.mxu0 0.0
    %130 = vmatprep.subr.mxu0 0.0
    %131 = vmatpush1.msra.mxu0 0.0
    %132 = vmatprep.subr.mxu0 0.0
    %133 = vmatpush1.msra.mxu0 0.0
    %134 = vmatprep.subr.mxu0 0.0
    %135 = vmatpush1.msra.mxu0 0.0
    %136 = vmatprep.subr.mxu0 0.0
    %137 = vmatpush1.msra.mxu0 0.0
    %138 = vmatprep.subr.mxu0 0.0
    %139 = vmatpush1.msra.mxu0 0.0
    %140 = vmatprep.subr.mxu0 0.0
    %141 = vmatpush1.msra.mxu0 0.0
    %142 = vmatprep.subr.mxu0 0.0
    %143 = vmatpush1.msra.mxu0 0.0
    %144 = vmatprep.subr.mxu0 0.0
    %145 = vmatpush1.msra.mxu0 0.0
    %146 = vmatprep.subr.mxu0 0.0
    %147 = vmatpush1.msra.mxu0 0.0
    %148 = vmatprep.subr.mxu0 0.0
    %149 = vmatpush1.msra.mxu0 0.0
    %150 = vmatprep.subr.mxu0 0.0
    %151 = vmatpush1.msra.mxu0 0.0
    %152 = vmatprep.subr.mxu0 0.0
    %153 = vmatpush1.msra.mxu0 0.0
    %154 = vmatprep.subr.mxu0 0.0
    %155 = vmatpush1.msra.mxu0 0.0
    %156 = vmatprep.subr.mxu0 0.0
    %157 = vmatpush1.msra.mxu0 0.0
    %158 = vmatprep.subr.mxu0 0.0
    %159 = vmatpush1.msra.mxu0 0.0
    %160 = vmatprep.subr.mxu0 0.0
    %161 = vmatpush1.msra.mxu0 0.0
    %162 = vmatprep.subr.mxu0 0.0
    %163 = vmatpush1.msra.mxu0 0.0
    %164 = vmatprep.subr.mxu0 0.0
    %165 = vmatpush1.msra.mxu0 0.0
    %166 = vmatprep.subr.mxu0 0.0
    %167 = vmatpush1.msra.mxu0 0.0
    %168 = vmatprep.subr.mxu0 0.0
    %169 = vmatpush1.msra.mxu0 0.0
    %170 = vmatprep.subr.mxu0 0.0
    %171 = vmatpush1.msra.mxu0 0.0
    %172 = vmatprep.subr.mxu0 0.0
    %173 = vmatpush1.msra.mxu0 0.0
    %174 = vmatprep.mubr.f32.mxu0 0.0
    %175 = vmatmul.mubr.f32.gmra.mrb[0].mxu0 %v108
    %v176 = vpop.f32.mrb[0].mxu0
    %v177 = vadd.f32 %v104, %v176
    %v178 = vpop.f32.mrb[0].mxu0
    %179 = vdwg.mxu0
    %v180 = vld [vmem:[%s7] sm:$0x1]
    %v181 = vld [vmem:[%s7 + $0x1] sm:$0x1]
    %v182 = vld [vmem:[%s8] sm:$0x1]
    %v183 = vld [vmem:[%s8 + $0x1] sm:$0x1]
    %v184 = vld [vmem:[%s2] sm:$0xff]
    %v185 = vld [vmem:[%s2 + $0x8] sm:$0xff]
    %v186 = vld [vmem:[%s2 + $0x10] sm:$0xff]
    %v187 = vld [vmem:[%s2 + $0x18] sm:$0xff]
    %v188 = vld [vmem:[%s2 + $0x20] sm:$0xff]
    %v189 = vld [vmem:[%s2 + $0x28] sm:$0xff]
    %v190 = vld [vmem:[%s2 + $0x30] sm:$0xff]
    %v191 = vld [vmem:[%s2 + $0x38] sm:$0xff]
    %v192 = vld [vmem:[%s2 + $0x40] sm:$0xff]
    %v193 = vld [vmem:[%s2 + $0x48] sm:$0xff]
    %v194 = vld [vmem:[%s2 + $0x50] sm:$0xff]
    %v195 = vld [vmem:[%s2 + $0x58] sm:$0xff]
    %v196 = vld [vmem:[%s2 + $0x60] sm:$0xff]
    %v197 = vld [vmem:[%s2 + $0x68] sm:$0xff]
    %v198 = vld [vmem:[%s2 + $0x70] sm:$0xff]
    %v199 = vld [vmem:[%s2 + $0x78] sm:$0xff]
    %200 = vmatprep.subr.mxu0 0.0
    %201 = vmatpush1.msra.mxu0 %v184
    %202 = vmatprep.subr.mxu0 0.0
    %203 = vmatpush1.msra.mxu0 %v185
    %204 = vmatprep.subr.mxu0 0.0
    %205 = vmatpush1.msra.mxu0 %v186
    %206 = vmatprep.subr.mxu0 0.0
    %207 = vmatpush1.msra.mxu0 %v187
    %208 = vmatprep.subr.mxu0 0.0
    %209 = vmatpush1.msra.mxu0 %v188
    %210 = vmatprep.subr.mxu0 0.0
    %211 = vmatpush1.msra.mxu0 %v189
    %212 = vmatprep.subr.mxu0 0.0
    %213 = vmatpush1.msra.mxu0 %v190
    %214 = vmatprep.subr.mxu0 0.0
    %215 = vmatpush1.msra.mxu0 %v191
    %216 = vmatprep.subr.mxu0 0.0
    %217 = vmatpush1.msra.mxu0 %v192
    %218 = vmatprep.subr.mxu0 0.0
    %219 = vmatpush1.msra.mxu0 %v193
    %220 = vmatprep.subr.mxu0 0.0
    %221 = vmatpush1.msra.mxu0 %v194
    %222 = vmatprep.subr.mxu0 0.0
    %223 = vmatpush1.msra.mxu0 %v195
    %224 = vmatprep.subr.mxu0 0.0
    %225 = vmatpush1.msra.mxu0 %v196
    %226 = vmatprep.subr.mxu0 0.0
    %227 = vmatpush1.msra.mxu0 %v197
    %228 = vmatprep.subr.mxu0 0.0
    %229 = vmatpush1.msra.mxu0 %v198
    %230 = vmatprep.subr.mxu0 0.0
    %231 = vmatpush1.msra.mxu0 %v199
    %232 = vmatprep.subr.mxu0 0.0
    %233 = vmatpush1.msra.mxu0 0.0
    %234 = vmatprep.subr.mxu0 0.0
    %235 = vmatpush1.msra.mxu0 0.0
    %236 = vmatprep.subr.mxu0 0.0
    %237 = vmatpush1.msra.mxu0 0.0
    %238 = vmatprep.subr.mxu0 0.0
    %239 = vmatpush1.msra.mxu0 0.0
    %240 = vmatprep.subr.mxu0 0.0
    %241 = vmatpush1.msra.mxu0 0.0
    %242 = vmatprep.subr.mxu0 0.0
    %243 = vmatpush1.msra.mxu0 0.0
    %244 = vmatprep.subr.mxu0 0.0
    %245 = vmatpush1.msra.mxu0 0.0
    %246 = vmatprep.subr.mxu0 0.0
    %247 = vmatpush1.msra.mxu0 0.0
    %248 = vmatprep.subr.mxu0 0.0
    %249 = vmatpush1.msra.mxu0 0.0
    %250 = vmatprep.subr.mxu0 0.0
    %251 = vmatpush1.msra.mxu0 0.0
    %252 = vmatprep.subr.mxu0 0.0
    %253 = vmatpush1.msra.mxu0 0.0
    %254 = vmatprep.subr.mxu0 0.0
    %255 = vmatpush1.msra.mxu0 0.0
    %256 = vmatprep.subr.mxu0 0.0
    %257 = vmatpush1.msra.mxu0 0.0
    %258 = vmatprep.subr.mxu0 0.0
    %259 = vmatpush1.msra.mxu0 0.0
    %260 = vmatprep.subr.mxu0 0.0
    %261 = vmatpush1.msra.mxu0 0.0
    %262 = vmatprep.subr.mxu0 0.0
    %263 = vmatpush1.msra.mxu0 0.0
    %264 = vmatprep.mubr.f32.mxu0 0.0
    %265 = vmatmul.mubr.f32.gmra.mrb[0].mxu0 %v180
    %v266 = vpop.f32.mrb[0].mxu0
    %v267 = vadd.f32 0.0, %v266
    %v268 = vpop.f32.mrb[0].mxu0
    %269 = vdwg.mxu0
    %v270 = vadd.f32 %v177, %v267
    %v271 = vmul.f32 %v270, %v94
    %v272 = vtanh.pop %v271
    %v273 = vmul.f32 %v272, %v94
    %v274 = vadd.f32 %v273, %v95
    %275 = vrot.lane.b32.xlu0 %v274, 64
    %v276 = vpop.permute.xlu0 %275
    %v277 = vmul.f32 %v274, %v276
    %v278 = vmul.f32 %v274, %v182
    %v279 = vsel %vm89, %v278, 0.0
    %v280 = vsel %vm86, %v277, %v279
    %281 = vrot.lane.b32.xlu0 %v280, 64
    %v282 = vpop.permute.xlu0 %281
    %v283 = vadd.f32 %v280, %v282
    %284 = vrot.lane.b32.xlu0 %v283, 32
    %v285 = vpop.permute.xlu0 %284
    %v286 = vadd.f32 %v283, %v285
    %v287 = vtanh.pop %v286
    %v288 = vmul.f32 %v274, %v287
    %v289 = vsel %vm93, %v288, 0.0
    %290 = vrot.lane.b32.xlu0 %v289, 64
    %v291 = vpop.permute.xlu0 %290
    %v292 = vadd.f32 %v289, %v291
    %293 = vrot.lane.b32.xlu0 %v292, 32
    %v294 = vpop.permute.xlu0 %293
    %v295 = vadd.f32 %v292, %v294
    %296 = vmatprep.subr.mxu0 0.0
    %297 = vmatpush1.msra.mxu0 %v184
    %298 = vmatprep.subr.mxu0 0.0
    %299 = vmatpush1.msra.mxu0 %v185
    %300 = vmatprep.subr.mxu0 0.0
    %301 = vmatpush1.msra.mxu0 %v186
    %302 = vmatprep.subr.mxu0 0.0
    %303 = vmatpush1.msra.mxu0 %v187
    %304 = vmatprep.subr.mxu0 0.0
    %305 = vmatpush1.msra.mxu0 %v188
    %306 = vmatprep.subr.mxu0 0.0
    %307 = vmatpush1.msra.mxu0 %v189
    %308 = vmatprep.subr.mxu0 0.0
    %309 = vmatpush1.msra.mxu0 %v190
    %310 = vmatprep.subr.mxu0 0.0
    %311 = vmatpush1.msra.mxu0 %v191
    %312 = vmatprep.subr.mxu0 0.0
    %313 = vmatpush1.msra.mxu0 %v192
    %314 = vmatprep.subr.mxu0 0.0
    %315 = vmatpush1.msra.mxu0 %v193
    %316 = vmatprep.subr.mxu0 0.0
    %317 = vmatpush1.msra.mxu0 %v194
    %318 = vmatprep.subr.mxu0 0.0
    %319 = vmatpush1.msra.mxu0 %v195
    %320 = vmatprep.subr.mxu0 0.0
    %321 = vmatpush1.msra.mxu0 %v196
    %322 = vmatprep.subr.mxu0 0.0
    %323 = vmatpush1.msra.mxu0 %v197
    %324 = vmatprep.subr.mxu0 0.0
    %325 = vmatpush1.msra.mxu0 %v198
    %326 = vmatprep.subr.mxu0 0.0
    %327 = vmatpush1.msra.mxu0 %v199
    %328 = vmatprep.subr.mxu0 0.0
    %329 = vmatpush1.msra.mxu0 0.0
    %330 = vmatprep.subr.mxu0 0.0
    %331 = vmatpush1.msra.mxu0 0.0
    %332 = vmatprep.subr.mxu0 0.0
    %333 = vmatpush1.msra.mxu0 0.0
    %334 = vmatprep.subr.mxu0 0.0
    %335 = vmatpush1.msra.mxu0 0.0
    %336 = vmatprep.subr.mxu0 0.0
    %337 = vmatpush1.msra.mxu0 0.0
    %338 = vmatprep.subr.mxu0 0.0
    %339 = vmatpush1.msra.mxu0 0.0
    %340 = vmatprep.subr.mxu0 0.0
    %341 = vmatpush1.msra.mxu0 0.0
    %342 = vmatprep.subr.mxu0 0.0
    %343 = vmatpush1.msra.mxu0 0.0
    %344 = vmatprep.subr.mxu0 0.0
    %345 = vmatpush1.msra.mxu0 0.0
    %346 = vmatprep.subr.mxu0 0.0
    %347 = vmatpush1.msra.mxu0 0.0
    %348 = vmatprep.subr.mxu0 0.0
    %349 = vmatpush1.msra.mxu0 0.0
    %350 = vmatprep.subr.mxu0 0.0
    %351 = vmatpush1.msra.mxu0 0.0
    %352 = vmatprep.subr.mxu0 0.0
    %353 = vmatpush1.msra.mxu0 0.0
    %354 = vmatprep.subr.mxu0 0.0
    %355 = vmatpush1.msra.mxu0 0.0
    %356 = vmatprep.subr.mxu0 0.0
    %357 = vmatpush1.msra.mxu0 0.0
    %358 = vmatprep.subr.mxu0 0.0
    %359 = vmatpush1.msra.mxu0 0.0
    %360 = vmatprep.mubr.f32.mxu0 0.0
    %361 = vmatmul.mubr.f32.gmra.mrb[0].mxu0 %v295
    %v362 = vpop.f32.mrb[0].mxu0
    %v363 = vadd.f32 0.0, %v362
    %v364 = vpop.f32.mrb[0].mxu0
    %365 = vdwg.mxu0
    %v367 = vrot.slane %v363, 7
    %v369 = vadd.f32 %v177, %v367
    %v370 = vmul.f32 %v369, %v94
    %v371 = vtanh.pop %v370
    %v372 = vmul.f32 %v371, %v94
    %v373 = vadd.f32 %v372, %v95
    %v375 = vrot.slane %v373, 1
    %377 = vrot.lane.b32.xlu0 %v375, 64
    %v378 = vpop.permute.xlu0 %377
    %v380 = vrot.slane %v378, 7
    %v382 = vmul.f32 %v373, %v380
    %v384 = vrot.slane %v286, 7
    %v386 = vmul.f32 %v373, %v384
    %v387 = vsel %vm89, %v386, 0.0
    %v388 = vsel %vm86, %v382, %v387
    %v390 = vrot.slane %v388, 1
    %392 = vrot.lane.b32.xlu0 %v390, 64
    %v393 = vpop.permute.xlu0 %392
    %v395 = vrot.slane %v393, 7
    %v397 = vadd.f32 %v388, %v395
    %v399 = vrot.slane %v397, 1
    %401 = vrot.lane.b32.xlu0 %v399, 32
    %v402 = vpop.permute.xlu0 %401
    %v404 = vrot.slane %v402, 7
    %v406 = vadd.f32 %v397, %v404
    %v407 = vtanh.pop %v406
    %v408 = vmul.f32 %v373, %v407
    %v409 = vsel %vm93, %v408, 0.0
    %v411 = vrot.slane %v409, 1
    %413 = vrot.lane.b32.xlu0 %v411, 64
    %v414 = vpop.permute.xlu0 %413
    %v416 = vrot.slane %v414, 7
    %v418 = vadd.f32 %v409, %v416
    %v420 = vrot.slane %v418, 1
    %422 = vrot.lane.b32.xlu0 %v420, 32
    %v423 = vpop.permute.xlu0 %422
    %v425 = vrot.slane %v423, 7
    %v427 = vadd.f32 %v418, %v425
    %v428 = vld [vmem:[#allocation5] sm:$0xff]
    %v429 = vld [vmem:[#allocation5 + $0x8] sm:$0xff]
    %v430 = vld [vmem:[#allocation5 + $0x10] sm:$0xff]
    %v431 = vld [vmem:[#allocation5 + $0x18] sm:$0xff]
    %v432 = vld [vmem:[#allocation5 + $0x20] sm:$0xff]
    %v433 = vld [vmem:[#allocation5 + $0x28] sm:$0xff]
    %v434 = vld [vmem:[#allocation5 + $0x30] sm:$0xff]
    %v435 = vld [vmem:[#allocation5 + $0x38] sm:$0xff]
    %v436 = vld [vmem:[#allocation5 + $0x40] sm:$0xff]
    %v437 = vld [vmem:[#allocation5 + $0x48] sm:$0xff]
    %v438 = vld [vmem:[#allocation5 + $0x50] sm:$0xff]
    %v439 = vld [vmem:[#allocation5 + $0x58] sm:$0xff]
    %v440 = vld [vmem:[#allocation5 + $0x60] sm:$0xff]
    %v441 = vld [vmem:[#allocation5 + $0x68] sm:$0xff]
    %v442 = vld [vmem:[#allocation5 + $0x70] sm:$0xff]
    %v443 = vld [vmem:[#allocation5 + $0x78] sm:$0xff]
    %v444 = vld [vmem:[#allocation7] sm:$0xff]
    %v445 = vld [vmem:[#allocation7 + $0x8] sm:$0xff]
    %v446 = vld [vmem:[#allocation7 + $0x10] sm:$0xff]
    %v447 = vld [vmem:[#allocation7 + $0x18] sm:$0xff]
    %v448 = vld [vmem:[#allocation7 + $0x20] sm:$0xff]
    %v449 = vld [vmem:[#allocation7 + $0x28] sm:$0xff]
    %v450 = vld [vmem:[#allocation7 + $0x30] sm:$0xff]
    %v451 = vld [vmem:[#allocation7 + $0x38] sm:$0xff]
    %v452 = vld [vmem:[#allocation7 + $0x40] sm:$0xff]
    %v453 = vld [vmem:[#allocation7 + $0x48] sm:$0xff]
    %v454 = vld [vmem:[#allocation7 + $0x50] sm:$0xff]
    %v455 = vld [vmem:[#allocation7 + $0x58] sm:$0xff]
    %v456 = vld [vmem:[#allocation7 + $0x60] sm:$0xff]
    %v457 = vld [vmem:[#allocation7 + $0x68] sm:$0xff]
    %v458 = vld [vmem:[#allocation7 + $0x70] sm:$0xff]
    %v459 = vld [vmem:[#allocation7 + $0x78] sm:$0xff]
    %460 = vmatprep.subr.mxu0 0.0
    %461 = vmatpush1.msra.mxu0 %v444
    %462 = vmatprep.subr.mxu0 0.0
    %463 = vmatpush1.msra.mxu0 %v445
    %464 = vmatprep.subr.mxu0 0.0
    %465 = vmatpush1.msra.mxu0 %v446
    %466 = vmatprep.subr.mxu0 0.0
    %467 = vmatpush1.msra.mxu0 %v447
    %468 = vmatprep.subr.mxu0 0.0
    %469 = vmatpush1.msra.mxu0 %v448
    %470 = vmatprep.subr.mxu0 0.0
    %471 = vmatpush1.msra.mxu0 %v449
    %472 = vmatprep.subr.mxu0 0.0
    %473 = vmatpush1.msra.mxu0 %v450
    %474 = vmatprep.subr.mxu0 0.0
    %475 = vmatpush1.msra.mxu0 %v451
    %476 = vmatprep.subr.mxu0 0.0
    %477 = vmatpush1.msra.mxu0 %v452
    %478 = vmatprep.subr.mxu0 0.0
    %479 = vmatpush1.msra.mxu0 %v453
    %480 = vmatprep.subr.mxu0 0.0
    %481 = vmatpush1.msra.mxu0 %v454
    %482 = vmatprep.subr.mxu0 0.0
    %483 = vmatpush1.msra.mxu0 %v455
    %484 = vmatprep.subr.mxu0 0.0
    %485 = vmatpush1.msra.mxu0 %v456
    %486 = vmatprep.subr.mxu0 0.0
    %487 = vmatpush1.msra.mxu0 %v457
    %488 = vmatprep.subr.mxu0 0.0
    %489 = vmatpush1.msra.mxu0 %v458
    %490 = vmatprep.subr.mxu0 0.0
    %491 = vmatpush1.msra.mxu0 %v459
    %492 = vmatprep.subr.mxu0 0.0
    %493 = vmatpush1.msra.mxu0 0.0
    %494 = vmatprep.subr.mxu0 0.0
    %495 = vmatpush1.msra.mxu0 0.0
    %496 = vmatprep.subr.mxu0 0.0
    %497 = vmatpush1.msra.mxu0 0.0
    %498 = vmatprep.subr.mxu0 0.0
    %499 = vmatpush1.msra.mxu0 0.0
    %500 = vmatprep.subr.mxu0 0.0
    %501 = vmatpush1.msra.mxu0 0.0
    %502 = vmatprep.subr.mxu0 0.0
    %503 = vmatpush1.msra.mxu0 0.0
    %504 = vmatprep.subr.mxu0 0.0
    %505 = vmatpush1.msra.mxu0 0.0
    %506 = vmatprep.subr.mxu0 0.0
    %507 = vmatpush1.msra.mxu0 0.0
    %508 = vmatprep.subr.mxu0 0.0
    %509 = vmatpush1.msra.mxu0 0.0
    %510 = vmatprep.subr.mxu0 0.0
    %511 = vmatpush1.msra.mxu0 0.0
    %512 = vmatprep.subr.mxu0 0.0
    %513 = vmatpush1.msra.mxu0 0.0
    %514 = vmatprep.subr.mxu0 0.0
    %515 = vmatpush1.msra.mxu0 0.0
    %516 = vmatprep.subr.mxu0 0.0
    %517 = vmatpush1.msra.mxu0 0.0
    %518 = vmatprep.subr.mxu0 0.0
    %519 = vmatpush1.msra.mxu0 0.0
    %520 = vmatprep.subr.mxu0 0.0
    %521 = vmatpush1.msra.mxu0 0.0
    %522 = vmatprep.subr.mxu0 0.0
    %523 = vmatpush1.msra.mxu0 0.0
    %524 = vmatprep.mubr.f32.mxu0 0.0
    %525 = vmatmul.mubr.f32.gmra.mrb[0].mxu0 %v181
    %v526 = vpop.f32.mrb[0].mxu0
    %v527 = vadd.f32 0.0, %v526
    %v528 = vpop.f32.mrb[0].mxu0
    %529 = vdwg.mxu0
    %530 = vmatprep.subr.mxu0 0.0
    %531 = vmatpush1.msra.mxu0 %v428
    %532 = vmatprep.subr.mxu0 0.0
    %533 = vmatpush1.msra.mxu0 %v429
    %534 = vmatprep.subr.mxu0 0.0
    %535 = vmatpush1.msra.mxu0 %v430
    %536 = vmatprep.subr.mxu0 0.0
    %537 = vmatpush1.msra.mxu0 %v431
    %538 = vmatprep.subr.mxu0 0.0
    %539 = vmatpush1.msra.mxu0 %v432
    %540 = vmatprep.subr.mxu0 0.0
    %541 = vmatpush1.msra.mxu0 %v433
    %542 = vmatprep.subr.mxu0 0.0
    %543 = vmatpush1.msra.mxu0 %v434
    %544 = vmatprep.subr.mxu0 0.0
    %545 = vmatpush1.msra.mxu0 %v435
    %546 = vmatprep.subr.mxu0 0.0
    %547 = vmatpush1.msra.mxu0 %v436
    %548 = vmatprep.subr.mxu0 0.0
    %549 = vmatpush1.msra.mxu0 %v437
    %550 = vmatprep.subr.mxu0 0.0
    %551 = vmatpush1.msra.mxu0 %v438
    %552 = vmatprep.subr.mxu0 0.0
    %553 = vmatpush1.msra.mxu0 %v439
    %554 = vmatprep.subr.mxu0 0.0
    %555 = vmatpush1.msra.mxu0 %v440
    %556 = vmatprep.subr.mxu0 0.0
    %557 = vmatpush1.msra.mxu0 %v441
    %558 = vmatprep.subr.mxu0 0.0
    %559 = vmatpush1.msra.mxu0 %v442
    %560 = vmatprep.subr.mxu0 0.0
    %561 = vmatpush1.msra.mxu0 %v443
    %562 = vmatprep.subr.mxu0 0.0
    %563 = vmatpush1.msra.mxu0 0.0
    %564 = vmatprep.subr.mxu0 0.0
    %565 = vmatpush1.msra.mxu0 0.0
    %566 = vmatprep.subr.mxu0 0.0
    %567 = vmatpush1.msra.mxu0 0.0
    %568 = vmatprep.subr.mxu0 0.0
    %569 = vmatpush1.msra.mxu0 0.0
    %570 = vmatprep.subr.mxu0 0.0
    %571 = vmatpush1.msra.mxu0 0.0
    %572 = vmatprep.subr.mxu0 0.0
    %573 = vmatpush1.msra.mxu0 0.0
    %574 = vmatprep.subr.mxu0 0.0
    %575 = vmatpush1.msra.mxu0 0.0
    %576 = vmatprep.subr.mxu0 0.0
    %577 = vmatpush1.msra.mxu0 0.0
    %578 = vmatprep.subr.mxu0 0.0
    %579 = vmatpush1.msra.mxu0 0.0
    %580 = vmatprep.subr.mxu0 0.0
    %581 = vmatpush1.msra.mxu0 0.0
    %582 = vmatprep.subr.mxu0 0.0
    %583 = vmatpush1.msra.mxu0 0.0
    %584 = vmatprep.subr.mxu0 0.0
    %585 = vmatpush1.msra.mxu0 0.0
    %586 = vmatprep.subr.mxu0 0.0
    %587 = vmatpush1.msra.mxu0 0.0
    %588 = vmatprep.subr.mxu0 0.0
    %589 = vmatpush1.msra.mxu0 0.0
    %590 = vmatprep.subr.mxu0 0.0
    %591 = vmatpush1.msra.mxu0 0.0
    %592 = vmatprep.subr.mxu0 0.0
    %593 = vmatpush1.msra.mxu0 0.0
    %594 = vmatprep.mubr.f32.mxu0 0.0
    %595 = vmatmul.mubr.f32.gmra.mrb[0].mxu0 %v295
    %v596 = vpop.f32.mrb[0].mxu0
    %v597 = vadd.f32 %v527, %v596
    %v598 = vpop.f32.mrb[0].mxu0
    %599 = vdwg.mxu0
    %v600 = vld [vmem:[%s6] sm:$0x1]
    %v601 = vadd.f32 %v597, %v600
    %v602 = vmul.f32 %v601, %v94
    %v603 = vtanh.pop %v602
    %v604 = vmul.f32 %v603, %v94
    %v605 = vadd.f32 %v604, %v95
    %606 = vrot.lane.b32.xlu0 %v605, 64
    %v607 = vpop.permute.xlu0 %606
    %v608 = vmul.f32 %v605, %v607
    %v609 = vmul.f32 %v605, %v183
    %v610 = vsel %vm89, %v609, 0.0
    %v611 = vsel %vm86, %v608, %v610
    %612 = vrot.lane.b32.xlu0 %v611, 64
    %v613 = vpop.permute.xlu0 %612
    %v614 = vadd.f32 %v611, %v613
    %615 = vrot.lane.b32.xlu0 %v614, 32
    %v616 = vpop.permute.xlu0 %615
    %v617 = vadd.f32 %v614, %v616
    %v618 = vtanh.pop %v617
    %v619 = vmul.f32 %v605, %v618
    %v620 = vsel %vm93, %v619, 0.0
    %621 = vrot.lane.b32.xlu0 %v620, 64
    %v622 = vpop.permute.xlu0 %621
    %v623 = vadd.f32 %v620, %v622
    %624 = vrot.lane.b32.xlu0 %v623, 32
    %v625 = vpop.permute.xlu0 %624
    %v626 = vadd.f32 %v623, %v625
    %v628 = vrot.slane %v427, 1
    %630 = vmatprep.subr.mxu0 0.0
    %631 = vmatpush1.msra.mxu0 %v184
    %632 = vmatprep.subr.mxu0 0.0
    %633 = vmatpush1.msra.mxu0 %v185
    %634 = vmatprep.subr.mxu0 0.0
    %635 = vmatpush1.msra.mxu0 %v186
    %636 = vmatprep.subr.mxu0 0.0
    %637 = vmatpush1.msra.mxu0 %v187
    %638 = vmatprep.subr.mxu0 0.0
    %639 = vmatpush1.msra.mxu0 %v188
    %640 = vmatprep.subr.mxu0 0.0
    %641 = vmatpush1.msra.mxu0 %v189
    %642 = vmatprep.subr.mxu0 0.0
    %643 = vmatpush1.msra.mxu0 %v190
    %644 = vmatprep.subr.mxu0 0.0
    %645 = vmatpush1.msra.mxu0 %v191
    %646 = vmatprep.subr.mxu0 0.0
    %647 = vmatpush1.msra.mxu0 %v192
    %648 = vmatprep.subr.mxu0 0.0
    %649 = vmatpush1.msra.mxu0 %v193
    %650 = vmatprep.subr.mxu0 0.0
    %651 = vmatpush1.msra.mxu0 %v194
    %652 = vmatprep.subr.mxu0 0.0
    %653 = vmatpush1.msra.mxu0 %v195
    %654 = vmatprep.subr.mxu0 0.0
    %655 = vmatpush1.msra.mxu0 %v196
    %656 = vmatprep.subr.mxu0 0.0
    %657 = vmatpush1.msra.mxu0 %v197
    %658 = vmatprep.subr.mxu0 0.0
    %659 = vmatpush1.msra.mxu0 %v198
    %660 = vmatprep.subr.mxu0 0.0
    %661 = vmatpush1.msra.mxu0 %v199
    %662 = vmatprep.subr.mxu0 0.0
    %663 = vmatpush1.msra.mxu0 0.0
    %664 = vmatprep.subr.mxu0 0.0
    %665 = vmatpush1.msra.mxu0 0.0
    %666 = vmatprep.subr.mxu0 0.0
    %667 = vmatpush1.msra.mxu0 0.0
    %668 = vmatprep.subr.mxu0 0.0
    %669 = vmatpush1.msra.mxu0 0.0
    %670 = vmatprep.subr.mxu0 0.0
    %671 = vmatpush1.msra.mxu0 0.0
    %672 = vmatprep.subr.mxu0 0.0
    %673 = vmatpush1.msra.mxu0 0.0
    %674 = vmatprep.subr.mxu0 0.0
    %675 = vmatpush1.msra.mxu0 0.0
    %676 = vmatprep.subr.mxu0 0.0
    %677 = vmatpush1.msra.mxu0 0.0
    %678 = vmatprep.subr.mxu0 0.0
    %679 = vmatpush1.msra.mxu0 0.0
    %680 = vmatprep.subr.mxu0 0.0
    %681 = vmatpush1.msra.mxu0 0.0
    %682 = vmatprep.subr.mxu0 0.0
    %683 = vmatpush1.msra.mxu0 0.0
    %684 = vmatprep.subr.mxu0 0.0
    %685 = vmatpush1.msra.mxu0 0.0
    %686 = vmatprep.subr.mxu0 0.0
    %687 = vmatpush1.msra.mxu0 0.0
    %688 = vmatprep.subr.mxu0 0.0
    %689 = vmatpush1.msra.mxu0 0.0
    %690 = vmatprep.subr.mxu0 0.0
    %691 = vmatpush1.msra.mxu0 0.0
    %692 = vmatprep.subr.mxu0 0.0
    %693 = vmatpush1.msra.mxu0 0.0
    %694 = vmatprep.mubr.f32.mxu0 0.0
    %695 = vmatmul.mubr.f32.gmra.mrb[0].mxu0 %v628
    %v696 = vpop.f32.mrb[0].mxu0
    %v697 = vadd.f32 0.0, %v696
    %v698 = vpop.f32.mrb[0].mxu0
    %699 = vdwg.mxu0
    %v701 = vrot.slane %v697, 6
    %v703 = vadd.f32 %v177, %v701
    %v704 = vmul.f32 %v703, %v94
    %v705 = vtanh.pop %v704
    %v706 = vmul.f32 %v705, %v94
    %v707 = vadd.f32 %v706, %v95
    %v709 = vrot.slane %v707, 2
    %711 = vrot.lane.b32.xlu0 %v709, 64
    %v712 = vpop.permute.xlu0 %711
    %v714 = vrot.slane %v712, 6
    %v716 = vmul.f32 %v707, %v714
    %v718 = vrot.slane %v406, 7
    %v720 = vmul.f32 %v707, %v718
    %v721 = vsel %vm89, %v720, 0.0
    %v722 = vsel %vm86, %v716, %v721
    %v724 = vrot.slane %v722, 2
    %726 = vrot.lane.b32.xlu0 %v724, 64
    %v727 = vpop.permute.xlu0 %726
    %v729 = vrot.slane %v727, 6
    %v731 = vadd.f32 %v722, %v729
    %v733 = vrot.slane %v731, 2
    %735 = vrot.lane.b32.xlu0 %v733, 32
    %v736 = vpop.permute.xlu0 %735
    %v738 = vrot.slane %v736, 6
    %v740 = vadd.f32 %v731, %v738
    %v741 = vtanh.pop %v740
    %v742 = vmul.f32 %v707, %v741
    %v743 = vsel %vm93, %v742, 0.0
    %v745 = vrot.slane %v743, 2
    %747 = vrot.lane.b32.xlu0 %v745, 64
    %v748 = vpop.permute.xlu0 %747
    %v750 = vrot.slane %v748, 6
    %v752 = vadd.f32 %v743, %v750
    %v754 = vrot.slane %v752, 2
    %756 = vrot.lane.b32.xlu0 %v754, 32
    %v757 = vpop.permute.xlu0 %756
    %v759 = vrot.slane %v757, 6
    %v761 = vadd.f32 %v752, %v759
    %762 = vmatprep.subr.mxu0 0.0
    %763 = vmatpush1.msra.mxu0 %v444
    %764 = vmatprep.subr.mxu0 0.0
    %765 = vmatpush1.msra.mxu0 %v445
    %766 = vmatprep.subr.mxu0 0.0
    %767 = vmatpush1.msra.mxu0 %v446
    %768 = vmatprep.subr.mxu0 0.0
    %769 = vmatpush1.msra.mxu0 %v447
    %770 = vmatprep.subr.mxu0 0.0
    %771 = vmatpush1.msra.mxu0 %v448
    %772 = vmatprep.subr.mxu0 0.0
    %773 = vmatpush1.msra.mxu0 %v449
    %774 = vmatprep.subr.mxu0 0.0
    %775 = vmatpush1.msra.mxu0 %v450
    %776 = vmatprep.subr.mxu0 0.0
    %777 = vmatpush1.msra.mxu0 %v451
    %778 = vmatprep.subr.mxu0 0.0
    %779 = vmatpush1.msra.mxu0 %v452
    %780 = vmatprep.subr.mxu0 0.0
    %781 = vmatpush1.msra.mxu0 %v453
    %782 = vmatprep.subr.mxu0 0.0
    %783 = vmatpush1.msra.mxu0 %v454
    %784 = vmatprep.subr.mxu0 0.0
    %785 = vmatpush1.msra.mxu0 %v455
    %786 = vmatprep.subr.mxu0 0.0
    %787 = vmatpush1.msra.mxu0 %v456
    %788 = vmatprep.subr.mxu0 0.0
    %789 = vmatpush1.msra.mxu0 %v457
    %790 = vmatprep.subr.mxu0 0.0
    %791 = vmatpush1.msra.mxu0 %v458
    %792 = vmatprep.subr.mxu0 0.0
    %793 = vmatpush1.msra.mxu0 %v459
    %794 = vmatprep.subr.mxu0 0.0
    %795 = vmatpush1.msra.mxu0 0.0
    %796 = vmatprep.subr.mxu0 0.0
    %797 = vmatpush1.msra.mxu0 0.0
    %798 = vmatprep.subr.mxu0 0.0
    %799 = vmatpush1.msra.mxu0 0.0
    %800 = vmatprep.subr.mxu0 0.0
    %801 = vmatpush1.msra.mxu0 0.0
    %802 = vmatprep.subr.mxu0 0.0
    %803 = vmatpush1.msra.mxu0 0.0
    %804 = vmatprep.subr.mxu0 0.0
    %805 = vmatpush1.msra.mxu0 0.0
    %806 = vmatprep.subr.mxu0 0.0
    %807 = vmatpush1.msra.mxu0 0.0
    %808 = vmatprep.subr.mxu0 0.0
    %809 = vmatpush1.msra.mxu0 0.0
    %810 = vmatprep.subr.mxu0 0.0
    %811 = vmatpush1.msra.mxu0 0.0
    %812 = vmatprep.subr.mxu0 0.0
    %813 = vmatpush1.msra.mxu0 0.0
    %814 = vmatprep.subr.mxu0 0.0
    %815 = vmatpush1.msra.mxu0 0.0
    %816 = vmatprep.subr.mxu0 0.0
    %817 = vmatpush1.msra.mxu0 0.0
    %818 = vmatprep.subr.mxu0 0.0
    %819 = vmatpush1.msra.mxu0 0.0
    %820 = vmatprep.subr.mxu0 0.0
    %821 = vmatpush1.msra.mxu0 0.0
    %822 = vmatprep.subr.mxu0 0.0
    %823 = vmatpush1.msra.mxu0 0.0
    %824 = vmatprep.subr.mxu0 0.0
    %825 = vmatpush1.msra.mxu0 0.0
    %826 = vmatprep.mubr.f32.mxu0 0.0
    %827 = vmatmul.mubr.f32.gmra.mrb[0].mxu0 %v626
    %v828 = vpop.f32.mrb[0].mxu0
    %v829 = vadd.f32 0.0, %v828
    %v830 = vpop.f32.mrb[0].mxu0
    %831 = vdwg.mxu0
    %832 = vmatprep.subr.mxu0 0.0
    %833 = vmatpush1.msra.mxu0 %v428
    %834 = vmatprep.subr.mxu0 0.0
    %835 = vmatpush1.msra.mxu0 %v429
    %836 = vmatprep.subr.mxu0 0.0
    %837 = vmatpush1.msra.mxu0 %v430
    %838 = vmatprep.subr.mxu0 0.0
    %839 = vmatpush1.msra.mxu0 %v431
    %840 = vmatprep.subr.mxu0 0.0
    %841 = vmatpush1.msra.mxu0 %v432
    %842 = vmatprep.subr.mxu0 0.0
    %843 = vmatpush1.msra.mxu0 %v433
    %844 = vmatprep.subr.mxu0 0.0
    %845 = vmatpush1.msra.mxu0 %v434
    %846 = vmatprep.subr.mxu0 0.0
    %847 = vmatpush1.msra.mxu0 %v435
    %848 = vmatprep.subr.mxu0 0.0
    %849 = vmatpush1.msra.mxu0 %v436
    %850 = vmatprep.subr.mxu0 0.0
    %851 = vmatpush1.msra.mxu0 %v437
    %852 = vmatprep.subr.mxu0 0.0
    %853 = vmatpush1.msra.mxu0 %v438
    %854 = vmatprep.subr.mxu0 0.0
    %855 = vmatpush1.msra.mxu0 %v439
    %856 = vmatprep.subr.mxu0 0.0
    %857 = vmatpush1.msra.mxu0 %v440
    %858 = vmatprep.subr.mxu0 0.0
    %859 = vmatpush1.msra.mxu0 %v441
    %860 = vmatprep.subr.mxu0 0.0
    %861 = vmatpush1.msra.mxu0 %v442
    %862 = vmatprep.subr.mxu0 0.0
    %863 = vmatpush1.msra.mxu0 %v443
    %864 = vmatprep.subr.mxu0 0.0
    %865 = vmatpush1.msra.mxu0 0.0
    %866 = vmatprep.subr.mxu0 0.0
    %867 = vmatpush1.msra.mxu0 0.0
    %868 = vmatprep.subr.mxu0 0.0
    %869 = vmatpush1.msra.mxu0 0.0
    %870 = vmatprep.subr.mxu0 0.0
    %871 = vmatpush1.msra.mxu0 0.0
    %872 = vmatprep.subr.mxu0 0.0
    %873 = vmatpush1.msra.mxu0 0.0
    %874 = vmatprep.subr.mxu0 0.0
    %875 = vmatpush1.msra.mxu0 0.0
    %876 = vmatprep.subr.mxu0 0.0
    %877 = vmatpush1.msra.mxu0 0.0
    %878 = vmatprep.subr.mxu0 0.0
    %879 = vmatpush1.msra.mxu0 0.0
    %880 = vmatprep.subr.mxu0 0.0
    %881 = vmatpush1.msra.mxu0 0.0
    %882 = vmatprep.subr.mxu0 0.0
    %883 = vmatpush1.msra.mxu0 0.0
    %884 = vmatprep.subr.mxu0 0.0
    %885 = vmatpush1.msra.mxu0 0.0
    %886 = vmatprep.subr.mxu0 0.0
    %887 = vmatpush1.msra.mxu0 0.0
    %888 = vmatprep.subr.mxu0 0.0
    %889 = vmatpush1.msra.mxu0 0.0
    %890 = vmatprep.subr.mxu0 0.0
    %891 = vmatpush1.msra.mxu0 0.0
    %892 = vmatprep.subr.mxu0 0.0
    %893 = vmatpush1.msra.mxu0 0.0
    %894 = vmatprep.subr.mxu0 0.0
    %895 = vmatpush1.msra.mxu0 0.0
    %896 = vmatprep.mubr.f32.mxu0 0.0
    %897 = vmatmul.mubr.f32.gmra.mrb[0].mxu0 %v628
    %v898 = vpop.f32.mrb[0].mxu0
    %v899 = vadd.f32 %v829, %v898
    %v900 = vpop.f32.mrb[0].mxu0
    %901 = vdwg.mxu0
    %v902 = vadd.f32 %v899, %v600
    %v903 = vmul.f32 %v902, %v94
    %v904 = vtanh.pop %v903
    %v905 = vmul.f32 %v904, %v94
    %v906 = vadd.f32 %v905, %v95
    %907 = vrot.lane.b32.xlu0 %v906, 64
    %v908 = vpop.permute.xlu0 %907
    %v909 = vmul.f32 %v906, %v908
    %v910 = vmul.f32 %v906, %v617
    %v911 = vsel %vm89, %v910, 0.0
    %v912 = vsel %vm86, %v909, %v911
    %913 = vrot.lane.b32.xlu0 %v912, 64
    %v914 = vpop.permute.xlu0 %913
    %v915 = vadd.f32 %v912, %v914
    %916 = vrot.lane.b32.xlu0 %v915, 32
    %v917 = vpop.permute.xlu0 %916
    %v918 = vadd.f32 %v915, %v917
    %v919 = vtanh.pop %v918
    %v920 = vmul.f32 %v906, %v919
    %v921 = vsel %vm93, %v920, 0.0
    %922 = vrot.lane.b32.xlu0 %v921, 64
    %v923 = vpop.permute.xlu0 %922
    %v924 = vadd.f32 %v921, %v923
    %925 = vrot.lane.b32.xlu0 %v924, 32
    %v926 = vpop.permute.xlu0 %925
    %v927 = vadd.f32 %v924, %v926
    %v929 = vrot.slane %v761, 2
    %931 = vmatprep.subr.mxu0 0.0
    %932 = vmatpush1.msra.mxu0 %v184
    %933 = vmatprep.subr.mxu0 0.0
    %934 = vmatpush1.msra.mxu0 %v185
    %935 = vmatprep.subr.mxu0 0.0
    %936 = vmatpush1.msra.mxu0 %v186
    %937 = vmatprep.subr.mxu0 0.0
    %938 = vmatpush1.msra.mxu0 %v187
    %939 = vmatprep.subr.mxu0 0.0
    %940 = vmatpush1.msra.mxu0 %v188
    %941 = vmatprep.subr.mxu0 0.0
    %942 = vmatpush1.msra.mxu0 %v189
    %943 = vmatprep.subr.mxu0 0.0
    %944 = vmatpush1.msra.mxu0 %v190
    %945 = vmatprep.subr.mxu0 0.0
    %946 = vmatpush1.msra.mxu0 %v191
    %947 = vmatprep.subr.mxu0 0.0
    %948 = vmatpush1.msra.mxu0 %v192
    %949 = vmatprep.subr.mxu0 0.0
    %950 = vmatpush1.msra.mxu0 %v193
    %951 = vmatprep.subr.mxu0 0.0
    %952 = vmatpush1.msra.mxu0 %v194
    %953 = vmatprep.subr.mxu0 0.0
    %954 = vmatpush1.msra.mxu0 %v195
    %955 = vmatprep.subr.mxu0 0.0
    %956 = vmatpush1.msra.mxu0 %v196
    %957 = vmatprep.subr.mxu0 0.0
    %958 = vmatpush1.msra.mxu0 %v197
    %959 = vmatprep.subr.mxu0 0.0
    %960 = vmatpush1.msra.mxu0 %v198
    %961 = vmatprep.subr.mxu0 0.0
    %962 = vmatpush1.msra.mxu0 %v199
    %963 = vmatprep.subr.mxu0 0.0
    %964 = vmatpush1.msra.mxu0 0.0
    %965 = vmatprep.subr.mxu0 0.0
    %966 = vmatpush1.msra.mxu0 0.0
    %967 = vmatprep.subr.mxu0 0.0
    %968 = vmatpush1.msra.mxu0 0.0
    %969 = vmatprep.subr.mxu0 0.0
    %970 = vmatpush1.msra.mxu0 0.0
    %971 = vmatprep.subr.mxu0 0.0
    %972 = vmatpush1.msra.mxu0 0.0
    %973 = vmatprep.subr.mxu0 0.0
    %974 = vmatpush1.msra.mxu0 0.0
    %975 = vmatprep.subr.mxu0 0.0
    %976 = vmatpush1.msra.mxu0 0.0
    %977 = vmatprep.subr.mxu0 0.0
    %978 = vmatpush1.msra.mxu0 0.0
    %979 = vmatprep.subr.mxu0 0.0
    %980 = vmatpush1.msra.mxu0 0.0
    %981 = vmatprep.subr.mxu0 0.0
    %982 = vmatpush1.msra.mxu0 0.0
    %983 = vmatprep.subr.mxu0 0.0
    %984 = vmatpush1.msra.mxu0 0.0
    %985 = vmatprep.subr.mxu0 0.0
    %986 = vmatpush1.msra.mxu0 0.0
    %987 = vmatprep.subr.mxu0 0.0
    %988 = vmatpush1.msra.mxu0 0.0
    %989 = vmatprep.subr.mxu0 0.0
    %990 = vmatpush1.msra.mxu0 0.0
    %991 = vmatprep.subr.mxu0 0.0
    %992 = vmatpush1.msra.mxu0 0.0
    %993 = vmatprep.subr.mxu0 0.0
    %994 = vmatpush1.msra.mxu0 0.0
    %995 = vmatprep.mubr.f32.mxu0 0.0
    %996 = vmatmul.mubr.f32.gmra.mrb[0].mxu0 %v929
    %v997 = vpop.f32.mrb[0].mxu0
    %v998 = vadd.f32 0.0, %v997
    %v999 = vpop.f32.mrb[0].mxu0
    %1000 = vdwg.mxu0
    %v1002 = vrot.slane %v998, 5
    %v1004 = vadd.f32 %v177, %v1002
    %v1005 = vmul.f32 %v1004, %v94
    %v1006 = vtanh.pop %v1005
    %v1007 = vmul.f32 %v1006, %v94
    %v1008 = vadd.f32 %v1007, %v95
    %v1010 = vrot.slane %v1008, 3
    %1012 = vrot.lane.b32.xlu0 %v1010, 64
    %v1013 = vpop.permute.xlu0 %1012
    %v1015 = vrot.slane %v1013, 5
    %v1017 = vmul.f32 %v1008, %v1015
    %v1019 = vrot.slane %v740, 7
    %v1021 = vmul.f32 %v1008, %v1019
    %v1022 = vsel %vm89, %v1021, 0.0
    %v1023 = vsel %vm86, %v1017, %v1022
    %v1025 = vrot.slane %v1023, 3
    %1027 = vrot.lane.b32.xlu0 %v1025, 64
    %v1028 = vpop.permute.xlu0 %1027
    %v1030 = vrot.slane %v1028, 5
    %v1032 = vadd.f32 %v1023, %v1030
    %v1034 = vrot.slane %v1032, 3
    %1036 = vrot.lane.b32.xlu0 %v1034, 32
    %v1037 = vpop.permute.xlu0 %1036
    %v1039 = vrot.slane %v1037, 5
    %v1041 = vadd.f32 %v1032, %v1039
    %v1042 = vtanh.pop %v1041
    %v1043 = vmul.f32 %v1008, %v1042
    %v1044 = vsel %vm93, %v1043, 0.0
    %v1046 = vrot.slane %v1044, 3
    %1048 = vrot.lane.b32.xlu0 %v1046, 64
    %v1049 = vpop.permute.xlu0 %1048
    %v1051 = vrot.slane %v1049, 5
    %v1053 = vadd.f32 %v1044, %v1051
    %v1055 = vrot.slane %v1053, 3
    %1057 = vrot.lane.b32.xlu0 %v1055, 32
    %v1058 = vpop.permute.xlu0 %1057
    %v1060 = vrot.slane %v1058, 5
    %v1062 = vadd.f32 %v1053, %v1060
    %1063 = vmatprep.subr.mxu0 0.0
    %1064 = vmatpush1.msra.mxu0 %v444
    %1065 = vmatprep.subr.mxu0 0.0
    %1066 = vmatpush1.msra.mxu0 %v445
    %1067 = vmatprep.subr.mxu0 0.0
    %1068 = vmatpush1.msra.mxu0 %v446
    %1069 = vmatprep.subr.mxu0 0.0
    %1070 = vmatpush1.msra.mxu0 %v447
    %1071 = vmatprep.subr.mxu0 0.0
    %1072 = vmatpush1.msra.mxu0 %v448
    %1073 = vmatprep.subr.mxu0 0.0
    %1074 = vmatpush1.msra.mxu0 %v449
    %1075 = vmatprep.subr.mxu0 0.0
    %1076 = vmatpush1.msra.mxu0 %v450
    %1077 = vmatprep.subr.mxu0 0.0
    %1078 = vmatpush1.msra.mxu0 %v451
    %1079 = vmatprep.subr.mxu0 0.0
    %1080 = vmatpush1.msra.mxu0 %v452
    %1081 = vmatprep.subr.mxu0 0.0
    %1082 = vmatpush1.msra.mxu0 %v453
    %1083 = vmatprep.subr.mxu0 0.0
    %1084 = vmatpush1.msra.mxu0 %v454
    %1085 = vmatprep.subr.mxu0 0.0
    %1086 = vmatpush1.msra.mxu0 %v455
    %1087 = vmatprep.subr.mxu0 0.0
    %1088 = vmatpush1.msra.mxu0 %v456
    %1089 = vmatprep.subr.mxu0 0.0
    %1090 = vmatpush1.msra.mxu0 %v457
    %1091 = vmatprep.subr.mxu0 0.0
    %1092 = vmatpush1.msra.mxu0 %v458
    %1093 = vmatprep.subr.mxu0 0.0
    %1094 = vmatpush1.msra.mxu0 %v459
    %1095 = vmatprep.subr.mxu0 0.0
    %1096 = vmatpush1.msra.mxu0 0.0
    %1097 = vmatprep.subr.mxu0 0.0
    %1098 = vmatpush1.msra.mxu0 0.0
    %1099 = vmatprep.subr.mxu0 0.0
    %1100 = vmatpush1.msra.mxu0 0.0
    %1101 = vmatprep.subr.mxu0 0.0
    %1102 = vmatpush1.msra.mxu0 0.0
    %1103 = vmatprep.subr.mxu0 0.0
    %1104 = vmatpush1.msra.mxu0 0.0
    %1105 = vmatprep.subr.mxu0 0.0
    %1106 = vmatpush1.msra.mxu0 0.0
    %1107 = vmatprep.subr.mxu0 0.0
    %1108 = vmatpush1.msra.mxu0 0.0
    %1109 = vmatprep.subr.mxu0 0.0
    %1110 = vmatpush1.msra.mxu0 0.0
    %1111 = vmatprep.subr.mxu0 0.0
    %1112 = vmatpush1.msra.mxu0 0.0
    %1113 = vmatprep.subr.mxu0 0.0
    %1114 = vmatpush1.msra.mxu0 0.0
    %1115 = vmatprep.subr.mxu0 0.0
    %1116 = vmatpush1.msra.mxu0 0.0
    %1117 = vmatprep.subr.mxu0 0.0
    %1118 = vmatpush1.msra.mxu0 0.0
    %1119 = vmatprep.subr.mxu0 0.0
    %1120 = vmatpush1.msra.mxu0 0.0
    %1121 = vmatprep.subr.mxu0 0.0
    %1122 = vmatpush1.msra.mxu0 0.0
    %1123 = vmatprep.subr.mxu0 0.0
    %1124 = vmatpush1.msra.mxu0 0.0
    %1125 = vmatprep.subr.mxu0 0.0
    %1126 = vmatpush1.msra.mxu0 0.0
    %1127 = vmatprep.mubr.f32.mxu0 0.0
    %1128 = vmatmul.mubr.f32.gmra.mrb[0].mxu0 %v927
    %v1129 = vpop.f32.mrb[0].mxu0
    %v1130 = vadd.f32 0.0, %v1129
    %v1131 = vpop.f32.mrb[0].mxu0
    %1132 = vdwg.mxu0
    %1133 = vmatprep.subr.mxu0 0.0
    %1134 = vmatpush1.msra.mxu0 %v428
    %1135 = vmatprep.subr.mxu0 0.0
    %1136 = vmatpush1.msra.mxu0 %v429
    %1137 = vmatprep.subr.mxu0 0.0
    %1138 = vmatpush1.msra.mxu0 %v430
    %1139 = vmatprep.subr.mxu0 0.0
    %1140 = vmatpush1.msra.mxu0 %v431
    %1141 = vmatprep.subr.mxu0 0.0
    %1142 = vmatpush1.msra.mxu0 %v432
    %1143 = vmatprep.subr.mxu0 0.0
    %1144 = vmatpush1.msra.mxu0 %v433
    %1145 = vmatprep.subr.mxu0 0.0
    %1146 = vmatpush1.msra.mxu0 %v434
    %1147 = vmatprep.subr.mxu0 0.0
    %1148 = vmatpush1.msra.mxu0 %v435
    %1149 = vmatprep.subr.mxu0 0.0
    %1150 = vmatpush1.msra.mxu0 %v436
    %1151 = vmatprep.subr.mxu0 0.0
    %1152 = vmatpush1.msra.mxu0 %v437
    %1153 = vmatprep.subr.mxu0 0.0
    %1154 = vmatpush1.msra.mxu0 %v438
    %1155 = vmatprep.subr.mxu0 0.0
    %1156 = vmatpush1.msra.mxu0 %v439
    %1157 = vmatprep.subr.mxu0 0.0
    %1158 = vmatpush1.msra.mxu0 %v440
    %1159 = vmatprep.subr.mxu0 0.0
    %1160 = vmatpush1.msra.mxu0 %v441
    %1161 = vmatprep.subr.mxu0 0.0
    %1162 = vmatpush1.msra.mxu0 %v442
    %1163 = vmatprep.subr.mxu0 0.0
    %1164 = vmatpush1.msra.mxu0 %v443
    %1165 = vmatprep.subr.mxu0 0.0
    %1166 = vmatpush1.msra.mxu0 0.0
    %1167 = vmatprep.subr.mxu0 0.0
    %1168 = vmatpush1.msra.mxu0 0.0
    %1169 = vmatprep.subr.mxu0 0.0
    %1170 = vmatpush1.msra.mxu0 0.0
    %1171 = vmatprep.subr.mxu0 0.0
    %1172 = vmatpush1.msra.mxu0 0.0
    %1173 = vmatprep.subr.mxu0 0.0
    %1174 = vmatpush1.msra.mxu0 0.0
    %1175 = vmatprep.subr.mxu0 0.0
    %1176 = vmatpush1.msra.mxu0 0.0
    %1177 = vmatprep.subr.mxu0 0.0
    %1178 = vmatpush1.msra.mxu0 0.0
    %1179 = vmatprep.subr.mxu0 0.0
    %1180 = vmatpush1.msra.mxu0 0.0
    %1181 = vmatprep.subr.mxu0 0.0
    %1182 = vmatpush1.msra.mxu0 0.0
    %1183 = vmatprep.subr.mxu0 0.0
    %1184 = vmatpush1.msra.mxu0 0.0
    %1185 = vmatprep.subr.mxu0 0.0
    %1186 = vmatpush1.msra.mxu0 0.0
    %1187 = vmatprep.subr.mxu0 0.0
    %1188 = vmatpush1.msra.mxu0 0.0
    %1189 = vmatprep.subr.mxu0 0.0
    %1190 = vmatpush1.msra.mxu0 0.0
    %1191 = vmatprep.subr.mxu0 0.0
    %1192 = vmatpush1.msra.mxu0 0.0
    %1193 = vmatprep.subr.mxu0 0.0
    %1194 = vmatpush1.msra.mxu0 0.0
    %1195 = vmatprep.subr.mxu0 0.0
    %1196 = vmatpush1.msra.mxu0 0.0
    %1197 = vmatprep.mubr.f32.mxu0 0.0
    %1198 = vmatmul.mubr.f32.gmra.mrb[0].mxu0 %v929
    %v1199 = vpop.f32.mrb[0].mxu0
    %v1200 = vadd.f32 %v1130, %v1199
    %v1201 = vpop.f32.mrb[0].mxu0
    %1202 = vdwg.mxu0
    %v1203 = vadd.f32 %v1200, %v600
    %v1204 = vmul.f32 %v1203, %v94
    %v1205 = vtanh.pop %v1204
    %v1206 = vmul.f32 %v1205, %v94
    %v1207 = vadd.f32 %v1206, %v95
    %1208 = vrot.lane.b32.xlu0 %v1207, 64
    %v1209 = vpop.permute.xlu0 %1208
    %v1210 = vmul.f32 %v1207, %v1209
    %v1211 = vmul.f32 %v1207, %v918
    %v1212 = vsel %vm89, %v1211, 0.0
    %v1213 = vsel %vm86, %v1210, %v1212
    %1214 = vrot.lane.b32.xlu0 %v1213, 64
    %v1215 = vpop.permute.xlu0 %1214
    %v1216 = vadd.f32 %v1213, %v1215
    %1217 = vrot.lane.b32.xlu0 %v1216, 32
    %v1218 = vpop.permute.xlu0 %1217
    %v1219 = vadd.f32 %v1216, %v1218
    %v1220 = vtanh.pop %v1219
    %v1221 = vmul.f32 %v1207, %v1220
    %v1222 = vsel %vm93, %v1221, 0.0
    %1223 = vrot.lane.b32.xlu0 %v1222, 64
    %v1224 = vpop.permute.xlu0 %1223
    %v1225 = vadd.f32 %v1222, %v1224
    %1226 = vrot.lane.b32.xlu0 %v1225, 32
    %v1227 = vpop.permute.xlu0 %1226
    %v1228 = vadd.f32 %v1225, %v1227
    %v1230 = vrot.slane %v1062, 3
    %1232 = vmatprep.subr.mxu0 0.0
    %1233 = vmatpush1.msra.mxu0 %v184
    %1234 = vmatprep.subr.mxu0 0.0
    %1235 = vmatpush1.msra.mxu0 %v185
    %1236 = vmatprep.subr.mxu0 0.0
    %1237 = vmatpush1.msra.mxu0 %v186
    %1238 = vmatprep.subr.mxu0 0.0
    %1239 = vmatpush1.msra.mxu0 %v187
    %1240 = vmatprep.subr.mxu0 0.0
    %1241 = vmatpush1.msra.mxu0 %v188
    %1242 = vmatprep.subr.mxu0 0.0
    %1243 = vmatpush1.msra.mxu0 %v189
    %1244 = vmatprep.subr.mxu0 0.0
    %1245 = vmatpush1.msra.mxu0 %v190
    %1246 = vmatprep.subr.mxu0 0.0
    %1247 = vmatpush1.msra.mxu0 %v191
    %1248 = vmatprep.subr.mxu0 0.0
    %1249 = vmatpush1.msra.mxu0 %v192
    %1250 = vmatprep.subr.mxu0 0.0
    %1251 = vmatpush1.msra.mxu0 %v193
    %1252 = vmatprep.subr.mxu0 0.0
    %1253 = vmatpush1.msra.mxu0 %v194
    %1254 = vmatprep.subr.mxu0 0.0
    %1255 = vmatpush1.msra.mxu0 %v195
    %1256 = vmatprep.subr.mxu0 0.0
    %1257 = vmatpush1.msra.mxu0 %v196
    %1258 = vmatprep.subr.mxu0 0.0
    %1259 = vmatpush1.msra.mxu0 %v197
    %1260 = vmatprep.subr.mxu0 0.0
    %1261 = vmatpush1.msra.mxu0 %v198
    %1262 = vmatprep.subr.mxu0 0.0
    %1263 = vmatpush1.msra.mxu0 %v199
    %1264 = vmatprep.subr.mxu0 0.0
    %1265 = vmatpush1.msra.mxu0 0.0
    %1266 = vmatprep.subr.mxu0 0.0
    %1267 = vmatpush1.msra.mxu0 0.0
    %1268 = vmatprep.subr.mxu0 0.0
    %1269 = vmatpush1.msra.mxu0 0.0
    %1270 = vmatprep.subr.mxu0 0.0
    %1271 = vmatpush1.msra.mxu0 0.0
    %1272 = vmatprep.subr.mxu0 0.0
    %1273 = vmatpush1.msra.mxu0 0.0
    %1274 = vmatprep.subr.mxu0 0.0
    %1275 = vmatpush1.msra.mxu0 0.0
    %1276 = vmatprep.subr.mxu0 0.0
    %1277 = vmatpush1.msra.mxu0 0.0
    %1278 = vmatprep.subr.mxu0 0.0
    %1279 = vmatpush1.msra.mxu0 0.0
    %1280 = vmatprep.subr.mxu0 0.0
    %1281 = vmatpush1.msra.mxu0 0.0
    %1282 = vmatprep.subr.mxu0 0.0
    %1283 = vmatpush1.msra.mxu0 0.0
    %1284 = vmatprep.subr.mxu0 0.0
    %1285 = vmatpush1.msra.mxu0 0.0
    %1286 = vmatprep.subr.mxu0 0.0
    %1287 = vmatpush1.msra.mxu0 0.0
    %1288 = vmatprep.subr.mxu0 0.0
    %1289 = vmatpush1.msra.mxu0 0.0
    %1290 = vmatprep.subr.mxu0 0.0
    %1291 = vmatpush1.msra.mxu0 0.0
    %1292 = vmatprep.subr.mxu0 0.0
    %1293 = vmatpush1.msra.mxu0 0.0
    %1294 = vmatprep.subr.mxu0 0.0
    %1295 = vmatpush1.msra.mxu0 0.0
    %1296 = vmatprep.mubr.f32.mxu0 0.0
    %1297 = vmatmul.mubr.f32.gmra.mrb[0].mxu0 %v1230
    %v1298 = vpop.f32.mrb[0].mxu0
    %v1299 = vadd.f32 0.0, %v1298
    %v1300 = vpop.f32.mrb[0].mxu0
    %1301 = vdwg.mxu0
    %v1303 = vrot.slane %v1299, 4
    %v1305 = vadd.f32 %v177, %v1303
    %v1306 = vmul.f32 %v1305, %v94
    %v1307 = vtanh.pop %v1306
    %v1308 = vmul.f32 %v1307, %v94
    %v1309 = vadd.f32 %v1308, %v95
    %v1311 = vrot.slane %v1309, 4
    %1313 = vrot.lane.b32.xlu0 %v1311, 64
    %v1314 = vpop.permute.xlu0 %1313
    %v1316 = vrot.slane %v1314, 4
    %v1318 = vmul.f32 %v1309, %v1316
    %v1320 = vrot.slane %v1041, 7
    %v1322 = vmul.f32 %v1309, %v1320
    %v1323 = vsel %vm89, %v1322, 0.0
    %v1324 = vsel %vm86, %v1318, %v1323
    %v1326 = vrot.slane %v1324, 4
    %1328 = vrot.lane.b32.xlu0 %v1326, 64
    %v1329 = vpop.permute.xlu0 %1328
    %v1331 = vrot.slane %v1329, 4
    %v1333 = vadd.f32 %v1324, %v1331
    %v1335 = vrot.slane %v1333, 4
    %1337 = vrot.lane.b32.xlu0 %v1335, 32
    %v1338 = vpop.permute.xlu0 %1337
    %v1340 = vrot.slane %v1338, 4
    %v1342 = vadd.f32 %v1333, %v1340
    %v1343 = vtanh.pop %v1342
    %v1344 = vmul.f32 %v1309, %v1343
    %v1345 = vsel %vm93, %v1344, 0.0
    %v1347 = vrot.slane %v1345, 4
    %1349 = vrot.lane.b32.xlu0 %v1347, 64
    %v1350 = vpop.permute.xlu0 %1349
    %v1352 = vrot.slane %v1350, 4
    %v1354 = vadd.f32 %v1345, %v1352
    %v1356 = vrot.slane %v1354, 4
    %1358 = vrot.lane.b32.xlu0 %v1356, 32
    %v1359 = vpop.permute.xlu0 %1358
    %v1361 = vrot.slane %v1359, 4
    %v1363 = vadd.f32 %v1354, %v1361
    %1364 = vmatprep.subr.mxu0 0.0
    %1365 = vmatpush1.msra.mxu0 %v444
    %1366 = vmatprep.subr.mxu0 0.0
    %1367 = vmatpush1.msra.mxu0 %v445
    %1368 = vmatprep.subr.mxu0 0.0
    %1369 = vmatpush1.msra.mxu0 %v446
    %1370 = vmatprep.subr.mxu0 0.0
    %1371 = vmatpush1.msra.mxu0 %v447
    %1372 = vmatprep.subr.mxu0 0.0
    %1373 = vmatpush1.msra.mxu0 %v448
    %1374 = vmatprep.subr.mxu0 0.0
    %1375 = vmatpush1.msra.mxu0 %v449
    %1376 = vmatprep.subr.mxu0 0.0
    %1377 = vmatpush1.msra.mxu0 %v450
    %1378 = vmatprep.subr.mxu0 0.0
    %1379 = vmatpush1.msra.mxu0 %v451
    %1380 = vmatprep.subr.mxu0 0.0
    %1381 = vmatpush1.msra.mxu0 %v452
    %1382 = vmatprep.subr.mxu0 0.0
    %1383 = vmatpush1.msra.mxu0 %v453
    %1384 = vmatprep.subr.mxu0 0.0
    %1385 = vmatpush1.msra.mxu0 %v454
    %1386 = vmatprep.subr.mxu0 0.0
    %1387 = vmatpush1.msra.mxu0 %v455
    %1388 = vmatprep.subr.mxu0 0.0
    %1389 = vmatpush1.msra.mxu0 %v456
    %1390 = vmatprep.subr.mxu0 0.0
    %1391 = vmatpush1.msra.mxu0 %v457
    %1392 = vmatprep.subr.mxu0 0.0
    %1393 = vmatpush1.msra.mxu0 %v458
    %1394 = vmatprep.subr.mxu0 0.0
    %1395 = vmatpush1.msra.mxu0 %v459
    %1396 = vmatprep.subr.mxu0 0.0
    %1397 = vmatpush1.msra.mxu0 0.0
    %1398 = vmatprep.subr.mxu0 0.0
    %1399 = vmatpush1.msra.mxu0 0.0
    %1400 = vmatprep.subr.mxu0 0.0
    %1401 = vmatpush1.msra.mxu0 0.0
    %1402 = vmatprep.subr.mxu0 0.0
    %1403 = vmatpush1.msra.mxu0 0.0
    %1404 = vmatprep.subr.mxu0 0.0
    %1405 = vmatpush1.msra.mxu0 0.0
    %1406 = vmatprep.subr.mxu0 0.0
    %1407 = vmatpush1.msra.mxu0 0.0
    %1408 = vmatprep.subr.mxu0 0.0
    %1409 = vmatpush1.msra.mxu0 0.0
    %1410 = vmatprep.subr.mxu0 0.0
    %1411 = vmatpush1.msra.mxu0 0.0
    %1412 = vmatprep.subr.mxu0 0.0
    %1413 = vmatpush1.msra.mxu0 0.0
    %1414 = vmatprep.subr.mxu0 0.0
    %1415 = vmatpush1.msra.mxu0 0.0
    %1416 = vmatprep.subr.mxu0 0.0
    %1417 = vmatpush1.msra.mxu0 0.0
    %1418 = vmatprep.subr.mxu0 0.0
    %1419 = vmatpush1.msra.mxu0 0.0
    %1420 = vmatprep.subr.mxu0 0.0
    %1421 = vmatpush1.msra.mxu0 0.0
    %1422 = vmatprep.subr.mxu0 0.0
    %1423 = vmatpush1.msra.mxu0 0.0
    %1424 = vmatprep.subr.mxu0 0.0
    %1425 = vmatpush1.msra.mxu0 0.0
    %1426 = vmatprep.subr.mxu0 0.0
    %1427 = vmatpush1.msra.mxu0 0.0
    %1428 = vmatprep.mubr.f32.mxu0 0.0
    %1429 = vmatmul.mubr.f32.gmra.mrb[0].mxu0 %v1228
    %v1430 = vpop.f32.mrb[0].mxu0
    %v1431 = vadd.f32 0.0, %v1430
    %v1432 = vpop.f32.mrb[0].mxu0
    %1433 = vdwg.mxu0
    %1434 = vmatprep.subr.mxu0 0.0
    %1435 = vmatpush1.msra.mxu0 %v428
    %1436 = vmatprep.subr.mxu0 0.0
    %1437 = vmatpush1.msra.mxu0 %v429
    %1438 = vmatprep.subr.mxu0 0.0
    %1439 = vmatpush1.msra.mxu0 %v430
    %1440 = vmatprep.subr.mxu0 0.0
    %1441 = vmatpush1.msra.mxu0 %v431
    %1442 = vmatprep.subr.mxu0 0.0
    %1443 = vmatpush1.msra.mxu0 %v432
    %1444 = vmatprep.subr.mxu0 0.0
    %1445 = vmatpush1.msra.mxu0 %v433
    %1446 = vmatprep.subr.mxu0 0.0
    %1447 = vmatpush1.msra.mxu0 %v434
    %1448 = vmatprep.subr.mxu0 0.0
    %1449 = vmatpush1.msra.mxu0 %v435
    %1450 = vmatprep.subr.mxu0 0.0
    %1451 = vmatpush1.msra.mxu0 %v436
    %1452 = vmatprep.subr.mxu0 0.0
    %1453 = vmatpush1.msra.mxu0 %v437
    %1454 = vmatprep.subr.mxu0 0.0
    %1455 = vmatpush1.msra.mxu0 %v438
    %1456 = vmatprep.subr.mxu0 0.0
    %1457 = vmatpush1.msra.mxu0 %v439
    %1458 = vmatprep.subr.mxu0 0.0
    %1459 = vmatpush1.msra.mxu0 %v440
    %1460 = vmatprep.subr.mxu0 0.0
    %1461 = vmatpush1.msra.mxu0 %v441
    %1462 = vmatprep.subr.mxu0 0.0
    %1463 = vmatpush1.msra.mxu0 %v442
    %1464 = vmatprep.subr.mxu0 0.0
    %1465 = vmatpush1.msra.mxu0 %v443
    %1466 = vmatprep.subr.mxu0 0.0
    %1467 = vmatpush1.msra.mxu0 0.0
    %1468 = vmatprep.subr.mxu0 0.0
    %1469 = vmatpush1.msra.mxu0 0.0
    %1470 = vmatprep.subr.mxu0 0.0
    %1471 = vmatpush1.msra.mxu0 0.0
    %1472 = vmatprep.subr.mxu0 0.0
    %1473 = vmatpush1.msra.mxu0 0.0
    %1474 = vmatprep.subr.mxu0 0.0
    %1475 = vmatpush1.msra.mxu0 0.0
    %1476 = vmatprep.subr.mxu0 0.0
    %1477 = vmatpush1.msra.mxu0 0.0
    %1478 = vmatprep.subr.mxu0 0.0
    %1479 = vmatpush1.msra.mxu0 0.0
    %1480 = vmatprep.subr.mxu0 0.0
    %1481 = vmatpush1.msra.mxu0 0.0
    %1482 = vmatprep.subr.mxu0 0.0
    %1483 = vmatpush1.msra.mxu0 0.0
    %1484 = vmatprep.subr.mxu0 0.0
    %1485 = vmatpush1.msra.mxu0 0.0
    %1486 = vmatprep.subr.mxu0 0.0
    %1487 = vmatpush1.msra.mxu0 0.0
    %1488 = vmatprep.subr.mxu0 0.0
    %1489 = vmatpush1.msra.mxu0 0.0
    %1490 = vmatprep.subr.mxu0 0.0
    %1491 = vmatpush1.msra.mxu0 0.0
    %1492 = vmatprep.subr.mxu0 0.0
    %1493 = vmatpush1.msra.mxu0 0.0
    %1494 = vmatprep.subr.mxu0 0.0
    %1495 = vmatpush1.msra.mxu0 0.0
    %1496 = vmatprep.subr.mxu0 0.0
    %1497 = vmatpush1.msra.mxu0 0.0
    %1498 = vmatprep.mubr.f32.mxu0 0.0
    %1499 = vmatmul.mubr.f32.gmra.mrb[0].mxu0 %v1230
    %v1500 = vpop.f32.mrb[0].mxu0
    %v1501 = vadd.f32 %v1431, %v1500
    %v1502 = vpop.f32.mrb[0].mxu0
    %1503 = vdwg.mxu0
    %v1504 = vadd.f32 %v1501, %v600
    %v1505 = vmul.f32 %v1504, %v94
    %v1506 = vtanh.pop %v1505
    %v1507 = vmul.f32 %v1506, %v94
    %v1508 = vadd.f32 %v1507, %v95
    %1509 = vrot.lane.b32.xlu0 %v1508, 64
    %v1510 = vpop.permute.xlu0 %1509
    %v1511 = vmul.f32 %v1508, %v1510
    %v1512 = vmul.f32 %v1508, %v1219
    %v1513 = vsel %vm89, %v1512, 0.0
    %v1514 = vsel %vm86, %v1511, %v1513
    %1515 = vrot.lane.b32.xlu0 %v1514, 64
    %v1516 = vpop.permute.xlu0 %1515
    %v1517 = vadd.f32 %v1514, %v1516
    %1518 = vrot.lane.b32.xlu0 %v1517, 32
    %v1519 = vpop.permute.xlu0 %1518
    %v1520 = vadd.f32 %v1517, %v1519
    %v1521 = vtanh.pop %v1520
    %v1522 = vmul.f32 %v1508, %v1521
    %v1523 = vsel %vm93, %v1522, 0.0
    %1524 = vrot.lane.b32.xlu0 %v1523, 64
    %v1525 = vpop.permute.xlu0 %1524
    %v1526 = vadd.f32 %v1523, %v1525
    %1527 = vrot.lane.b32.xlu0 %v1526, 32
    %v1528 = vpop.permute.xlu0 %1527
    %v1529 = vadd.f32 %v1526, %v1528
    %v1531 = vrot.slane %v1363, 4
    %1533 = vmatprep.subr.mxu0 0.0
    %1534 = vmatpush1.msra.mxu0 %v184
    %1535 = vmatprep.subr.mxu0 0.0
    %1536 = vmatpush1.msra.mxu0 %v185
    %1537 = vmatprep.subr.mxu0 0.0
    %1538 = vmatpush1.msra.mxu0 %v186
    %1539 = vmatprep.subr.mxu0 0.0
    %1540 = vmatpush1.msra.mxu0 %v187
    %1541 = vmatprep.subr.mxu0 0.0
    %1542 = vmatpush1.msra.mxu0 %v188
    %1543 = vmatprep.subr.mxu0 0.0
    %1544 = vmatpush1.msra.mxu0 %v189
    %1545 = vmatprep.subr.mxu0 0.0
    %1546 = vmatpush1.msra.mxu0 %v190
    %1547 = vmatprep.subr.mxu0 0.0
    %1548 = vmatpush1.msra.mxu0 %v191
    %1549 = vmatprep.subr.mxu0 0.0
    %1550 = vmatpush1.msra.mxu0 %v192
    %1551 = vmatprep.subr.mxu0 0.0
    %1552 = vmatpush1.msra.mxu0 %v193
    %1553 = vmatprep.subr.mxu0 0.0
    %1554 = vmatpush1.msra.mxu0 %v194
    %1555 = vmatprep.subr.mxu0 0.0
    %1556 = vmatpush1.msra.mxu0 %v195
    %1557 = vmatprep.subr.mxu0 0.0
    %1558 = vmatpush1.msra.mxu0 %v196
    %1559 = vmatprep.subr.mxu0 0.0
    %1560 = vmatpush1.msra.mxu0 %v197
    %1561 = vmatprep.subr.mxu0 0.0
    %1562 = vmatpush1.msra.mxu0 %v198
    %1563 = vmatprep.subr.mxu0 0.0
    %1564 = vmatpush1.msra.mxu0 %v199
    %1565 = vmatprep.subr.mxu0 0.0
    %1566 = vmatpush1.msra.mxu0 0.0
    %1567 = vmatprep.subr.mxu0 0.0
    %1568 = vmatpush1.msra.mxu0 0.0
    %1569 = vmatprep.subr.mxu0 0.0
    %1570 = vmatpush1.msra.mxu0 0.0
    %1571 = vmatprep.subr.mxu0 0.0
    %1572 = vmatpush1.msra.mxu0 0.0
    %1573 = vmatprep.subr.mxu0 0.0
    %1574 = vmatpush1.msra.mxu0 0.0
    %1575 = vmatprep.subr.mxu0 0.0
    %1576 = vmatpush1.msra.mxu0 0.0
    %1577 = vmatprep.subr.mxu0 0.0
    %1578 = vmatpush1.msra.mxu0 0.0
    %1579 = vmatprep.subr.mxu0 0.0
    %1580 = vmatpush1.msra.mxu0 0.0
    %1581 = vmatprep.subr.mxu0 0.0
    %1582 = vmatpush1.msra.mxu0 0.0
    %1583 = vmatprep.subr.mxu0 0.0
    %1584 = vmatpush1.msra.mxu0 0.0
    %1585 = vmatprep.subr.mxu0 0.0
    %1586 = vmatpush1.msra.mxu0 0.0
    %1587 = vmatprep.subr.mxu0 0.0
    %1588 = vmatpush1.msra.mxu0 0.0
    %1589 = vmatprep.subr.mxu0 0.0
    %1590 = vmatpush1.msra.mxu0 0.0
    %1591 = vmatprep.subr.mxu0 0.0
    %1592 = vmatpush1.msra.mxu0 0.0
    %1593 = vmatprep.subr.mxu0 0.0
    %1594 = vmatpush1.msra.mxu0 0.0
    %1595 = vmatprep.subr.mxu0 0.0
    %1596 = vmatpush1.msra.mxu0 0.0
    %1597 = vmatprep.mubr.f32.mxu0 0.0
    %1598 = vmatmul.mubr.f32.gmra.mrb[0].mxu0 %v1531
    %v1599 = vpop.f32.mrb[0].mxu0
    %v1600 = vadd.f32 0.0, %v1599
    %v1601 = vpop.f32.mrb[0].mxu0
    %1602 = vdwg.mxu0
    %v1604 = vrot.slane %v1600, 3
    %v1606 = vadd.f32 %v177, %v1604
    %v1607 = vmul.f32 %v1606, %v94
    %v1608 = vtanh.pop %v1607
    %v1609 = vmul.f32 %v1608, %v94
    %v1610 = vadd.f32 %v1609, %v95
    %v1612 = vrot.slane %v1610, 5
    %1614 = vrot.lane.b32.xlu0 %v1612, 64
    %v1615 = vpop.permute.xlu0 %1614
    %v1617 = vrot.slane %v1615, 3
    %v1619 = vmul.f32 %v1610, %v1617
    %v1621 = vrot.slane %v1342, 7
    %v1623 = vmul.f32 %v1610, %v1621
    %v1624 = vsel %vm89, %v1623, 0.0
    %v1625 = vsel %vm86, %v1619, %v1624
    %v1627 = vrot.slane %v1625, 5
    %1629 = vrot.lane.b32.xlu0 %v1627, 64
    %v1630 = vpop.permute.xlu0 %1629
    %v1632 = vrot.slane %v1630, 3
    %v1634 = vadd.f32 %v1625, %v1632
    %v1636 = vrot.slane %v1634, 5
    %1638 = vrot.lane.b32.xlu0 %v1636, 32
    %v1639 = vpop.permute.xlu0 %1638
    %v1641 = vrot.slane %v1639, 3
    %v1643 = vadd.f32 %v1634, %v1641
    %v1644 = vtanh.pop %v1643
    %v1645 = vmul.f32 %v1610, %v1644
    %v1646 = vsel %vm93, %v1645, 0.0
    %v1648 = vrot.slane %v1646, 5
    %1650 = vrot.lane.b32.xlu0 %v1648, 64
    %v1651 = vpop.permute.xlu0 %1650
    %v1653 = vrot.slane %v1651, 3
    %v1655 = vadd.f32 %v1646, %v1653
    %v1657 = vrot.slane %v1655, 5
    %1659 = vrot.lane.b32.xlu0 %v1657, 32
    %v1660 = vpop.permute.xlu0 %1659
    %v1662 = vrot.slane %v1660, 3
    %v1664 = vadd.f32 %v1655, %v1662
    %1665 = vmatprep.subr.mxu0 0.0
    %1666 = vmatpush1.msra.mxu0 %v444
    %1667 = vmatprep.subr.mxu0 0.0
    %1668 = vmatpush1.msra.mxu0 %v445
    %1669 = vmatprep.subr.mxu0 0.0
    %1670 = vmatpush1.msra.mxu0 %v446
    %1671 = vmatprep.subr.mxu0 0.0
    %1672 = vmatpush1.msra.mxu0 %v447
    %1673 = vmatprep.subr.mxu0 0.0
    %1674 = vmatpush1.msra.mxu0 %v448
    %1675 = vmatprep.subr.mxu0 0.0
    %1676 = vmatpush1.msra.mxu0 %v449
    %1677 = vmatprep.subr.mxu0 0.0
    %1678 = vmatpush1.msra.mxu0 %v450
    %1679 = vmatprep.subr.mxu0 0.0
    %1680 = vmatpush1.msra.mxu0 %v451
    %1681 = vmatprep.subr.mxu0 0.0
    %1682 = vmatpush1.msra.mxu0 %v452
    %1683 = vmatprep.subr.mxu0 0.0
    %1684 = vmatpush1.msra.mxu0 %v453
    %1685 = vmatprep.subr.mxu0 0.0
    %1686 = vmatpush1.msra.mxu0 %v454
    %1687 = vmatprep.subr.mxu0 0.0
    %1688 = vmatpush1.msra.mxu0 %v455
    %1689 = vmatprep.subr.mxu0 0.0
    %1690 = vmatpush1.msra.mxu0 %v456
    %1691 = vmatprep.subr.mxu0 0.0
    %1692 = vmatpush1.msra.mxu0 %v457
    %1693 = vmatprep.subr.mxu0 0.0
    %1694 = vmatpush1.msra.mxu0 %v458
    %1695 = vmatprep.subr.mxu0 0.0
    %1696 = vmatpush1.msra.mxu0 %v459
    %1697 = vmatprep.subr.mxu0 0.0
    %1698 = vmatpush1.msra.mxu0 0.0
    %1699 = vmatprep.subr.mxu0 0.0
    %1700 = vmatpush1.msra.mxu0 0.0
    %1701 = vmatprep.subr.mxu0 0.0
    %1702 = vmatpush1.msra.mxu0 0.0
    %1703 = vmatprep.subr.mxu0 0.0
    %1704 = vmatpush1.msra.mxu0 0.0
    %1705 = vmatprep.subr.mxu0 0.0
    %1706 = vmatpush1.msra.mxu0 0.0
    %1707 = vmatprep.subr.mxu0 0.0
    %1708 = vmatpush1.msra.mxu0 0.0
    %1709 = vmatprep.subr.mxu0 0.0
    %1710 = vmatpush1.msra.mxu0 0.0
    %1711 = vmatprep.subr.mxu0 0.0
    %1712 = vmatpush1.msra.mxu0 0.0
    %1713 = vmatprep.subr.mxu0 0.0
    %1714 = vmatpush1.msra.mxu0 0.0
    %1715 = vmatprep.subr.mxu0 0.0
    %1716 = vmatpush1.msra.mxu0 0.0
    %1717 = vmatprep.subr.mxu0 0.0
    %1718 = vmatpush1.msra.mxu0 0.0
    %1719 = vmatprep.subr.mxu0 0.0
    %1720 = vmatpush1.msra.mxu0 0.0
    %1721 = vmatprep.subr.mxu0 0.0
    %1722 = vmatpush1.msra.mxu0 0.0
    %1723 = vmatprep.subr.mxu0 0.0
    %1724 = vmatpush1.msra.mxu0 0.0
    %1725 = vmatprep.subr.mxu0 0.0
    %1726 = vmatpush1.msra.mxu0 0.0
    %1727 = vmatprep.subr.mxu0 0.0
    %1728 = vmatpush1.msra.mxu0 0.0
    %1729 = vmatprep.mubr.f32.mxu0 0.0
    %1730 = vmatmul.mubr.f32.gmra.mrb[0].mxu0 %v1529
    %v1731 = vpop.f32.mrb[0].mxu0
    %v1732 = vadd.f32 0.0, %v1731
    %v1733 = vpop.f32.mrb[0].mxu0
    %1734 = vdwg.mxu0
    %1735 = vmatprep.subr.mxu0 0.0
    %1736 = vmatpush1.msra.mxu0 %v428
    %1737 = vmatprep.subr.mxu0 0.0
    %1738 = vmatpush1.msra.mxu0 %v429
    %1739 = vmatprep.subr.mxu0 0.0
    %1740 = vmatpush1.msra.mxu0 %v430
    %1741 = vmatprep.subr.mxu0 0.0
    %1742 = vmatpush1.msra.mxu0 %v431
    %1743 = vmatprep.subr.mxu0 0.0
    %1744 = vmatpush1.msra.mxu0 %v432
    %1745 = vmatprep.subr.mxu0 0.0
    %1746 = vmatpush1.msra.mxu0 %v433
    %1747 = vmatprep.subr.mxu0 0.0
    %1748 = vmatpush1.msra.mxu0 %v434
    %1749 = vmatprep.subr.mxu0 0.0
    %1750 = vmatpush1.msra.mxu0 %v435
    %1751 = vmatprep.subr.mxu0 0.0
    %1752 = vmatpush1.msra.mxu0 %v436
    %1753 = vmatprep.subr.mxu0 0.0
    %1754 = vmatpush1.msra.mxu0 %v437
    %1755 = vmatprep.subr.mxu0 0.0
    %1756 = vmatpush1.msra.mxu0 %v438
    %1757 = vmatprep.subr.mxu0 0.0
    %1758 = vmatpush1.msra.mxu0 %v439
    %1759 = vmatprep.subr.mxu0 0.0
    %1760 = vmatpush1.msra.mxu0 %v440
    %1761 = vmatprep.subr.mxu0 0.0
    %1762 = vmatpush1.msra.mxu0 %v441
    %1763 = vmatprep.subr.mxu0 0.0
    %1764 = vmatpush1.msra.mxu0 %v442
    %1765 = vmatprep.subr.mxu0 0.0
    %1766 = vmatpush1.msra.mxu0 %v443
    %1767 = vmatprep.subr.mxu0 0.0
    %1768 = vmatpush1.msra.mxu0 0.0
    %1769 = vmatprep.subr.mxu0 0.0
    %1770 = vmatpush1.msra.mxu0 0.0
    %1771 = vmatprep.subr.mxu0 0.0
    %1772 = vmatpush1.msra.mxu0 0.0
    %1773 = vmatprep.subr.mxu0 0.0
    %1774 = vmatpush1.msra.mxu0 0.0
    %1775 = vmatprep.subr.mxu0 0.0
    %1776 = vmatpush1.msra.mxu0 0.0
    %1777 = vmatprep.subr.mxu0 0.0
    %1778 = vmatpush1.msra.mxu0 0.0
    %1779 = vmatprep.subr.mxu0 0.0
    %1780 = vmatpush1.msra.mxu0 0.0
    %1781 = vmatprep.subr.mxu0 0.0
    %1782 = vmatpush1.msra.mxu0 0.0
    %1783 = vmatprep.subr.mxu0 0.0
    %1784 = vmatpush1.msra.mxu0 0.0
    %1785 = vmatprep.subr.mxu0 0.0
    %1786 = vmatpush1.msra.mxu0 0.0
    %1787 = vmatprep.subr.mxu0 0.0
    %1788 = vmatpush1.msra.mxu0 0.0
    %1789 = vmatprep.subr.mxu0 0.0
    %1790 = vmatpush1.msra.mxu0 0.0
    %1791 = vmatprep.subr.mxu0 0.0
    %1792 = vmatpush1.msra.mxu0 0.0
    %1793 = vmatprep.subr.mxu0 0.0
    %1794 = vmatpush1.msra.mxu0 0.0
    %1795 = vmatprep.subr.mxu0 0.0
    %1796 = vmatpush1.msra.mxu0 0.0
    %1797 = vmatprep.subr.mxu0 0.0
    %1798 = vmatpush1.msra.mxu0 0.0
    %1799 = vmatprep.mubr.f32.mxu0 0.0
    %1800 = vmatmul.mubr.f32.gmra.mrb[0].mxu0 %v1531
    %v1801 = vpop.f32.mrb[0].mxu0
    %v1802 = vadd.f32 %v1732, %v1801
    %v1803 = vpop.f32.mrb[0].mxu0
    %1804 = vdwg.mxu0
    %v1805 = vadd.f32 %v1802, %v600
    %v1806 = vmul.f32 %v1805, %v94
    %v1807 = vtanh.pop %v1806
    %v1808 = vmul.f32 %v1807, %v94
    %v1809 = vadd.f32 %v1808, %v95
    %1810 = vrot.lane.b32.xlu0 %v1809, 64
    %v1811 = vpop.permute.xlu0 %1810
    %v1812 = vmul.f32 %v1809, %v1811
    %v1813 = vmul.f32 %v1809, %v1520
    %v1814 = vsel %vm89, %v1813, 0.0
    %v1815 = vsel %vm86, %v1812, %v1814
    %1816 = vrot.lane.b32.xlu0 %v1815, 64
    %v1817 = vpop.permute.xlu0 %1816
    %v1818 = vadd.f32 %v1815, %v1817
    %1819 = vrot.lane.b32.xlu0 %v1818, 32
    %v1820 = vpop.permute.xlu0 %1819
    %v1821 = vadd.f32 %v1818, %v1820
    %v1822 = vtanh.pop %v1821
    %v1823 = vmul.f32 %v1809, %v1822
    %v1824 = vsel %vm93, %v1823, 0.0
    %1825 = vrot.lane.b32.xlu0 %v1824, 64
    %v1826 = vpop.permute.xlu0 %1825
    %v1827 = vadd.f32 %v1824, %v1826
    %1828 = vrot.lane.b32.xlu0 %v1827, 32
    %v1829 = vpop.permute.xlu0 %1828
    %v1830 = vadd.f32 %v1827, %v1829
    %v1832 = vrot.slane %v1664, 5
    %1834 = vmatprep.subr.mxu0 0.0
    %1835 = vmatpush1.msra.mxu0 %v184
    %1836 = vmatprep.subr.mxu0 0.0
    %1837 = vmatpush1.msra.mxu0 %v185
    %1838 = vmatprep.subr.mxu0 0.0
    %1839 = vmatpush1.msra.mxu0 %v186
    %1840 = vmatprep.subr.mxu0 0.0
    %1841 = vmatpush1.msra.mxu0 %v187
    %1842 = vmatprep.subr.mxu0 0.0
    %1843 = vmatpush1.msra.mxu0 %v188
    %1844 = vmatprep.subr.mxu0 0.0
    %1845 = vmatpush1.msra.mxu0 %v189
    %1846 = vmatprep.subr.mxu0 0.0
    %1847 = vmatpush1.msra.mxu0 %v190
    %1848 = vmatprep.subr.mxu0 0.0
    %1849 = vmatpush1.msra.mxu0 %v191
    %1850 = vmatprep.subr.mxu0 0.0
    %1851 = vmatpush1.msra.mxu0 %v192
    %1852 = vmatprep.subr.mxu0 0.0
    %1853 = vmatpush1.msra.mxu0 %v193
    %1854 = vmatprep.subr.mxu0 0.0
    %1855 = vmatpush1.msra.mxu0 %v194
    %1856 = vmatprep.subr.mxu0 0.0
    %1857 = vmatpush1.msra.mxu0 %v195
    %1858 = vmatprep.subr.mxu0 0.0
    %1859 = vmatpush1.msra.mxu0 %v196
    %1860 = vmatprep.subr.mxu0 0.0
    %1861 = vmatpush1.msra.mxu0 %v197
    %1862 = vmatprep.subr.mxu0 0.0
    %1863 = vmatpush1.msra.mxu0 %v198
    %1864 = vmatprep.subr.mxu0 0.0
    %1865 = vmatpush1.msra.mxu0 %v199
    %1866 = vmatprep.subr.mxu0 0.0
    %1867 = vmatpush1.msra.mxu0 0.0
    %1868 = vmatprep.subr.mxu0 0.0
    %1869 = vmatpush1.msra.mxu0 0.0
    %1870 = vmatprep.subr.mxu0 0.0
    %1871 = vmatpush1.msra.mxu0 0.0
    %1872 = vmatprep.subr.mxu0 0.0
    %1873 = vmatpush1.msra.mxu0 0.0
    %1874 = vmatprep.subr.mxu0 0.0
    %1875 = vmatpush1.msra.mxu0 0.0
    %1876 = vmatprep.subr.mxu0 0.0
    %1877 = vmatpush1.msra.mxu0 0.0
    %1878 = vmatprep.subr.mxu0 0.0
    %1879 = vmatpush1.msra.mxu0 0.0
    %1880 = vmatprep.subr.mxu0 0.0
    %1881 = vmatpush1.msra.mxu0 0.0
    %1882 = vmatprep.subr.mxu0 0.0
    %1883 = vmatpush1.msra.mxu0 0.0
    %1884 = vmatprep.subr.mxu0 0.0
    %1885 = vmatpush1.msra.mxu0 0.0
    %1886 = vmatprep.subr.mxu0 0.0
    %1887 = vmatpush1.msra.mxu0 0.0
    %1888 = vmatprep.subr.mxu0 0.0
    %1889 = vmatpush1.msra.mxu0 0.0
    %1890 = vmatprep.subr.mxu0 0.0
    %1891 = vmatpush1.msra.mxu0 0.0
    %1892 = vmatprep.subr.mxu0 0.0
    %1893 = vmatpush1.msra.mxu0 0.0
    %1894 = vmatprep.subr.mxu0 0.0
    %1895 = vmatpush1.msra.mxu0 0.0
    %1896 = vmatprep.subr.mxu0 0.0
    %1897 = vmatpush1.msra.mxu0 0.0
    %1898 = vmatprep.mubr.f32.mxu0 0.0
    %1899 = vmatmul.mubr.f32.gmra.mrb[0].mxu0 %v1832
    %v1900 = vpop.f32.mrb[0].mxu0
    %v1901 = vadd.f32 0.0, %v1900
    %v1902 = vpop.f32.mrb[0].mxu0
    %1903 = vdwg.mxu0
    %v1905 = vrot.slane %v1901, 2
    %v1907 = vadd.f32 %v177, %v1905
    %v1908 = vmul.f32 %v1907, %v94
    %v1909 = vtanh.pop %v1908
    %v1910 = vmul.f32 %v1909, %v94
    %v1911 = vadd.f32 %v1910, %v95
    %v1913 = vrot.slane %v1911, 6
    %1915 = vrot.lane.b32.xlu0 %v1913, 64
    %v1916 = vpop.permute.xlu0 %1915
    %v1918 = vrot.slane %v1916, 2
    %v1920 = vmul.f32 %v1911, %v1918
    %v1922 = vrot.slane %v1643, 7
    %v1924 = vmul.f32 %v1911, %v1922
    %v1925 = vsel %vm89, %v1924, 0.0
    %v1926 = vsel %vm86, %v1920, %v1925
    %v1928 = vrot.slane %v1926, 6
    %1930 = vrot.lane.b32.xlu0 %v1928, 64
    %v1931 = vpop.permute.xlu0 %1930
    %v1933 = vrot.slane %v1931, 2
    %v1935 = vadd.f32 %v1926, %v1933
    %v1937 = vrot.slane %v1935, 6
    %1939 = vrot.lane.b32.xlu0 %v1937, 32
    %v1940 = vpop.permute.xlu0 %1939
    %v1942 = vrot.slane %v1940, 2
    %v1944 = vadd.f32 %v1935, %v1942
    %v1945 = vtanh.pop %v1944
    %v1946 = vmul.f32 %v1911, %v1945
    %v1947 = vsel %vm93, %v1946, 0.0
    %v1949 = vrot.slane %v1947, 6
    %1951 = vrot.lane.b32.xlu0 %v1949, 64
    %v1952 = vpop.permute.xlu0 %1951
    %v1954 = vrot.slane %v1952, 2
    %v1956 = vadd.f32 %v1947, %v1954
    %v1958 = vrot.slane %v1956, 6
    %1960 = vrot.lane.b32.xlu0 %v1958, 32
    %v1961 = vpop.permute.xlu0 %1960
    %v1963 = vrot.slane %v1961, 2
    %v1965 = vadd.f32 %v1956, %v1963
    %1966 = vmatprep.subr.mxu0 0.0
    %1967 = vmatpush1.msra.mxu0 %v444
    %1968 = vmatprep.subr.mxu0 0.0
    %1969 = vmatpush1.msra.mxu0 %v445
    %1970 = vmatprep.subr.mxu0 0.0
    %1971 = vmatpush1.msra.mxu0 %v446
    %1972 = vmatprep.subr.mxu0 0.0
    %1973 = vmatpush1.msra.mxu0 %v447
    %1974 = vmatprep.subr.mxu0 0.0
    %1975 = vmatpush1.msra.mxu0 %v448
    %1976 = vmatprep.subr.mxu0 0.0
    %1977 = vmatpush1.msra.mxu0 %v449
    %1978 = vmatprep.subr.mxu0 0.0
    %1979 = vmatpush1.msra.mxu0 %v450
    %1980 = vmatprep.subr.mxu0 0.0
    %1981 = vmatpush1.msra.mxu0 %v451
    %1982 = vmatprep.subr.mxu0 0.0
    %1983 = vmatpush1.msra.mxu0 %v452
    %1984 = vmatprep.subr.mxu0 0.0
    %1985 = vmatpush1.msra.mxu0 %v453
    %1986 = vmatprep.subr.mxu0 0.0
    %1987 = vmatpush1.msra.mxu0 %v454
    %1988 = vmatprep.subr.mxu0 0.0
    %1989 = vmatpush1.msra.mxu0 %v455
    %1990 = vmatprep.subr.mxu0 0.0
    %1991 = vmatpush1.msra.mxu0 %v456
    %1992 = vmatprep.subr.mxu0 0.0
    %1993 = vmatpush1.msra.mxu0 %v457
    %1994 = vmatprep.subr.mxu0 0.0
    %1995 = vmatpush1.msra.mxu0 %v458
    %1996 = vmatprep.subr.mxu0 0.0
    %1997 = vmatpush1.msra.mxu0 %v459
    %1998 = vmatprep.subr.mxu0 0.0
    %1999 = vmatpush1.msra.mxu0 0.0
    %2000 = vmatprep.subr.mxu0 0.0
    %2001 = vmatpush1.msra.mxu0 0.0
    %2002 = vmatprep.subr.mxu0 0.0
    %2003 = vmatpush1.msra.mxu0 0.0
    %2004 = vmatprep.subr.mxu0 0.0
    %2005 = vmatpush1.msra.mxu0 0.0
    %2006 = vmatprep.subr.mxu0 0.0
    %2007 = vmatpush1.msra.mxu0 0.0
    %2008 = vmatprep.subr.mxu0 0.0
    %2009 = vmatpush1.msra.mxu0 0.0
    %2010 = vmatprep.subr.mxu0 0.0
    %2011 = vmatpush1.msra.mxu0 0.0
    %2012 = vmatprep.subr.mxu0 0.0
    %2013 = vmatpush1.msra.mxu0 0.0
    %2014 = vmatprep.subr.mxu0 0.0
    %2015 = vmatpush1.msra.mxu0 0.0
    %2016 = vmatprep.subr.mxu0 0.0
    %2017 = vmatpush1.msra.mxu0 0.0
    %2018 = vmatprep.subr.mxu0 0.0
    %2019 = vmatpush1.msra.mxu0 0.0
    %2020 = vmatprep.subr.mxu0 0.0
    %2021 = vmatpush1.msra.mxu0 0.0
    %2022 = vmatprep.subr.mxu0 0.0
    %2023 = vmatpush1.msra.mxu0 0.0
    %2024 = vmatprep.subr.mxu0 0.0
    %2025 = vmatpush1.msra.mxu0 0.0
    %2026 = vmatprep.subr.mxu0 0.0
    %2027 = vmatpush1.msra.mxu0 0.0
    %2028 = vmatprep.subr.mxu0 0.0
    %2029 = vmatpush1.msra.mxu0 0.0
    %2030 = vmatprep.mubr.f32.mxu0 0.0
    %2031 = vmatmul.mubr.f32.gmra.mrb[0].mxu0 %v1830
    %v2032 = vpop.f32.mrb[0].mxu0
    %v2033 = vadd.f32 0.0, %v2032
    %v2034 = vpop.f32.mrb[0].mxu0
    %2035 = vdwg.mxu0
    %2036 = vmatprep.subr.mxu0 0.0
    %2037 = vmatpush1.msra.mxu0 %v428
    %2038 = vmatprep.subr.mxu0 0.0
    %2039 = vmatpush1.msra.mxu0 %v429
    %2040 = vmatprep.subr.mxu0 0.0
    %2041 = vmatpush1.msra.mxu0 %v430
    %2042 = vmatprep.subr.mxu0 0.0
    %2043 = vmatpush1.msra.mxu0 %v431
    %2044 = vmatprep.subr.mxu0 0.0
    %2045 = vmatpush1.msra.mxu0 %v432
    %2046 = vmatprep.subr.mxu0 0.0
    %2047 = vmatpush1.msra.mxu0 %v433
    %2048 = vmatprep.subr.mxu0 0.0
    %2049 = vmatpush1.msra.mxu0 %v434
    %2050 = vmatprep.subr.mxu0 0.0
    %2051 = vmatpush1.msra.mxu0 %v435
    %2052 = vmatprep.subr.mxu0 0.0
    %2053 = vmatpush1.msra.mxu0 %v436
    %2054 = vmatprep.subr.mxu0 0.0
    %2055 = vmatpush1.msra.mxu0 %v437
    %2056 = vmatprep.subr.mxu0 0.0
    %2057 = vmatpush1.msra.mxu0 %v438
    %2058 = vmatprep.subr.mxu0 0.0
    %2059 = vmatpush1.msra.mxu0 %v439
    %2060 = vmatprep.subr.mxu0 0.0
    %2061 = vmatpush1.msra.mxu0 %v440
    %2062 = vmatprep.subr.mxu0 0.0
    %2063 = vmatpush1.msra.mxu0 %v441
    %2064 = vmatprep.subr.mxu0 0.0
    %2065 = vmatpush1.msra.mxu0 %v442
    %2066 = vmatprep.subr.mxu0 0.0
    %2067 = vmatpush1.msra.mxu0 %v443
    %2068 = vmatprep.subr.mxu0 0.0
    %2069 = vmatpush1.msra.mxu0 0.0
    %2070 = vmatprep.subr.mxu0 0.0
    %2071 = vmatpush1.msra.mxu0 0.0
    %2072 = vmatprep.subr.mxu0 0.0
    %2073 = vmatpush1.msra.mxu0 0.0
    %2074 = vmatprep.subr.mxu0 0.0
    %2075 = vmatpush1.msra.mxu0 0.0
    %2076 = vmatprep.subr.mxu0 0.0
    %2077 = vmatpush1.msra.mxu0 0.0
    %2078 = vmatprep.subr.mxu0 0.0
    %2079 = vmatpush1.msra.mxu0 0.0
    %2080 = vmatprep.subr.mxu0 0.0
    %2081 = vmatpush1.msra.mxu0 0.0
    %2082 = vmatprep.subr.mxu0 0.0
    %2083 = vmatpush1.msra.mxu0 0.0
    %2084 = vmatprep.subr.mxu0 0.0
    %2085 = vmatpush1.msra.mxu0 0.0
    %2086 = vmatprep.subr.mxu0 0.0
    %2087 = vmatpush1.msra.mxu0 0.0
    %2088 = vmatprep.subr.mxu0 0.0
    %2089 = vmatpush1.msra.mxu0 0.0
    %2090 = vmatprep.subr.mxu0 0.0
    %2091 = vmatpush1.msra.mxu0 0.0
    %2092 = vmatprep.subr.mxu0 0.0
    %2093 = vmatpush1.msra.mxu0 0.0
    %2094 = vmatprep.subr.mxu0 0.0
    %2095 = vmatpush1.msra.mxu0 0.0
    %2096 = vmatprep.subr.mxu0 0.0
    %2097 = vmatpush1.msra.mxu0 0.0
    %2098 = vmatprep.subr.mxu0 0.0
    %2099 = vmatpush1.msra.mxu0 0.0
    %2100 = vmatprep.mubr.f32.mxu0 0.0
    %2101 = vmatmul.mubr.f32.gmra.mrb[0].mxu0 %v1832
    %v2102 = vpop.f32.mrb[0].mxu0
    %v2103 = vadd.f32 %v2033, %v2102
    %v2104 = vpop.f32.mrb[0].mxu0
    %2105 = vdwg.mxu0
    %v2106 = vadd.f32 %v2103, %v600
    %v2107 = vmul.f32 %v2106, %v94
    %v2108 = vtanh.pop %v2107
    %v2109 = vmul.f32 %v2108, %v94
    %v2110 = vadd.f32 %v2109, %v95
    %2111 = vrot.lane.b32.xlu0 %v2110, 64
    %v2112 = vpop.permute.xlu0 %2111
    %v2113 = vmul.f32 %v2110, %v2112
    %v2114 = vmul.f32 %v2110, %v1821
    %v2115 = vsel %vm89, %v2114, 0.0
    %v2116 = vsel %vm86, %v2113, %v2115
    %2117 = vrot.lane.b32.xlu0 %v2116, 64
    %v2118 = vpop.permute.xlu0 %2117
    %v2119 = vadd.f32 %v2116, %v2118
    %2120 = vrot.lane.b32.xlu0 %v2119, 32
    %v2121 = vpop.permute.xlu0 %2120
    %v2122 = vadd.f32 %v2119, %v2121
    %v2123 = vtanh.pop %v2122
    %v2124 = vmul.f32 %v2110, %v2123
    %v2125 = vsel %vm93, %v2124, 0.0
    %2126 = vrot.lane.b32.xlu0 %v2125, 64
    %v2127 = vpop.permute.xlu0 %2126
    %v2128 = vadd.f32 %v2125, %v2127
    %2129 = vrot.lane.b32.xlu0 %v2128, 32
    %v2130 = vpop.permute.xlu0 %2129
    %v2131 = vadd.f32 %v2128, %v2130
    %v2133 = vrot.slane %v1965, 6
    %2135 = vmatprep.subr.mxu0 0.0
    %2136 = vmatpush1.msra.mxu0 %v184
    %2137 = vmatprep.subr.mxu0 0.0
    %2138 = vmatpush1.msra.mxu0 %v185
    %2139 = vmatprep.subr.mxu0 0.0
    %2140 = vmatpush1.msra.mxu0 %v186
    %2141 = vmatprep.subr.mxu0 0.0
    %2142 = vmatpush1.msra.mxu0 %v187
    %2143 = vmatprep.subr.mxu0 0.0
    %2144 = vmatpush1.msra.mxu0 %v188
    %2145 = vmatprep.subr.mxu0 0.0
    %2146 = vmatpush1.msra.mxu0 %v189
    %2147 = vmatprep.subr.mxu0 0.0
    %2148 = vmatpush1.msra.mxu0 %v190
    %2149 = vmatprep.subr.mxu0 0.0
    %2150 = vmatpush1.msra.mxu0 %v191
    %2151 = vmatprep.subr.mxu0 0.0
    %2152 = vmatpush1.msra.mxu0 %v192
    %2153 = vmatprep.subr.mxu0 0.0
    %2154 = vmatpush1.msra.mxu0 %v193
    %2155 = vmatprep.subr.mxu0 0.0
    %2156 = vmatpush1.msra.mxu0 %v194
    %2157 = vmatprep.subr.mxu0 0.0
    %2158 = vmatpush1.msra.mxu0 %v195
    %2159 = vmatprep.subr.mxu0 0.0
    %2160 = vmatpush1.msra.mxu0 %v196
    %2161 = vmatprep.subr.mxu0 0.0
    %2162 = vmatpush1.msra.mxu0 %v197
    %2163 = vmatprep.subr.mxu0 0.0
    %2164 = vmatpush1.msra.mxu0 %v198
    %2165 = vmatprep.subr.mxu0 0.0
    %2166 = vmatpush1.msra.mxu0 %v199
    %2167 = vmatprep.subr.mxu0 0.0
    %2168 = vmatpush1.msra.mxu0 0.0
    %2169 = vmatprep.subr.mxu0 0.0
    %2170 = vmatpush1.msra.mxu0 0.0
    %2171 = vmatprep.subr.mxu0 0.0
    %2172 = vmatpush1.msra.mxu0 0.0
    %2173 = vmatprep.subr.mxu0 0.0
    %2174 = vmatpush1.msra.mxu0 0.0
    %2175 = vmatprep.subr.mxu0 0.0
    %2176 = vmatpush1.msra.mxu0 0.0
    %2177 = vmatprep.subr.mxu0 0.0
    %2178 = vmatpush1.msra.mxu0 0.0
    %2179 = vmatprep.subr.mxu0 0.0
    %2180 = vmatpush1.msra.mxu0 0.0
    %2181 = vmatprep.subr.mxu0 0.0
    %2182 = vmatpush1.msra.mxu0 0.0
    %2183 = vmatprep.subr.mxu0 0.0
    %2184 = vmatpush1.msra.mxu0 0.0
    %2185 = vmatprep.subr.mxu0 0.0
    %2186 = vmatpush1.msra.mxu0 0.0
    %2187 = vmatprep.subr.mxu0 0.0
    %2188 = vmatpush1.msra.mxu0 0.0
    %2189 = vmatprep.subr.mxu0 0.0
    %2190 = vmatpush1.msra.mxu0 0.0
    %2191 = vmatprep.subr.mxu0 0.0
    %2192 = vmatpush1.msra.mxu0 0.0
    %2193 = vmatprep.subr.mxu0 0.0
    %2194 = vmatpush1.msra.mxu0 0.0
    %2195 = vmatprep.subr.mxu0 0.0
    %2196 = vmatpush1.msra.mxu0 0.0
    %2197 = vmatprep.subr.mxu0 0.0
    %2198 = vmatpush1.msra.mxu0 0.0
    %2199 = vmatprep.mubr.f32.mxu0 0.0
    %2200 = vmatmul.mubr.f32.gmra.mrb[0].mxu0 %v2133
    %v2201 = vpop.f32.mrb[0].mxu0
    %v2202 = vadd.f32 0.0, %v2201
    %v2203 = vpop.f32.mrb[0].mxu0
    %2204 = vdwg.mxu0
    %v2206 = vrot.slane %v2202, 1
    %v2208 = vadd.f32 %v177, %v2206
    %v2209 = vmul.f32 %v2208, %v94
    %v2210 = vtanh.pop %v2209
    %v2211 = vmul.f32 %v2210, %v94
    %v2212 = vadd.f32 %v2211, %v95
    %v2214 = vrot.slane %v2212, 7
    %2216 = vrot.lane.b32.xlu0 %v2214, 64
    %v2217 = vpop.permute.xlu0 %2216
    %v2219 = vrot.slane %v2217, 1
    %v2221 = vmul.f32 %v2212, %v2219
    %v2223 = vrot.slane %v1944, 7
    %v2225 = vmul.f32 %v2212, %v2223
    %v2226 = vsel %vm89, %v2225, 0.0
    %v2227 = vsel %vm86, %v2221, %v2226
    %v2229 = vrot.slane %v2227, 7
    %2231 = vrot.lane.b32.xlu0 %v2229, 64
    %v2232 = vpop.permute.xlu0 %2231
    %v2234 = vrot.slane %v2232, 1
    %v2236 = vadd.f32 %v2227, %v2234
    %v2238 = vrot.slane %v2236, 7
    %2240 = vrot.lane.b32.xlu0 %v2238, 32
    %v2241 = vpop.permute.xlu0 %2240
    %v2243 = vrot.slane %v2241, 1
    %v2245 = vadd.f32 %v2236, %v2243
    %v2246 = vtanh.pop %v2245
    %v2247 = vmul.f32 %v2212, %v2246
    %v2248 = vsel %vm93, %v2247, 0.0
    %v2250 = vrot.slane %v2248, 7
    %2252 = vrot.lane.b32.xlu0 %v2250, 64
    %v2253 = vpop.permute.xlu0 %2252
    %v2255 = vrot.slane %v2253, 1
    %v2257 = vadd.f32 %v2248, %v2255
    %v2259 = vrot.slane %v2257, 7
    %2261 = vrot.lane.b32.xlu0 %v2259, 32
    %v2262 = vpop.permute.xlu0 %2261
    %v2264 = vrot.slane %v2262, 1
    %v2266 = vadd.f32 %v2257, %v2264
    %2267 = vmatprep.subr.mxu0 0.0
    %2268 = vmatpush1.msra.mxu0 %v444
    %2269 = vmatprep.subr.mxu0 0.0
    %2270 = vmatpush1.msra.mxu0 %v445
    %2271 = vmatprep.subr.mxu0 0.0
    %2272 = vmatpush1.msra.mxu0 %v446
    %2273 = vmatprep.subr.mxu0 0.0
    %2274 = vmatpush1.msra.mxu0 %v447
    %2275 = vmatprep.subr.mxu0 0.0
    %2276 = vmatpush1.msra.mxu0 %v448
    %2277 = vmatprep.subr.mxu0 0.0
    %2278 = vmatpush1.msra.mxu0 %v449
    %2279 = vmatprep.subr.mxu0 0.0
    %2280 = vmatpush1.msra.mxu0 %v450
    %2281 = vmatprep.subr.mxu0 0.0
    %2282 = vmatpush1.msra.mxu0 %v451
    %2283 = vmatprep.subr.mxu0 0.0
    %2284 = vmatpush1.msra.mxu0 %v452
    %2285 = vmatprep.subr.mxu0 0.0
    %2286 = vmatpush1.msra.mxu0 %v453
    %2287 = vmatprep.subr.mxu0 0.0
    %2288 = vmatpush1.msra.mxu0 %v454
    %2289 = vmatprep.subr.mxu0 0.0
    %2290 = vmatpush1.msra.mxu0 %v455
    %2291 = vmatprep.subr.mxu0 0.0
    %2292 = vmatpush1.msra.mxu0 %v456
    %2293 = vmatprep.subr.mxu0 0.0
    %2294 = vmatpush1.msra.mxu0 %v457
    %2295 = vmatprep.subr.mxu0 0.0
    %2296 = vmatpush1.msra.mxu0 %v458
    %2297 = vmatprep.subr.mxu0 0.0
    %2298 = vmatpush1.msra.mxu0 %v459
    %2299 = vmatprep.subr.mxu0 0.0
    %2300 = vmatpush1.msra.mxu0 0.0
    %2301 = vmatprep.subr.mxu0 0.0
    %2302 = vmatpush1.msra.mxu0 0.0
    %2303 = vmatprep.subr.mxu0 0.0
    %2304 = vmatpush1.msra.mxu0 0.0
    %2305 = vmatprep.subr.mxu0 0.0
    %2306 = vmatpush1.msra.mxu0 0.0
    %2307 = vmatprep.subr.mxu0 0.0
    %2308 = vmatpush1.msra.mxu0 0.0
    %2309 = vmatprep.subr.mxu0 0.0
    %2310 = vmatpush1.msra.mxu0 0.0
    %2311 = vmatprep.subr.mxu0 0.0
    %2312 = vmatpush1.msra.mxu0 0.0
    %2313 = vmatprep.subr.mxu0 0.0
    %2314 = vmatpush1.msra.mxu0 0.0
    %2315 = vmatprep.subr.mxu0 0.0
    %2316 = vmatpush1.msra.mxu0 0.0
    %2317 = vmatprep.subr.mxu0 0.0
    %2318 = vmatpush1.msra.mxu0 0.0
    %2319 = vmatprep.subr.mxu0 0.0
    %2320 = vmatpush1.msra.mxu0 0.0
    %2321 = vmatprep.subr.mxu0 0.0
    %2322 = vmatpush1.msra.mxu0 0.0
    %2323 = vmatprep.subr.mxu0 0.0
    %2324 = vmatpush1.msra.mxu0 0.0
    %2325 = vmatprep.subr.mxu0 0.0
    %2326 = vmatpush1.msra.mxu0 0.0
    %2327 = vmatprep.subr.mxu0 0.0
    %2328 = vmatpush1.msra.mxu0 0.0
    %2329 = vmatprep.subr.mxu0 0.0
    %2330 = vmatpush1.msra.mxu0 0.0
    %2331 = vmatprep.mubr.f32.mxu0 0.0
    %2332 = vmatmul.mubr.f32.gmra.mrb[0].mxu0 %v2131
    %v2333 = vpop.f32.mrb[0].mxu0
    %v2334 = vadd.f32 0.0, %v2333
    %v2335 = vpop.f32.mrb[0].mxu0
    %2336 = vdwg.mxu0
    %2337 = vmatprep.subr.mxu0 0.0
    %2338 = vmatpush1.msra.mxu0 %v428
    %2339 = vmatprep.subr.mxu0 0.0
    %2340 = vmatpush1.msra.mxu0 %v429
    %2341 = vmatprep.subr.mxu0 0.0
    %2342 = vmatpush1.msra.mxu0 %v430
    %2343 = vmatprep.subr.mxu0 0.0
    %2344 = vmatpush1.msra.mxu0 %v431
    %2345 = vmatprep.subr.mxu0 0.0
    %2346 = vmatpush1.msra.mxu0 %v432
    %2347 = vmatprep.subr.mxu0 0.0
    %2348 = vmatpush1.msra.mxu0 %v433
    %2349 = vmatprep.subr.mxu0 0.0
    %2350 = vmatpush1.msra.mxu0 %v434
    %2351 = vmatprep.subr.mxu0 0.0
    %2352 = vmatpush1.msra.mxu0 %v435
    %2353 = vmatprep.subr.mxu0 0.0
    %2354 = vmatpush1.msra.mxu0 %v436
    %2355 = vmatprep.subr.mxu0 0.0
    %2356 = vmatpush1.msra.mxu0 %v437
    %2357 = vmatprep.subr.mxu0 0.0
    %2358 = vmatpush1.msra.mxu0 %v438
    %2359 = vmatprep.subr.mxu0 0.0
    %2360 = vmatpush1.msra.mxu0 %v439
    %2361 = vmatprep.subr.mxu0 0.0
    %2362 = vmatpush1.msra.mxu0 %v440
    %2363 = vmatprep.subr.mxu0 0.0
    %2364 = vmatpush1.msra.mxu0 %v441
    %2365 = vmatprep.subr.mxu0 0.0
    %2366 = vmatpush1.msra.mxu0 %v442
    %2367 = vmatprep.subr.mxu0 0.0
    %2368 = vmatpush1.msra.mxu0 %v443
    %2369 = vmatprep.subr.mxu0 0.0
    %2370 = vmatpush1.msra.mxu0 0.0
    %2371 = vmatprep.subr.mxu0 0.0
    %2372 = vmatpush1.msra.mxu0 0.0
    %2373 = vmatprep.subr.mxu0 0.0
    %2374 = vmatpush1.msra.mxu0 0.0
    %2375 = vmatprep.subr.mxu0 0.0
    %2376 = vmatpush1.msra.mxu0 0.0
    %2377 = vmatprep.subr.mxu0 0.0
    %2378 = vmatpush1.msra.mxu0 0.0
    %2379 = vmatprep.subr.mxu0 0.0
    %2380 = vmatpush1.msra.mxu0 0.0
    %2381 = vmatprep.subr.mxu0 0.0
    %2382 = vmatpush1.msra.mxu0 0.0
    %2383 = vmatprep.subr.mxu0 0.0
    %2384 = vmatpush1.msra.mxu0 0.0
    %2385 = vmatprep.subr.mxu0 0.0
    %2386 = vmatpush1.msra.mxu0 0.0
    %2387 = vmatprep.subr.mxu0 0.0
    %2388 = vmatpush1.msra.mxu0 0.0
    %2389 = vmatprep.subr.mxu0 0.0
    %2390 = vmatpush1.msra.mxu0 0.0
    %2391 = vmatprep.subr.mxu0 0.0
    %2392 = vmatpush1.msra.mxu0 0.0
    %2393 = vmatprep.subr.mxu0 0.0
    %2394 = vmatpush1.msra.mxu0 0.0
    %2395 = vmatprep.subr.mxu0 0.0
    %2396 = vmatpush1.msra.mxu0 0.0
    %2397 = vmatprep.subr.mxu0 0.0
    %2398 = vmatpush1.msra.mxu0 0.0
    %2399 = vmatprep.subr.mxu0 0.0
    %2400 = vmatpush1.msra.mxu0 0.0
    %2401 = vmatprep.mubr.f32.mxu0 0.0
    %2402 = vmatmul.mubr.f32.gmra.mrb[0].mxu0 %v2133
    %v2403 = vpop.f32.mrb[0].mxu0
    %v2404 = vadd.f32 %v2334, %v2403
    %v2405 = vpop.f32.mrb[0].mxu0
    %2406 = vdwg.mxu0
    %v2407 = vadd.f32 %v2404, %v600
    %v2408 = vmul.f32 %v2407, %v94
    %v2409 = vtanh.pop %v2408
    %v2410 = vmul.f32 %v2409, %v94
    %v2411 = vadd.f32 %v2410, %v95
    %2412 = vrot.lane.b32.xlu0 %v2411, 64
    %v2413 = vpop.permute.xlu0 %2412
    %v2414 = vmul.f32 %v2411, %v2413
    %v2415 = vmul.f32 %v2411, %v2122
    %v2416 = vsel %vm89, %v2415, 0.0
    %v2417 = vsel %vm86, %v2414, %v2416
    %2418 = vrot.lane.b32.xlu0 %v2417, 64
    %v2419 = vpop.permute.xlu0 %2418
    %v2420 = vadd.f32 %v2417, %v2419
    %2421 = vrot.lane.b32.xlu0 %v2420, 32
    %v2422 = vpop.permute.xlu0 %2421
    %v2423 = vadd.f32 %v2420, %v2422
    %v2424 = vtanh.pop %v2423
    %v2425 = vmul.f32 %v2411, %v2424
    %v2426 = vsel %vm93, %v2425, 0.0
    %2427 = vrot.lane.b32.xlu0 %v2426, 64
    %v2428 = vpop.permute.xlu0 %2427
    %v2429 = vadd.f32 %v2426, %v2428
    %2430 = vrot.lane.b32.xlu0 %v2429, 32
    %v2431 = vpop.permute.xlu0 %2430
    %v2432 = vadd.f32 %v2429, %v2431
    %2433 = vmatprep.subr.mxu0 0.0
    %2434 = vmatpush1.msra.mxu0 %v444
    %2435 = vmatprep.subr.mxu0 0.0
    %2436 = vmatpush1.msra.mxu0 %v445
    %2437 = vmatprep.subr.mxu0 0.0
    %2438 = vmatpush1.msra.mxu0 %v446
    %2439 = vmatprep.subr.mxu0 0.0
    %2440 = vmatpush1.msra.mxu0 %v447
    %2441 = vmatprep.subr.mxu0 0.0
    %2442 = vmatpush1.msra.mxu0 %v448
    %2443 = vmatprep.subr.mxu0 0.0
    %2444 = vmatpush1.msra.mxu0 %v449
    %2445 = vmatprep.subr.mxu0 0.0
    %2446 = vmatpush1.msra.mxu0 %v450
    %2447 = vmatprep.subr.mxu0 0.0
    %2448 = vmatpush1.msra.mxu0 %v451
    %2449 = vmatprep.subr.mxu0 0.0
    %2450 = vmatpush1.msra.mxu0 %v452
    %2451 = vmatprep.subr.mxu0 0.0
    %2452 = vmatpush1.msra.mxu0 %v453
    %2453 = vmatprep.subr.mxu0 0.0
    %2454 = vmatpush1.msra.mxu0 %v454
    %2455 = vmatprep.subr.mxu0 0.0
    %2456 = vmatpush1.msra.mxu0 %v455
    %2457 = vmatprep.subr.mxu0 0.0
    %2458 = vmatpush1.msra.mxu0 %v456
    %2459 = vmatprep.subr.mxu0 0.0
    %2460 = vmatpush1.msra.mxu0 %v457
    %2461 = vmatprep.subr.mxu0 0.0
    %2462 = vmatpush1.msra.mxu0 %v458
    %2463 = vmatprep.subr.mxu0 0.0
    %2464 = vmatpush1.msra.mxu0 %v459
    %2465 = vmatprep.subr.mxu0 0.0
    %2466 = vmatpush1.msra.mxu0 0.0
    %2467 = vmatprep.subr.mxu0 0.0
    %2468 = vmatpush1.msra.mxu0 0.0
    %2469 = vmatprep.subr.mxu0 0.0
    %2470 = vmatpush1.msra.mxu0 0.0
    %2471 = vmatprep.subr.mxu0 0.0
    %2472 = vmatpush1.msra.mxu0 0.0
    %2473 = vmatprep.subr.mxu0 0.0
    %2474 = vmatpush1.msra.mxu0 0.0
    %2475 = vmatprep.subr.mxu0 0.0
    %2476 = vmatpush1.msra.mxu0 0.0
    %2477 = vmatprep.subr.mxu0 0.0
    %2478 = vmatpush1.msra.mxu0 0.0
    %2479 = vmatprep.subr.mxu0 0.0
    %2480 = vmatpush1.msra.mxu0 0.0
    %2481 = vmatprep.subr.mxu0 0.0
    %2482 = vmatpush1.msra.mxu0 0.0
    %2483 = vmatprep.subr.mxu0 0.0
    %2484 = vmatpush1.msra.mxu0 0.0
    %2485 = vmatprep.subr.mxu0 0.0
    %2486 = vmatpush1.msra.mxu0 0.0
    %2487 = vmatprep.subr.mxu0 0.0
    %2488 = vmatpush1.msra.mxu0 0.0
    %2489 = vmatprep.subr.mxu0 0.0
    %2490 = vmatpush1.msra.mxu0 0.0
    %2491 = vmatprep.subr.mxu0 0.0
    %2492 = vmatpush1.msra.mxu0 0.0
    %2493 = vmatprep.subr.mxu0 0.0
    %2494 = vmatpush1.msra.mxu0 0.0
    %2495 = vmatprep.subr.mxu0 0.0
    %2496 = vmatpush1.msra.mxu0 0.0
    %2497 = vmatprep.mubr.f32.mxu0 0.0
    %2498 = vmatmul.mubr.f32.gmra.mrb[0].mxu0 %v2432
    %v2499 = vpop.f32.mrb[0].mxu0
    %v2500 = vadd.f32 0.0, %v2499
    %v2501 = vpop.f32.mrb[0].mxu0
    %2502 = vdwg.mxu0
    %v2504 = vrot.slane %v2266, 7
    %2506 = vmatprep.subr.mxu0 0.0
    %2507 = vmatpush1.msra.mxu0 %v428
    %2508 = vmatprep.subr.mxu0 0.0
    %2509 = vmatpush1.msra.mxu0 %v429
    %2510 = vmatprep.subr.mxu0 0.0
    %2511 = vmatpush1.msra.mxu0 %v430
    %2512 = vmatprep.subr.mxu0 0.0
    %2513 = vmatpush1.msra.mxu0 %v431
    %2514 = vmatprep.subr.mxu0 0.0
    %2515 = vmatpush1.msra.mxu0 %v432
    %2516 = vmatprep.subr.mxu0 0.0
    %2517 = vmatpush1.msra.mxu0 %v433
    %2518 = vmatprep.subr.mxu0 0.0
    %2519 = vmatpush1.msra.mxu0 %v434
    %2520 = vmatprep.subr.mxu0 0.0
    %2521 = vmatpush1.msra.mxu0 %v435
    %2522 = vmatprep.subr.mxu0 0.0
    %2523 = vmatpush1.msra.mxu0 %v436
    %2524 = vmatprep.subr.mxu0 0.0
    %2525 = vmatpush1.msra.mxu0 %v437
    %2526 = vmatprep.subr.mxu0 0.0
    %2527 = vmatpush1.msra.mxu0 %v438
    %2528 = vmatprep.subr.mxu0 0.0
    %2529 = vmatpush1.msra.mxu0 %v439
    %2530 = vmatprep.subr.mxu0 0.0
    %2531 = vmatpush1.msra.mxu0 %v440
    %2532 = vmatprep.subr.mxu0 0.0
    %2533 = vmatpush1.msra.mxu0 %v441
    %2534 = vmatprep.subr.mxu0 0.0
    %2535 = vmatpush1.msra.mxu0 %v442
    %2536 = vmatprep.subr.mxu0 0.0
    %2537 = vmatpush1.msra.mxu0 %v443
    %2538 = vmatprep.subr.mxu0 0.0
    %2539 = vmatpush1.msra.mxu0 0.0
    %2540 = vmatprep.subr.mxu0 0.0
    %2541 = vmatpush1.msra.mxu0 0.0
    %2542 = vmatprep.subr.mxu0 0.0
    %2543 = vmatpush1.msra.mxu0 0.0
    %2544 = vmatprep.subr.mxu0 0.0
    %2545 = vmatpush1.msra.mxu0 0.0
    %2546 = vmatprep.subr.mxu0 0.0
    %2547 = vmatpush1.msra.mxu0 0.0
    %2548 = vmatprep.subr.mxu0 0.0
    %2549 = vmatpush1.msra.mxu0 0.0
    %2550 = vmatprep.subr.mxu0 0.0
    %2551 = vmatpush1.msra.mxu0 0.0
    %2552 = vmatprep.subr.mxu0 0.0
    %2553 = vmatpush1.msra.mxu0 0.0
    %2554 = vmatprep.subr.mxu0 0.0
    %2555 = vmatpush1.msra.mxu0 0.0
    %2556 = vmatprep.subr.mxu0 0.0
    %2557 = vmatpush1.msra.mxu0 0.0
    %2558 = vmatprep.subr.mxu0 0.0
    %2559 = vmatpush1.msra.mxu0 0.0
    %2560 = vmatprep.subr.mxu0 0.0
    %2561 = vmatpush1.msra.mxu0 0.0
    %2562 = vmatprep.subr.mxu0 0.0
    %2563 = vmatpush1.msra.mxu0 0.0
    %2564 = vmatprep.subr.mxu0 0.0
    %2565 = vmatpush1.msra.mxu0 0.0
    %2566 = vmatprep.subr.mxu0 0.0
    %2567 = vmatpush1.msra.mxu0 0.0
    %2568 = vmatprep.subr.mxu0 0.0
    %2569 = vmatpush1.msra.mxu0 0.0
    %2570 = vmatprep.mubr.f32.mxu0 0.0
    %2571 = vmatmul.mubr.f32.gmra.mrb[0].mxu0 %v2504
    %v2572 = vpop.f32.mrb[0].mxu0
    %v2573 = vadd.f32 %v2500, %v2572
    %v2574 = vpop.f32.mrb[0].mxu0
    %2575 = vdwg.mxu0
    %v2576 = vadd.f32 %v2573, %v600
    %v2577 = vmul.f32 %v2576, %v94
    %v2578 = vtanh.pop %v2577
    %v2579 = vmul.f32 %v2578, %v94
    %v2580 = vadd.f32 %v2579, %v95
    %2581 = vrot.lane.b32.xlu0 %v2580, 64
    %v2582 = vpop.permute.xlu0 %2581
    %v2583 = vmul.f32 %v2580, %v2582
    %v2584 = vmul.f32 %v2580, %v2423
    %v2585 = vsel %vm89, %v2584, 0.0
    %v2586 = vsel %vm86, %v2583, %v2585
    %2587 = vrot.lane.b32.xlu0 %v2586, 64
    %v2588 = vpop.permute.xlu0 %2587
    %v2589 = vadd.f32 %v2586, %v2588
    %2590 = vrot.lane.b32.xlu0 %v2589, 32
    %v2591 = vpop.permute.xlu0 %2590
    %v2592 = vadd.f32 %v2589, %v2591
    %v2593 = vtanh.pop %v2592
    %v2594 = vmul.f32 %v2580, %v2593
    %v2595 = vsel %vm93, %v2594, 0.0
    %2596 = vrot.lane.b32.xlu0 %v2595, 64
    %v2597 = vpop.permute.xlu0 %2596
    %v2598 = vadd.f32 %v2595, %v2597
    %2599 = vrot.lane.b32.xlu0 %v2598, 32
    %v2600 = vpop.permute.xlu0 %2599
    %v2601 = vadd.f32 %v2598, %v2600
    %v2603 = vrot.slane %v927, 7
    %v2606 = vrot.slane %v1228, 6
    %v2609 = vrot.slane %v1529, 5
    %v2612 = vrot.slane %v1830, 4
    %v2615 = vrot.slane %v2131, 3
    %v2618 = vrot.slane %v2432, 2
    %v2621 = vrot.slane %v2601, 1
    %vm2623 = vcmask 1040384
    %v2624 = vsel %vm2623, %v626, %v2603
    %vm2625 = vcmask 1041408
    %v2626 = vsel %vm2625, %v2624, %v2606
    %vm2627 = vcmask 1042432
    %v2628 = vsel %vm2627, %v2626, %v2609
    %vm2629 = vcmask 1043456
    %v2630 = vsel %vm2629, %v2628, %v2612
    %vm2631 = vcmask 1044480
    %v2632 = vsel %vm2631, %v2630, %v2615
    %vm2633 = vcmask 1045504
    %v2634 = vsel %vm2633, %v2632, %v2618
    %vm2635 = vcmask 1046528
    %v2636 = vsel %vm2635, %v2634, %v2621
    %v2637 = vld [vmem:[%s9] sm:$0xff]
    %v2638 = vld [vmem:[%s9 + $0x8] sm:$0xff]
    %v2639 = vld [vmem:[%s9 + $0x10] sm:$0xff]
    %v2640 = vld [vmem:[%s9 + $0x18] sm:$0xff]
    %v2641 = vld [vmem:[%s9 + $0x20] sm:$0xff]
    %v2642 = vld [vmem:[%s9 + $0x28] sm:$0xff]
    %v2643 = vld [vmem:[%s9 + $0x30] sm:$0xff]
    %v2644 = vld [vmem:[%s9 + $0x38] sm:$0xff]
    %v2645 = vld [vmem:[%s9 + $0x40] sm:$0xff]
    %v2646 = vld [vmem:[%s9 + $0x48] sm:$0xff]
    %v2647 = vld [vmem:[%s9 + $0x50] sm:$0xff]
    %v2648 = vld [vmem:[%s9 + $0x58] sm:$0xff]
    %v2649 = vld [vmem:[%s9 + $0x60] sm:$0xff]
    %v2650 = vld [vmem:[%s9 + $0x68] sm:$0xff]
    %v2651 = vld [vmem:[%s9 + $0x70] sm:$0xff]
    %v2652 = vld [vmem:[%s9 + $0x78] sm:$0xff]
    %v2653 = vld [vmem:[%s10] sm:$0x1]
    %v2655 = vlaneseq
    %v2656 = vshrl.u32 %v2655, 7
    %v2657 = vsub.s32 0, %v2656
    %v2658 = vrot.slane %v2653, %v2657
    %2660 = vmatprep.subr.mxu0 0.0
    %2661 = vmatpush1.msra.mxu0 %v2637
    %2662 = vmatprep.subr.mxu0 0.0
    %2663 = vmatpush1.msra.mxu0 %v2638
    %2664 = vmatprep.subr.mxu0 0.0
    %2665 = vmatpush1.msra.mxu0 %v2639
    %2666 = vmatprep.subr.mxu0 0.0
    %2667 = vmatpush1.msra.mxu0 %v2640
    %2668 = vmatprep.subr.mxu0 0.0
    %2669 = vmatpush1.msra.mxu0 %v2641
    %2670 = vmatprep.subr.mxu0 0.0
    %2671 = vmatpush1.msra.mxu0 %v2642
    %2672 = vmatprep.subr.mxu0 0.0
    %2673 = vmatpush1.msra.mxu0 %v2643
    %2674 = vmatprep.subr.mxu0 0.0
    %2675 = vmatpush1.msra.mxu0 %v2644
    %2676 = vmatprep.subr.mxu0 0.0
    %2677 = vmatpush1.msra.mxu0 %v2645
    %2678 = vmatprep.subr.mxu0 0.0
    %2679 = vmatpush1.msra.mxu0 %v2646
    %2680 = vmatprep.subr.mxu0 0.0
    %2681 = vmatpush1.msra.mxu0 %v2647
    %2682 = vmatprep.subr.mxu0 0.0
    %2683 = vmatpush1.msra.mxu0 %v2648
    %2684 = vmatprep.subr.mxu0 0.0
    %2685 = vmatpush1.msra.mxu0 %v2649
    %2686 = vmatprep.subr.mxu0 0.0
    %2687 = vmatpush1.msra.mxu0 %v2650
    %2688 = vmatprep.subr.mxu0 0.0
    %2689 = vmatpush1.msra.mxu0 %v2651
    %2690 = vmatprep.subr.mxu0 0.0
    %2691 = vmatpush1.msra.mxu0 %v2652
    %2692 = vmatprep.subr.mxu0 0.0
    %2693 = vmatpush1.msra.mxu0 0.0
    %2694 = vmatprep.subr.mxu0 0.0
    %2695 = vmatpush1.msra.mxu0 0.0
    %2696 = vmatprep.subr.mxu0 0.0
    %2697 = vmatpush1.msra.mxu0 0.0
    %2698 = vmatprep.subr.mxu0 0.0
    %2699 = vmatpush1.msra.mxu0 0.0
    %2700 = vmatprep.subr.mxu0 0.0
    %2701 = vmatpush1.msra.mxu0 0.0
    %2702 = vmatprep.subr.mxu0 0.0
    %2703 = vmatpush1.msra.mxu0 0.0
    %2704 = vmatprep.subr.mxu0 0.0
    %2705 = vmatpush1.msra.mxu0 0.0
    %2706 = vmatprep.subr.mxu0 0.0
    %2707 = vmatpush1.msra.mxu0 0.0
    %2708 = vmatprep.subr.mxu0 0.0
    %2709 = vmatpush1.msra.mxu0 0.0
    %2710 = vmatprep.subr.mxu0 0.0
    %2711 = vmatpush1.msra.mxu0 0.0
    %2712 = vmatprep.subr.mxu0 0.0
    %2713 = vmatpush1.msra.mxu0 0.0
    %2714 = vmatprep.subr.mxu0 0.0
    %2715 = vmatpush1.msra.mxu0 0.0
    %2716 = vmatprep.subr.mxu0 0.0
    %2717 = vmatpush1.msra.mxu0 0.0
    %2718 = vmatprep.subr.mxu0 0.0
    %2719 = vmatpush1.msra.mxu0 0.0
    %2720 = vmatprep.subr.mxu0 0.0
    %2721 = vmatpush1.msra.mxu0 0.0
    %2722 = vmatprep.subr.mxu0 0.0
    %2723 = vmatpush1.msra.mxu0 0.0
    %2724 = vmatprep.mubr.f32.mxu0 0.0
    %2725 = vmatmul.mubr.f32.gmra.mrb[0].mxu0 %v2636
    %v2726 = vpop.f32.mrb[0].mxu0
    %v2727 = vadd.f32 %v2658, %v2726
    %v2728 = vpop.f32.mrb[0].mxu0
    %2729 = vdwg.mxu0
    %vm2730 = vcmask 31744
    %2731 = vst.msk [vmem:[%s11] sm:$0xff] %vm2730, %v2727
    %v2732 = vrot.slane %v2601, 7
    %v2734 = vsel %vm2623, %v2504, %v2732
    %2735 = vst [vmem:[#allocation8] sm:$0x3] %v2734
    %v2737 = vrot.slane %v2245, 7
    %v2740 = vrot.slane %v2592, 7
    %v2742 = vsel %vm2623, %v2737, %v2740
    %2743 = vst [vmem:[#allocation9] sm:$0x3] %v2742
    // Predicated region
    $region58: #{tpu_custom_call.1} parent=1 // pred_check
      _
    $region59: #{tpu_custom_call.1} parent=1 // pred_check_branch
      %2745 = sbr.rel (0) target = $region61
    $region60: #{tpu_custom_call.1} parent=1 // pred_region
      _
    $region61: #{tpu_custom_call.1} parent=1 // pred_fallthru
      _
    // Predicated region
    $region62: #{tpu_custom_call.1} parent=1 // pred_check
      _
    $region63: #{tpu_custom_call.1} parent=1 // pred_check_branch
      %2747 = sbr.rel (0) target = $region65
    $region64: #{tpu_custom_call.1} parent=1 // pred_region
      %s2749 = ssub.s32 32, 32
      %2750 = vsyncadd [#allocation4], %s2749
      %s2752 = sshll.u32 [#allocation8], 4
      %s2753 = int_to_ptr.vmem [resolvable:$true] %s2752
      %2755 = dma.vmem_to_hbm [thread:$0]  %s2753, 32, %s12, [#allocation4]
    $region65: #{tpu_custom_call.1} parent=1 // pred_fallthru
      _
    // Predicated region
    $region66: #{tpu_custom_call.1} parent=1 // pred_check
      _
    $region67: #{tpu_custom_call.1} parent=1 // pred_check_branch
      %2757 = sbr.rel (0) target = $region69
    $region68: #{tpu_custom_call.1} parent=1 // pred_region
      %s2759 = ssub.s32 32, 32
      %2760 = vsyncadd [#allocation10], %s2759
      %s2762 = sshll.u32 [#allocation9], 4
      %s2763 = int_to_ptr.vmem [resolvable:$true] %s2762
      %2765 = dma.vmem_to_hbm [thread:$0]  %s2763, 32, %s13, [#allocation10]
    $region69: #{tpu_custom_call.1} parent=1 // pred_fallthru
      _
    // Predicated region
    $region70: #{tpu_custom_call.1} parent=1 // pred_check
      _
    $region71: #{tpu_custom_call.1} parent=1 // pred_check_branch
      %2767 = sbr.rel (0) target = $region73
    $region72: #{tpu_custom_call.1} parent=1 // pred_region
      _
    $region73: #{tpu_custom_call.1} parent=1 // pred_fallthru
      _
    // Predicated region
    $region74: #{tpu_custom_call.1} parent=1 // pred_check
      _
    $region75: #{tpu_custom_call.1} parent=1 // pred_check_branch
      %2769 = sbr.rel (0) target = $region77
    $region76: #{tpu_custom_call.1} parent=1 // pred_region
      %2770 = dma.done [#allocation4], 32
    $region77: #{tpu_custom_call.1} parent=1 // pred_fallthru
      _
    // Predicated region
    $region78: #{tpu_custom_call.1} parent=1 // pred_check
      _
    $region79: #{tpu_custom_call.1} parent=1 // pred_check_branch
      %2772 = sbr.rel (0) target = $region81
    $region80: #{tpu_custom_call.1} parent=1 // pred_region
      %2773 = dma.done [#allocation10], 32
    $region81: #{tpu_custom_call.1} parent=1 // pred_fallthru
      _
    %2774 = vsyncpa [#allocation3], 1
    %2775 = vsyncpa [#allocation6], 1
    %2776 = vsyncpa [#allocation4], 1
    %2777 = vsyncpa [#allocation10], 1

</llo_original>
